<compile_context>
chip_gen: v6e
topology: v6e:2x2x1
jax: 0.10.0
libtpu: 0.0.40
codegen_flags: <defaults>
</compile_context>

<pallas_src>
import jax
import jax.numpy as jnp
from jax.experimental import pallas as pl
from jax.experimental.pallas import tpu as pltpu

EPS = 1e-5


def _relu_gconv_bn_kernel(x_ref, w_ref, gamma_ref, beta_ref, o_ref, xpad_ref):
    # x_ref:     (N, H, W, Cb)   one packed block of GP groups (Cb = GP*cg lanes)
    # w_ref:     (1, 9*Cb, Cb)   block-diagonal im2col weight for this packed block
    # gamma_ref: (Gb, Cb)        all BN scales (resident; fetched once)
    # beta_ref:  (Gb, Cb)        all BN shifts
    # o_ref:     (N*H*Wp, Cb)    padded-width row layout; wrapper drops w >= W cols
    # xpad_ref:  (N, Hp, Wp, Cb) VMEM scratch holding zero-padded ReLU'd activations
    gb = pl.program_id(0)
    N, H, W, Cb = x_ref.shape
    Hp, Wp = H + 2, W + 2
    rows = N * H * Wp
    r_out = rows - 2  # the last 2 rows of the padded-width layout are never valid

    # --- ReLU + spatial zero-pad (padding zeros before ReLU is exact: ReLU(0)=0) ---
    xpad_ref[...] = jnp.zeros_like(xpad_ref)
    xpad_ref[:, 1:H + 1, 1:W + 1, :] = jnp.maximum(
        x_ref[...], 0.0).astype(xpad_ref.dtype)

    # --- im2col: keep the padded width in the row dim so reshapes are free retilings
    #     (Wp is a multiple of 8; Cb is a multiple of 128). ---
    taps = []
    for kh in range(3):
        xs = xpad_ref[:, kh:kh + H, :, :].reshape(rows, Cb)
        for kw in range(3):
            taps.append(jax.lax.slice_in_dim(xs, kw, kw + r_out, axis=0))
    patches = jnp.concatenate(taps, axis=1)  # (r_out, 9*Cb), lane-axis concat

    # --- single lane-dense matmul, K = 9*Cb (block-diagonal over the GP groups) ---
    acc = jnp.dot(patches, w_ref[0],
                  preferred_element_type=jnp.float32)  # (r_out, Cb) f32

    # --- BatchNorm2d, training-mode batch statistics over valid (N,H,W) rows only ---
    col = jax.lax.broadcasted_iota(jnp.int32, (r_out, 1), 0) % Wp
    valid = col < W                      # rows with w in {W, W+1} are conv garbage
    count = float(N * H * W)
    mean = jnp.sum(jnp.where(valid, acc, 0.0), axis=0, keepdims=True) / count
    cen = acc - mean
    var = jnp.sum(jnp.where(valid, cen * cen, 0.0), axis=0, keepdims=True) / count
    inv = jax.lax.rsqrt(var + EPS)
    scale = inv * gamma_ref[pl.ds(gb, 1), :].astype(jnp.float32)
    shift = beta_ref[pl.ds(gb, 1), :].astype(jnp.float32) - mean * scale
    y = acc * scale + shift
    # TODO(synk): BatchNorm running_mean/running_var buffer updates (momentum=0.1)
    # are not reproduced; they do not affect the forward output.

    # one full, unmasked lane-dense store (pad the 2 trailing never-valid rows)
    y_full = jnp.concatenate(
        [y, jnp.zeros((rows - r_out, Cb), jnp.float32)], axis=0)
    o_ref[...] = y_full.astype(o_ref.dtype)


def relu_groupconv_bn(x_nchw, weight, gamma, beta, groups):
    """x_nchw: (N, C, H, W); weight: (C, C//groups, 3, 3); gamma/beta: (C,)."""
    N, C, H, W = x_nchw.shape
    cout_total, cg, kh_, kw_ = weight.shape
    assert kh_ == 3 and kw_ == 3 and cout_total == C and C % groups == 0
    assert cg == C // groups

    # Pack GP groups per grid step so the channel (lane) dimension is 128-wide.
    GP = min(groups, max(1, 128 // cg))
    while groups % GP != 0:
        GP -= 1
    Gb = groups // GP
    Cb = GP * cg
    assert Cb % 128 == 0 or Gb == 1, (Cb, Gb)

    Hp, Wp = H + 2, W + 2
    rows = N * H * Wp

    # Single NCHW -> NHWC relayout; each packed-group block is just a contiguous
    # Cb-wide channel slice picked by the BlockSpec index_map.
    x_nhwc = jnp.transpose(x_nchw, (0, 2, 3, 1))

    # Block-diagonal im2col weight: (Gb, 9*Cb, Cb)
    # row = ((kh*3+kw)*GP + g)*cg + ci, col = g*cg + co.
    w6 = weight.reshape(Gb, GP, cg, cg, 3, 3).transpose(0, 4, 5, 1, 3, 2)
    eye = jnp.eye(GP, dtype=weight.dtype)
    w_big = jnp.einsum('bklgio,gh->bklgiho', w6, eye).reshape(Gb, 9 * Cb, Cb)

    gamma2 = gamma.reshape(Gb, Cb)
    beta2 = beta.reshape(Gb, Cb)

    out_flat = pl.pallas_call(
        _relu_gconv_bn_kernel,
        out_shape=jax.ShapeDtypeStruct((rows, C), x_nchw.dtype),
        grid_spec=pltpu.PrefetchScalarGridSpec(
            num_scalar_prefetch=0,
            grid=(Gb,),
            in_specs=[
                pl.BlockSpec((N, H, W, Cb), lambda g: (0, 0, 0, g)),
                pl.BlockSpec((1, 9 * Cb, Cb), lambda g: (g, 0, 0)),
                pl.BlockSpec((Gb, Cb), lambda g: (0, 0)),   # resident, fetched once
                pl.BlockSpec((Gb, Cb), lambda g: (0, 0)),
            ],
            out_specs=pl.BlockSpec((rows, Cb), lambda g: (0, g)),
            scratch_shapes=[pltpu.VMEM((N, Hp, Wp, Cb), x_nchw.dtype)],
        ),
        compiler_params=pltpu.CompilerParams(
            dimension_semantics=("parallel",)),
    )(x_nhwc, w_big, gamma2, beta2)

    # (N*H*Wp, C): drop the 2 padded-width columns, back to NCHW (one fused op in XLA).
    out = out_flat.reshape(N, H, Wp, C)[:, :, :W, :]
    return jnp.transpose(out, (0, 3, 1, 2))


def reference(x, weight, gamma, beta, groups):
    """Pure-JAX reference matching PyTorch: ReLU -> grouped conv -> BN (training mode)."""
    xr = jnp.maximum(x, 0.0)
    y = jax.lax.conv_general_dilated(
        xr, weight, window_strides=(1, 1), padding=((1, 1), (1, 1)),
        dimension_numbers=('NCHW', 'OIHW', 'NCHW'), feature_group_count=groups,
        precision=jax.lax.Precision.HIGHEST)
    mean = jnp.mean(y, axis=(0, 2, 3), keepdims=True)
    var = jnp.mean((y - mean) ** 2, axis=(0, 2, 3), keepdims=True)
    return (y - mean) / jnp.sqrt(var + EPS) * gamma.reshape(1, -1, 1, 1) \
        + beta.reshape(1, -1, 1, 1)


if __name__ == "__main__":
    # Original module: (1, 1024, 14, 14), groups=64 -> 16 in / 16 out channels per group.
    # Small but structurally identical: C=256, groups=16 (still 16 ch/group), H=W=14,
    # which packs 8 groups per grid step -> 128-lane blocks, grid length 2.
    N, C, H, W = 2, 256, 14, 14
    groups = 16
    cg = C // groups

    key = jax.random.PRNGKey(0)
    kx, kw_, kg, kb = jax.random.split(key, 4)
    x = jax.random.normal(kx, (N, C, H, W), jnp.float32)
    weight = 0.1 * jax.random.normal(kw_, (C, cg, 3, 3), jnp.float32)  # (O, I/g, 3, 3)
    gamma = 1.0 + 0.1 * jax.random.normal(kg, (C,), jnp.float32)       # BN weight
    beta = 0.1 * jax.random.normal(kb, (C,), jnp.float32)              # BN bias

    out = jax.block_until_ready(relu_groupconv_bn(x, weight, gamma, beta, groups))
    ref = jax.block_until_ready(reference(x, weight, gamma, beta, groups))

    assert out.shape == (N, C, H, W), out.shape
    err = float(jnp.max(jnp.abs(out - ref)))
    assert jnp.allclose(out, ref, atol=2e-3, rtol=2e-3), err
    print("KERNEL_OK")
</pallas_src>

<mosaic_0001>
module attributes {stable_mosaic.version = 11 : i64} {
  func.func @_relu_gconv_bn_kernel(%arg0: i32, %arg1: memref<2x14x14x128xf32, #tpu.memory_space<vmem>>, %arg2: memref<1x1152x128xf32, #tpu.memory_space<vmem>>, %arg3: memref<2x128xf32, #tpu.memory_space<vmem>>, %arg4: memref<2x128xf32, #tpu.memory_space<vmem>>, %arg5: memref<448x128xf32, #tpu.memory_space<vmem>>, %arg6: memref<2x16x16x128xf32, #tpu.memory_space<vmem>>) attributes {dimension_semantics = [#tpu.dimension_semantics<parallel>], iteration_bounds = array<i64: 2>, scalar_prefetch = 0 : i64, scratch_operands = 1 : i64, tpu.core_type = #tpu.core_type<tc>, window_params = [{transform_indices = @transform_0, window_bounds = array<i64: 2, 14, 14, 128>}, {transform_indices = @transform_1, window_bounds = array<i64: 1, 1152, 128>}, {pipeline_mode = #tpu.pipeline_mode<synchronous>, transform_indices = @transform_2, window_bounds = array<i64: 2, 128>}, {pipeline_mode = #tpu.pipeline_mode<synchronous>, transform_indices = @transform_3, window_bounds = array<i64: 2, 128>}, {transform_indices = @transform_4, window_bounds = array<i64: 448, 128>}]} {
    %cst = arith.constant 0.000000e+00 : f32
    %0 = vector.broadcast %cst : f32 to vector<2x16x16x128xf32>
    %c0 = arith.constant 0 : index
    %c0_0 = arith.constant 0 : index
    %c0_1 = arith.constant 0 : index
    %c0_2 = arith.constant 0 : index
    %1 = vector.load %arg6[%c0, %c0_0, %c0_1, %c0_2] : memref<2x16x16x128xf32, #tpu.memory_space<vmem>>, vector<2x16x16x128xf32>
    tpu.vector_store %arg6[%c0, %c0_0, %c0_1, %c0_2], %0 {strides = array<i32>} : memref<2x16x16x128xf32, #tpu.memory_space<vmem>>, vector<2x16x16x128xf32>,
    %c0_3 = arith.constant 0 : index
    %c0_4 = arith.constant 0 : index
    %c0_5 = arith.constant 0 : index
    %c0_6 = arith.constant 0 : index
    %2 = vector.load %arg1[%c0_3, %c0_4, %c0_5, %c0_6] : memref<2x14x14x128xf32, #tpu.memory_space<vmem>>, vector<2x14x14x128xf32>
    %cst_7 = arith.constant 0.000000e+00 : f32
    %3 = vector.broadcast %cst_7 : f32 to vector<2x14x14x128xf32>
    %4 = arith.maximumf %2, %3 : vector<2x14x14x128xf32>
    %c0_8 = arith.constant 0 : index
    %c1 = arith.constant 1 : index
    %c1_9 = arith.constant 1 : index
    %c0_10 = arith.constant 0 : index
    %5 = vector.load %arg6[%c0_8, %c1, %c1_9, %c0_10] : memref<2x16x16x128xf32, #tpu.memory_space<vmem>>, vector<2x14x14x128xf32>
    tpu.vector_store %arg6[%c0_8, %c1, %c1_9, %c0_10], %4 {strides = array<i32>} : memref<2x16x16x128xf32, #tpu.memory_space<vmem>>, vector<2x14x14x128xf32>,
    %c0_11 = arith.constant 0 : index
    %c0_12 = arith.constant 0 : index
    %c0_13 = arith.constant 0 : index
    %c0_14 = arith.constant 0 : index
    %6 = vector.load %arg6[%c0_11, %c0_12, %c0_13, %c0_14] : memref<2x16x16x128xf32, #tpu.memory_space<vmem>>, vector<2x14x16x128xf32>
    %7 = vector.shape_cast %6 : vector<2x14x16x128xf32> to vector<448x128xf32>
    %8 = vector.extract_strided_slice %7 {offsets = [0, 0], sizes = [446, 128], strides = [1, 1]} : vector<448x128xf32> to vector<446x128xf32>
    %9 = vector.extract_strided_slice %7 {offsets = [1, 0], sizes = [446, 128], strides = [1, 1]} : vector<448x128xf32> to vector<446x128xf32>
    %10 = vector.extract_strided_slice %7 {offsets = [2, 0], sizes = [446, 128], strides = [1, 1]} : vector<448x128xf32> to vector<446x128xf32>
    %c0_15 = arith.constant 0 : index
    %c1_16 = arith.constant 1 : index
    %c0_17 = arith.constant 0 : index
    %c0_18 = arith.constant 0 : index
    %11 = vector.load %arg6[%c0_15, %c1_16, %c0_17, %c0_18] : memref<2x16x16x128xf32, #tpu.memory_space<vmem>>, vector<2x14x16x128xf32>
    %12 = vector.shape_cast %11 : vector<2x14x16x128xf32> to vector<448x128xf32>
    %13 = vector.extract_strided_slice %12 {offsets = [0, 0], sizes = [446, 128], strides = [1, 1]} : vector<448x128xf32> to vector<446x128xf32>
    %14 = vector.extract_strided_slice %12 {offsets = [1, 0], sizes = [446, 128], strides = [1, 1]} : vector<448x128xf32> to vector<446x128xf32>
    %15 = vector.extract_strided_slice %12 {offsets = [2, 0], sizes = [446, 128], strides = [1, 1]} : vector<448x128xf32> to vector<446x128xf32>
    %c0_19 = arith.constant 0 : index
    %c2 = arith.constant 2 : index
    %c0_20 = arith.constant 0 : index
    %c0_21 = arith.constant 0 : index
    %16 = vector.load %arg6[%c0_19, %c2, %c0_20, %c0_21] : memref<2x16x16x128xf32, #tpu.memory_space<vmem>>, vector<2x14x16x128xf32>
    %17 = vector.shape_cast %16 : vector<2x14x16x128xf32> to vector<448x128xf32>
    %18 = vector.extract_strided_slice %17 {offsets = [0, 0], sizes = [446, 128], strides = [1, 1]} : vector<448x128xf32> to vector<446x128xf32>
    %19 = vector.extract_strided_slice %17 {offsets = [1, 0], sizes = [446, 128], strides = [1, 1]} : vector<448x128xf32> to vector<446x128xf32>
    %20 = vector.extract_strided_slice %17 {offsets = [2, 0], sizes = [446, 128], strides = [1, 1]} : vector<448x128xf32> to vector<446x128xf32>
    %21 = tpu.concatenate %8, %9, %10, %13, %14, %15, %18, %19, %20 in 1 : vector<446x128xf32>, vector<446x128xf32>, vector<446x128xf32>, vector<446x128xf32>, vector<446x128xf32>, vector<446x128xf32>, vector<446x128xf32>, vector<446x128xf32>, vector<446x128xf32> -> vector<446x1152xf32>
    %c0_22 = arith.constant 0 : index
    %c0_23 = arith.constant 0 : index
    %c0_24 = arith.constant 0 : index
    %22 = vector.load %arg2[%c0_22, %c0_23, %c0_24] : memref<1x1152x128xf32, #tpu.memory_space<vmem>>, vector<1x1152x128xf32>
    %23 = vector.shape_cast %22 : vector<1x1152x128xf32> to vector<1152x128xf32>
    %cst_25 = arith.constant dense<0.000000e+00> : vector<446x128xf32>
    %24 = tpu.matmul %21, %23, %cst_25 {dimension_numbers = #tpu.dot_dimension_numbers<[1], [0], [0], [1], [0, 0, 1, 1], [], []>} : vector<446x1152xf32>, vector<1152x128xf32>, vector<446x128xf32> -> vector<446x128xf32>
    %25 = tpu.iota {dimensions = array<i32: 0>} : vector<446x1xi32>
    %c16_i32 = arith.constant 16 : i32
    %c0_i32 = arith.constant 0 : i32
    %26 = arith.cmpi eq, %c16_i32, %c0_i32 : i32
    %c1_i32 = arith.constant 1 : i32
    %27 = arith.select %26, %c1_i32, %c16_i32 : i32
    %28 = vector.broadcast %27 : i32 to vector<446x1xi32>
    %29 = arith.remsi %25, %28 : vector<446x1xi32>
    %c0_i32_26 = arith.constant 0 : i32
    %30 = vector.broadcast %c0_i32_26 : i32 to vector<446x1xi32>
    %31 = arith.cmpi ne, %29, %30 : vector<446x1xi32>
    %c0_i32_27 = arith.constant 0 : i32
    %32 = vector.broadcast %c0_i32_27 : i32 to vector<446x1xi32>
    %33 = arith.cmpi slt, %29, %32 : vector<446x1xi32>
    %c0_i32_28 = arith.constant 0 : i32
    %34 = arith.cmpi slt, %27, %c0_i32_28 : i32
    %35 = vector.broadcast %34 : i1 to vector<446x1xi1>
    %36 = vector.broadcast %35 : vector<446x1xi1> to vector<446x1xi1>
    %37 = arith.xori %33, %36 : vector<446x1xi1>
    %38 = arith.andi %37, %31 : vector<446x1xi1>
    %39 = vector.broadcast %27 : i32 to vector<446x1xi32>
    %40 = arith.addi %29, %39 : vector<446x1xi32>
    %41 = arith.select %38, %40, %29 : vector<446x1xi1>, vector<446x1xi32>
    %c14_i32 = arith.constant 14 : i32
    %42 = vector.broadcast %c14_i32 : i32 to vector<446x1xi32>
    %43 = arith.cmpi slt, %41, %42 : vector<446x1xi32>
    %cst_29 = arith.constant 0.000000e+00 : f32
    %44 = vector.shape_cast %43 : vector<446x1xi1> to vector<446x1xi1>
    %45 = vector.broadcast %44 : vector<446x1xi1> to vector<446x128xi1>
    %46 = vector.broadcast %cst_29 : f32 to vector<446x128xf32>
    %47 = arith.select %45, %24, %46 : vector<446x128xi1>, vector<446x128xf32>
    %cst_30 = arith.constant dense<0.000000e+00> : vector<128xf32>
    %48 = vector.multi_reduction <add>, %47, %cst_30 [0] : vector<446x128xf32> to vector<128xf32>
    %49 = vector.shape_cast %48 : vector<128xf32> to vector<1x128xf32>
    %cst_31 = arith.constant 3.920000e+02 : f32
    %50 = vector.broadcast %cst_31 : f32 to vector<1x128xf32>
    %51 = arith.divf %49, %50 : vector<1x128xf32>
    %52 = vector.broadcast %51 : vector<1x128xf32> to vector<446x128xf32>
    %53 = arith.subf %24, %52 : vector<446x128xf32>
    %54 = arith.mulf %53, %53 : vector<446x128xf32>
    %cst_32 = arith.constant 0.000000e+00 : f32
    %55 = vector.shape_cast %43 : vector<446x1xi1> to vector<446x1xi1>
    %56 = vector.broadcast %55 : vector<446x1xi1> to vector<446x128xi1>
    %57 = vector.broadcast %cst_32 : f32 to vector<446x128xf32>
    %58 = arith.select %56, %54, %57 : vector<446x128xi1>, vector<446x128xf32>
    %cst_33 = arith.constant dense<0.000000e+00> : vector<128xf32>
    %59 = vector.multi_reduction <add>, %58, %cst_33 [0] : vector<446x128xf32> to vector<128xf32>
    %60 = vector.shape_cast %59 : vector<128xf32> to vector<1x128xf32>
    %cst_34 = arith.constant 3.920000e+02 : f32
    %61 = vector.broadcast %cst_34 : f32 to vector<1x128xf32>
    %62 = arith.divf %60, %61 : vector<1x128xf32>
    %cst_35 = arith.constant 9.99999974E-6 : f32
    %63 = vector.broadcast %cst_35 : f32 to vector<1x128xf32>
    %64 = arith.addf %62, %63 : vector<1x128xf32>
    %65 = math.rsqrt %64 : vector<1x128xf32>
    %66 = arith.index_cast %arg0 : i32 to index
    %c0_36 = arith.constant 0 : index
    %67 = vector.load %arg3[%66, %c0_36] : memref<2x128xf32, #tpu.memory_space<vmem>>, vector<1x128xf32>
    %68 = arith.mulf %65, %67 : vector<1x128xf32>
    %69 = arith.index_cast %arg0 : i32 to index
    %c0_37 = arith.constant 0 : index
    %70 = vector.load %arg4[%69, %c0_37] : memref<2x128xf32, #tpu.memory_space<vmem>>, vector<1x128xf32>
    %71 = arith.mulf %51, %68 : vector<1x128xf32>
    %72 = arith.subf %70, %71 : vector<1x128xf32>
    %73 = vector.broadcast %68 : vector<1x128xf32> to vector<446x128xf32>
    %74 = arith.mulf %24, %73 : vector<446x128xf32>
    %75 = vector.broadcast %72 : vector<1x128xf32> to vector<446x128xf32>
    %76 = arith.addf %74, %75 : vector<446x128xf32>
    %cst_38 = arith.constant 0.000000e+00 : f32
    %77 = vector.broadcast %cst_38 : f32 to vector<2x128xf32>
    %78 = tpu.concatenate %76, %77 in 0 : vector<446x128xf32>, vector<2x128xf32> -> vector<448x128xf32>
    %c0_39 = arith.constant 0 : index
    %c0_40 = arith.constant 0 : index
    %79 = vector.load %arg5[%c0_39, %c0_40] : memref<448x128xf32, #tpu.memory_space<vmem>>, vector<448x128xf32>
    tpu.vector_store %arg5[%c0_39, %c0_40], %78 {strides = array<i32>} : memref<448x128xf32, #tpu.memory_space<vmem>>, vector<448x128xf32>,
    return
  }
  func.func @transform_0(%arg0: i32) -> (i32, i32, i32, i32) {
    %c0_i32 = arith.constant 0 : i32
    %c0_i32_0 = arith.constant 0 : i32
    %c0_i32_1 = arith.constant 0 : i32
    %c0_i32_2 = arith.constant 0 : i32
    return %c0_i32, %c0_i32_0, %c0_i32_1, %arg0 : i32, i32, i32, i32
  }
  func.func @transform_1(%arg0: i32) -> (i32, i32, i32) {
    %c0_i32 = arith.constant 0 : i32
    %c0_i32_0 = arith.constant 0 : i32
    %c0_i32_1 = arith.constant 0 : i32
    return %arg0, %c0_i32, %c0_i32_0 : i32, i32, i32
  }
  func.func @transform_2(%arg0: i32) -> (i32, i32) {
    %c0_i32 = arith.constant 0 : i32
    %c0_i32_0 = arith.constant 0 : i32
    %c0_i32_1 = arith.constant 0 : i32
    return %c0_i32, %c0_i32_0 : i32, i32
  }
  func.func @transform_3(%arg0: i32) -> (i32, i32) {
    %c0_i32 = arith.constant 0 : i32
    %c0_i32_0 = arith.constant 0 : i32
    %c0_i32_1 = arith.constant 0 : i32
    return %c0_i32, %c0_i32_0 : i32, i32
  }
  func.func @transform_4(%arg0: i32) -> (i32, i32) {
    %c0_i32 = arith.constant 0 : i32
    %c0_i32_0 = arith.constant 0 : i32
    return %c0_i32, %arg0 : i32, i32
  }
}

</mosaic_0001>

<llo_original>
// kernel: tpu_custom_call.1
$region0: #{tpu_custom_call.1}
  #allocation0 [shape = 'u32[]', space=smem, size = 0x4, offset = 0x4, fixed_abs, tag = 'smem constant byte address 0x4 - core index']
  #allocation1 [shape = 'u32[144,128]{1,0:T(1,128)}', space=vmem, size = 0x12000, scoped, tag = 'internal scratch']
  #allocation2 [shape = 'f32[2,16,16,128]{3,2,1,0:T(8,128)}', space=vmem, size = 0x40000, scoped, tag = 'scratch operand']
  %s0 = inlined_call_operand.vmem [shape: f32[2,14,14,256], index: 0, kind: input, shape index: {}]
  %s1 = inlined_call_operand.hbm [shape: f32[2,1152,128], index: 1, kind: input, shape index: {}]
  %s2 = inlined_call_operand.hbm [shape: f32[2,128], index: 2, kind: input, shape index: {}]
  %s3 = inlined_call_operand.hbm [shape: f32[2,128], index: 3, kind: input, shape index: {}]
  %s4 = inlined_call_operand.hbm [shape: f32[448,256], index: 4, kind: output, shape index: {}]
  %s5 = sld [smem:[#allocation0]]
  $region99: #{tpu_custom_call.1} parent=0
    _
  %s7 = ssub.s32 1, %s5
  %s8 = scalar_select 0, %s7, %s5
  $region1: #{tpu_custom_call.1} parent=0
    #allocation3 [shape = 'u8[458752]{0}', space=vmem, size = 0x70000, scoped, tag = 'input window, operand 0']
    #allocation4 [shape = 'u8[1179648]{0}', space=vmem, size = 0x120000, scoped, tag = 'input window, operand 1']
    #allocation5 [shape = 's32[2]{0}', space=sflag, size = 0x8, scoped, tag = 'scoped memory for tpu_custom_call.1']
    #allocation6 [shape = 's32[2]{0}', space=sflag, size = 0x8, scoped, tag = 'scoped memory for tpu_custom_call.1']
    #allocation7 [shape = 'u8[1024]{0}', space=vmem, size = 0x400, scoped, tag = 'input window, operand 2, single buffered']
    #allocation8 [shape = 's32[1]{0}', space=sflag, size = 0x4, scoped, tag = 'scoped memory for tpu_custom_call.1']
    #allocation9 [shape = 'u8[1024]{0}', space=vmem, size = 0x400, scoped, tag = 'input window, operand 3, single buffered']
    #allocation10 [shape = 'u8[458752]{0}', space=vmem, size = 0x70000, scoped, tag = 'output window, operand 0']
    %9 = vsyncpa [#allocation5], 0
    %s10 = scalar_lea.sflag [#allocation5], 1
    %11 = vsyncpa %s10, 0
    %12 = vsyncpa [#allocation8], 0
    %13 = vsyncpa [#allocation6], 0
    %s14 = scalar_lea.sflag [#allocation6], 1
    %15 = vsyncpa %s14, 0
    loop: start=0, step=1, limit=4
    $region2: #{tpu_custom_call.1} parent=1 // loop_pre_header
      _
    $region3: #{tpu_custom_call.1} parent=1 // loop_header
      %s17 = sphi 0, %s21
      %p18 = scmp.ge.s32.totalorder %s17, 4
      %s27 = sphi 0, %s29
      %s30 = sphi 0, %s27
      %s31 = sphi 0, %s30
      %s47 = sphi 0, %s31
      %s53 = sphi 0, %s55
      %s56 = sphi 0, %s53
      %s57 = sphi 0, %s56
      %s73 = sphi 0, %s57
      %s77 = sphi 0, %s77
      %s79 = sphi 0, %s77
      %s80 = sphi 0, %s79
      %s94 = sphi 0, %s80
      %s98 = sphi 0, %s98
      %s100 = sphi 0, %s98
      %s101 = sphi 0, %s100
      %s115 = sphi 0, %s101
      %s121 = sphi 0, %s123
      %s124 = sphi 0, %s121
      %s125 = sphi 0, %s124
      %s141 = sphi 0, %s125
    $region4: #{tpu_custom_call.1} parent=1 // loop_header_branch
      %20 = sbr.rel (%p18) target = $region8
    $region5: #{tpu_custom_call.1} parent=1 // loop_body
      %s22 = ssub.s32 %s17, 1
      %s23 = ssub.s32 %s17, 2
      %s24 = sadd.s32 %s17, 1
      %s25 = ssub.s32 %s17, %s24
      %p26 = scmp.eq.s32.totalorder %s25, 0
      %s28 = sadd.s32 %s27, 1
      %s29 = scalar_select %p26, %s27, %s28
      %p32 = pneg %p26
      %p33 = scmp.eq.s32.totalorder %s17, 1
      %p34 = por %p32, %p33
      %p35 = scmp.ne.s32.totalorder %s27, %s30
      %p36 = scmp.eq.s32.totalorder %s17, 0
      %p37 = por %p35, %p36
      %p38 = scmp.ne.s32.totalorder %s27, %s30
      %p39 = scmp.eq.s32.totalorder %s22, 1
      %p40 = por %p38, %p39
      %p41 = scmp.ne.s32.totalorder %s30, %s31
      %p42 = scmp.eq.s32.totalorder %s22, 0
      %p43 = por %p41, %p42
      %p44 = scmp.ne.s32.totalorder %s30, %s31
      %p45 = scmp.eq.s32.totalorder %s23, 1
      %p46 = por %p44, %p45
      %p48 = scmp.ne.s32.totalorder %s31, %s47
      %p49 = scmp.eq.s32.totalorder %s23, 0
      %p50 = por %p48, %p49
      %s51 = ssub.s32 %s17, %s24
      %p52 = scmp.eq.s32.totalorder %s51, 0
      %s54 = sadd.s32 %s53, 1
      %s55 = scalar_select %p52, %s53, %s54
      %p58 = pneg %p52
      %p59 = scmp.eq.s32.totalorder %s17, 1
      %p60 = por %p58, %p59
      %p61 = scmp.ne.s32.totalorder %s53, %s56
      %p62 = scmp.eq.s32.totalorder %s17, 0
      %p63 = por %p61, %p62
      %p64 = scmp.ne.s32.totalorder %s53, %s56
      %p65 = scmp.eq.s32.totalorder %s22, 1
      %p66 = por %p64, %p65
      %p67 = scmp.ne.s32.totalorder %s56, %s57
      %p68 = scmp.eq.s32.totalorder %s22, 0
      %p69 = por %p67, %p68
      %p70 = scmp.ne.s32.totalorder %s56, %s57
      %p71 = scmp.eq.s32.totalorder %s23, 1
      %p72 = por %p70, %p71
      %p74 = scmp.ne.s32.totalorder %s57, %s73
      %p75 = scmp.eq.s32.totalorder %s23, 0
      %p76 = por %p74, %p75
      %s78 = sadd.s32 %s77, 1
      %p81 = scmp.eq.s32.totalorder %s17, 1
      %p82 = scmp.ne.s32.totalorder %s77, %s79
      %p83 = scmp.eq.s32.totalorder %s17, 0
      %p84 = por %p82, %p83
      %p85 = scmp.ne.s32.totalorder %s77, %s79
      %p86 = scmp.eq.s32.totalorder %s22, 1
      %p87 = por %p85, %p86
      %p88 = scmp.ne.s32.totalorder %s79, %s80
      %p89 = scmp.eq.s32.totalorder %s22, 0
      %p90 = por %p88, %p89
      %p91 = scmp.ne.s32.totalorder %s79, %s80
      %p92 = scmp.eq.s32.totalorder %s23, 1
      %p93 = por %p91, %p92
      %p95 = scmp.ne.s32.totalorder %s80, %s94
      %p96 = scmp.eq.s32.totalorder %s23, 0
      %p97 = por %p95, %p96
      %s99 = sadd.s32 %s98, 1
      %p102 = scmp.eq.s32.totalorder %s17, 1
      %p103 = scmp.ne.s32.totalorder %s98, %s100
      %p104 = scmp.eq.s32.totalorder %s17, 0
      %p105 = por %p103, %p104
      %p106 = scmp.ne.s32.totalorder %s98, %s100
      %p107 = scmp.eq.s32.totalorder %s22, 1
      %p108 = por %p106, %p107
      %p109 = scmp.ne.s32.totalorder %s100, %s101
      %p110 = scmp.eq.s32.totalorder %s22, 0
      %p111 = por %p109, %p110
      %p112 = scmp.ne.s32.totalorder %s100, %s101
      %p113 = scmp.eq.s32.totalorder %s23, 1
      %p114 = por %p112, %p113
      %p116 = scmp.ne.s32.totalorder %s101, %s115
      %p117 = scmp.eq.s32.totalorder %s23, 0
      %p118 = por %p116, %p117
      %s119 = ssub.s32 %s17, %s24
      %p120 = scmp.eq.s32.totalorder %s119, 0
      %s122 = sadd.s32 %s121, 1
      %s123 = scalar_select %p120, %s121, %s122
      %p126 = pneg %p120
      %p127 = scmp.eq.s32.totalorder %s17, 1
      %p128 = por %p126, %p127
      %p129 = scmp.ne.s32.totalorder %s121, %s124
      %p130 = scmp.eq.s32.totalorder %s17, 0
      %p131 = por %p129, %p130
      %p132 = scmp.ne.s32.totalorder %s121, %s124
      %p133 = scmp.eq.s32.totalorder %s22, 1
      %p134 = por %p132, %p133
      %p135 = scmp.ne.s32.totalorder %s124, %s125
      %p136 = scmp.eq.s32.totalorder %s22, 0
      %p137 = por %p135, %p136
      %p138 = scmp.ne.s32.totalorder %s124, %s125
      %p139 = scmp.eq.s32.totalorder %s23, 1
      %p140 = por %p138, %p139
      %p142 = scmp.ne.s32.totalorder %s125, %s141
      %p143 = scmp.eq.s32.totalorder %s23, 0
      %p144 = por %p142, %p143
      %p145 = scmp.le.s32.totalorder 1, %s17
      %p146 = scmp.lt.s32.totalorder %s17, 3
      %p147 = pnand %p145, %p146
      %p148 = pneg %p147
      // Predicated region
      $region9: #{tpu_custom_call.1} parent=5 // pred_check
        _
      $region10: #{tpu_custom_call.1} parent=5 // pred_check_branch
        %150 = sbr.rel (%p147) target = $region12
      $region11: #{tpu_custom_call.1} parent=5 // pred_region
        %s151 = ssub.s32 %s17, 1
        // Predicated region
        $region13: #{tpu_custom_call.1} parent=11 // pred_check
          %p152 = pneg %p90
        $region14: #{tpu_custom_call.1} parent=11 // pred_check_branch
          %154 = sbr.rel (%p152) target = $region16
        $region15: #{tpu_custom_call.1} parent=11 // pred_region
          %s156 = ssub.s32 32, 32
          %157 = vsyncadd [#allocation8], %s156
          %s159 = sshll.u32 [#allocation7], 4
          %s160 = int_to_ptr.vmem [resolvable:$true] %s159
          %162 = dma.hbm_to_vmem [thread:$0]  %s2, 32, %s160, [#allocation8]
        $region16: #{tpu_custom_call.1} parent=11 // pred_fallthru
          _
        // Predicated region
        $region17: #{tpu_custom_call.1} parent=11 // pred_check
          %p163 = pneg %p111
        $region18: #{tpu_custom_call.1} parent=11 // pred_check_branch
          %165 = sbr.rel (%p163) target = $region20
        $region19: #{tpu_custom_call.1} parent=11 // pred_region
          %s167 = ssub.s32 32, 32
          %168 = vsyncadd [#allocation8], %s167
          %s170 = sshll.u32 [#allocation9], 4
          %s171 = int_to_ptr.vmem [resolvable:$true] %s170
          %173 = dma.hbm_to_vmem [thread:$0]  %s3, 32, %s171, [#allocation8]
        $region20: #{tpu_custom_call.1} parent=11 // pred_fallthru
          _
      $region12: #{tpu_custom_call.1} parent=5 // pred_fallthru
        _
      %p174 = scmp.lt.s32.totalorder %s17, 2
      // Predicated region
      $region21: #{tpu_custom_call.1} parent=5 // pred_check
        %p175 = pneg %p174
      $region22: #{tpu_custom_call.1} parent=5 // pred_check_branch
        %177 = sbr.rel (%p175) target = $region24
      $region23: #{tpu_custom_call.1} parent=5 // pred_region
        // Predicated region
        $region25: #{tpu_custom_call.1} parent=23 // pred_check
          %p178 = pneg %p37
        $region26: #{tpu_custom_call.1} parent=23 // pred_check_branch
          %180 = sbr.rel (%p178) target = $region28
        $region27: #{tpu_custom_call.1} parent=23 // pred_region
          %s181 = sand.u32 %s27, 1
          %s182 = sand.u32 %s27, 1
          %s183 = smul.addr %s182, 448
          %s184 = scalar_lea.vmem [#allocation3], %s183
          %s185 = smul.addr %s17, 8
          %s186 = scalar_lea.vmem %s0, %s185
          // Predicated region
          $region29: #{tpu_custom_call.1} parent=27 // pred_check
            _
          $region30: #{tpu_custom_call.1} parent=27 // pred_check_branch
            %188 = sbr.rel (0) target = $region32
          $region31: #{tpu_custom_call.1} parent=27 // pred_region
            // Predicated region
            $region33: #{tpu_custom_call.1} parent=31 // pred_check
              _
            $region34: #{tpu_custom_call.1} parent=31 // pred_check_branch
              %190 = sbr.rel (0) target = $region36
            $region35: #{tpu_custom_call.1} parent=31 // pred_region
              // Predicated region
              $region48: #{tpu_custom_call.1} parent=35 // pred_check
                _
              $region49: #{tpu_custom_call.1} parent=35 // pred_check_branch
                %316 = sbr.rel (0) target = $region51
              $region50: #{tpu_custom_call.1} parent=35 // pred_region
                loop: start=0, step=1, limit=1
                $region52: #{tpu_custom_call.1} parent=50 // loop_pre_header
                  _
                $region53: #{tpu_custom_call.1} parent=50 // loop_header
                  %s318 = sphi 0, %s322
                  %p319 = scmp.ge.s32.totalorder %s318, 1
                  %s323 = sphi %s186, %s186
                  %s324 = sphi %s184, %s184
                $region54: #{tpu_custom_call.1} parent=50 // loop_header_branch
                  %321 = sbr.rel (%p319) target = $region58
                $region55: #{tpu_custom_call.1} parent=50 // loop_body
                  %v325 = vld [vmem:[%s323] sm:$0xff]
                  %326 = vst [vmem:[%s324] sm:$0xff] %v325
                  %v327 = vld [vmem:[%s323 + $0x10] sm:$0xff]
                  %328 = vst [vmem:[%s324 + $0x8] sm:$0xff] %v327
                  %v329 = vld [vmem:[%s323 + $0x20] sm:$0xff]
                  %330 = vst [vmem:[%s324 + $0x10] sm:$0xff] %v329
                  %v331 = vld [vmem:[%s323 + $0x30] sm:$0xff]
                  %332 = vst [vmem:[%s324 + $0x18] sm:$0xff] %v331
                  %v333 = vld [vmem:[%s323 + $0x40] sm:$0xff]
                  %334 = vst [vmem:[%s324 + $0x20] sm:$0xff] %v333
                  %v335 = vld [vmem:[%s323 + $0x50] sm:$0xff]
                  %336 = vst [vmem:[%s324 + $0x28] sm:$0xff] %v335
                  %v337 = vld [vmem:[%s323 + $0x60] sm:$0xff]
                  %338 = vst [vmem:[%s324 + $0x30] sm:$0xff] %v337
                  %v339 = vld [vmem:[%s323 + $0x70] sm:$0xff]
                  %340 = vst [vmem:[%s324 + $0x38] sm:$0xff] %v339
                  %v341 = vld [vmem:[%s323 + $0x80] sm:$0xff]
                  %342 = vst [vmem:[%s324 + $0x40] sm:$0xff] %v341
                  %v343 = vld [vmem:[%s323 + $0x90] sm:$0xff]
                  %344 = vst [vmem:[%s324 + $0x48] sm:$0xff] %v343
                  %v345 = vld [vmem:[%s323 + $0xa0] sm:$0xff]
                  %346 = vst [vmem:[%s324 + $0x50] sm:$0xff] %v345
                  %v347 = vld [vmem:[%s323 + $0xb0] sm:$0xff]
                  %348 = vst [vmem:[%s324 + $0x58] sm:$0xff] %v347
                  %v349 = vld [vmem:[%s323 + $0xc0] sm:$0xff]
                  %350 = vst [vmem:[%s324 + $0x60] sm:$0xff] %v349
                  %v351 = vld [vmem:[%s323 + $0xd0] sm:$0xff]
                  %352 = vst [vmem:[%s324 + $0x68] sm:$0xff] %v351
                  %v353 = vld [vmem:[%s323 + $0xe0] sm:$0xff]
                  %354 = vst [vmem:[%s324 + $0x70] sm:$0xff] %v353
                  %v355 = vld [vmem:[%s323 + $0xf0] sm:$0xff]
                  %356 = vst [vmem:[%s324 + $0x78] sm:$0xff] %v355
                  %v357 = vld [vmem:[%s323 + $0x100] sm:$0xff]
                  %358 = vst [vmem:[%s324 + $0x80] sm:$0xff] %v357
                  %v359 = vld [vmem:[%s323 + $0x110] sm:$0xff]
                  %360 = vst [vmem:[%s324 + $0x88] sm:$0xff] %v359
                  %v361 = vld [vmem:[%s323 + $0x120] sm:$0xff]
                  %362 = vst [vmem:[%s324 + $0x90] sm:$0xff] %v361
                  %v363 = vld [vmem:[%s323 + $0x130] sm:$0xff]
                  %364 = vst [vmem:[%s324 + $0x98] sm:$0xff] %v363
                  %v365 = vld [vmem:[%s323 + $0x140] sm:$0xff]
                  %366 = vst [vmem:[%s324 + $0xa0] sm:$0xff] %v365
                  %v367 = vld [vmem:[%s323 + $0x150] sm:$0xff]
                  %368 = vst [vmem:[%s324 + $0xa8] sm:$0xff] %v367
                  %v369 = vld [vmem:[%s323 + $0x160] sm:$0xff]
                  %370 = vst [vmem:[%s324 + $0xb0] sm:$0xff] %v369
                  %v371 = vld [vmem:[%s323 + $0x170] sm:$0xff]
                  %372 = vst [vmem:[%s324 + $0xb8] sm:$0xff] %v371
                  %v373 = vld [vmem:[%s323 + $0x180] sm:$0xff]
                  %374 = vst [vmem:[%s324 + $0xc0] sm:$0xff] %v373
                  %v375 = vld [vmem:[%s323 + $0x190] sm:$0xff]
                  %376 = vst [vmem:[%s324 + $0xc8] sm:$0xff] %v375
                  %v377 = vld [vmem:[%s323 + $0x1a0] sm:$0xff]
                  %378 = vst [vmem:[%s324 + $0xd0] sm:$0xff] %v377
                  %v379 = vld [vmem:[%s323 + $0x1b0] sm:$0xff]
                  %380 = vst [vmem:[%s324 + $0xd8] sm:$0xff] %v379
                  %v381 = vld [vmem:[%s323 + $0x1c0] sm:$0xff]
                  %382 = vst [vmem:[%s324 + $0xe0] sm:$0xff] %v381
                  %v383 = vld [vmem:[%s323 + $0x1d0] sm:$0xff]
                  %384 = vst [vmem:[%s324 + $0xe8] sm:$0xff] %v383
                  %v385 = vld [vmem:[%s323 + $0x1e0] sm:$0xff]
                  %386 = vst [vmem:[%s324 + $0xf0] sm:$0xff] %v385
                  %v387 = vld [vmem:[%s323 + $0x1f0] sm:$0xff]
                  %388 = vst [vmem:[%s324 + $0xf8] sm:$0xff] %v387
                  %v389 = vld [vmem:[%s323 + $0x200] sm:$0xff]
                  %390 = vst [vmem:[%s324 + $0x100] sm:$0xff] %v389
                  %v391 = vld [vmem:[%s323 + $0x210] sm:$0xff]
                  %392 = vst [vmem:[%s324 + $0x108] sm:$0xff] %v391
                  %v393 = vld [vmem:[%s323 + $0x220] sm:$0xff]
                  %394 = vst [vmem:[%s324 + $0x110] sm:$0xff] %v393
                  %v395 = vld [vmem:[%s323 + $0x230] sm:$0xff]
                  %396 = vst [vmem:[%s324 + $0x118] sm:$0xff] %v395
                  %v397 = vld [vmem:[%s323 + $0x240] sm:$0xff]
                  %398 = vst [vmem:[%s324 + $0x120] sm:$0xff] %v397
                  %v399 = vld [vmem:[%s323 + $0x250] sm:$0xff]
                  %400 = vst [vmem:[%s324 + $0x128] sm:$0xff] %v399
                  %v401 = vld [vmem:[%s323 + $0x260] sm:$0xff]
                  %402 = vst [vmem:[%s324 + $0x130] sm:$0xff] %v401
                  %v403 = vld [vmem:[%s323 + $0x270] sm:$0xff]
                  %404 = vst [vmem:[%s324 + $0x138] sm:$0xff] %v403
                  %v405 = vld [vmem:[%s323 + $0x280] sm:$0xff]
                  %406 = vst [vmem:[%s324 + $0x140] sm:$0xff] %v405
                  %v407 = vld [vmem:[%s323 + $0x290] sm:$0xff]
                  %408 = vst [vmem:[%s324 + $0x148] sm:$0xff] %v407
                  %v409 = vld [vmem:[%s323 + $0x2a0] sm:$0xff]
                  %410 = vst [vmem:[%s324 + $0x150] sm:$0xff] %v409
                  %v411 = vld [vmem:[%s323 + $0x2b0] sm:$0xff]
                  %412 = vst [vmem:[%s324 + $0x158] sm:$0xff] %v411
                  %v413 = vld [vmem:[%s323 + $0x2c0] sm:$0xff]
                  %414 = vst [vmem:[%s324 + $0x160] sm:$0xff] %v413
                  %v415 = vld [vmem:[%s323 + $0x2d0] sm:$0xff]
                  %416 = vst [vmem:[%s324 + $0x168] sm:$0xff] %v415
                  %v417 = vld [vmem:[%s323 + $0x2e0] sm:$0xff]
                  %418 = vst [vmem:[%s324 + $0x170] sm:$0xff] %v417
                  %v419 = vld [vmem:[%s323 + $0x2f0] sm:$0xff]
                  %420 = vst [vmem:[%s324 + $0x178] sm:$0xff] %v419
                  %v421 = vld [vmem:[%s323 + $0x300] sm:$0xff]
                  %422 = vst [vmem:[%s324 + $0x180] sm:$0xff] %v421
                  %v423 = vld [vmem:[%s323 + $0x310] sm:$0xff]
                  %424 = vst [vmem:[%s324 + $0x188] sm:$0xff] %v423
                  %v425 = vld [vmem:[%s323 + $0x320] sm:$0xff]
                  %426 = vst [vmem:[%s324 + $0x190] sm:$0xff] %v425
                  %v427 = vld [vmem:[%s323 + $0x330] sm:$0xff]
                  %428 = vst [vmem:[%s324 + $0x198] sm:$0xff] %v427
                  %v429 = vld [vmem:[%s323 + $0x340] sm:$0xff]
                  %430 = vst [vmem:[%s324 + $0x1a0] sm:$0xff] %v429
                  %v431 = vld [vmem:[%s323 + $0x350] sm:$0xff]
                  %432 = vst [vmem:[%s324 + $0x1a8] sm:$0xff] %v431
                  %v433 = vld [vmem:[%s323 + $0x360] sm:$0xff]
                  %434 = vst [vmem:[%s324 + $0x1b0] sm:$0xff] %v433
                  %v435 = vld [vmem:[%s323 + $0x370] sm:$0xff]
                  %436 = vst [vmem:[%s324 + $0x1b8] sm:$0xff] %v435
                $region56: #{tpu_custom_call.1} parent=50 // loop_footer
                  %s322 = sadd.s32 1, %s318
                $region57: #{tpu_custom_call.1} parent=50 // loop_footer_branch
                  %317 = sbr.rel target = $region53
                $region58: #{tpu_custom_call.1} parent=50 // loop_exit
                  _
              $region51: #{tpu_custom_call.1} parent=35 // pred_fallthru
                _
              // Predicated region
              $region59: #{tpu_custom_call.1} parent=35 // pred_check
                _
              $region60: #{tpu_custom_call.1} parent=35 // pred_check_branch
                %438 = sbr.rel target = $region62
              $region61: #{tpu_custom_call.1} parent=35 // pred_region
                _
              $region62: #{tpu_custom_call.1} parent=35 // pred_fallthru
                _
            $region36: #{tpu_custom_call.1} parent=31 // pred_fallthru
              _
            // Predicated region
            $region37: #{tpu_custom_call.1} parent=31 // pred_check
              _
            $region38: #{tpu_custom_call.1} parent=31 // pred_check_branch
              %192 = sbr.rel target = $region40
            $region39: #{tpu_custom_call.1} parent=31 // pred_region
              %s194 = ssub.s32 256, 1
              loop: start=0, step=1, limit=1
              $region41: #{tpu_custom_call.1} parent=39 // loop_pre_header
                _
              $region42: #{tpu_custom_call.1} parent=39 // loop_header
                %s196 = sphi 0, %s200
                %p197 = scmp.ge.s32.totalorder %s196, 1
                %s201 = sphi %s186, %s186
                %s202 = sphi %s184, %s184
              $region43: #{tpu_custom_call.1} parent=39 // loop_header_branch
                %199 = sbr.rel (%p197) target = $region47
              $region44: #{tpu_custom_call.1} parent=39 // loop_body
                %v203 = vld [vmem:[%s201] sm:%s194]
                %204 = vst [vmem:[%s202] sm:%s194] %v203
                %v205 = vld [vmem:[%s201 + $0x10] sm:%s194]
                %206 = vst [vmem:[%s202 + $0x8] sm:%s194] %v205
                %v207 = vld [vmem:[%s201 + $0x20] sm:%s194]
                %208 = vst [vmem:[%s202 + $0x10] sm:%s194] %v207
                %v209 = vld [vmem:[%s201 + $0x30] sm:%s194]
                %210 = vst [vmem:[%s202 + $0x18] sm:%s194] %v209
                %v211 = vld [vmem:[%s201 + $0x40] sm:%s194]
                %212 = vst [vmem:[%s202 + $0x20] sm:%s194] %v211
                %v213 = vld [vmem:[%s201 + $0x50] sm:%s194]
                %214 = vst [vmem:[%s202 + $0x28] sm:%s194] %v213
                %v215 = vld [vmem:[%s201 + $0x60] sm:%s194]
                %216 = vst [vmem:[%s202 + $0x30] sm:%s194] %v215
                %v217 = vld [vmem:[%s201 + $0x70] sm:%s194]
                %218 = vst [vmem:[%s202 + $0x38] sm:%s194] %v217
                %v219 = vld [vmem:[%s201 + $0x80] sm:%s194]
                %220 = vst [vmem:[%s202 + $0x40] sm:%s194] %v219
                %v221 = vld [vmem:[%s201 + $0x90] sm:%s194]
                %222 = vst [vmem:[%s202 + $0x48] sm:%s194] %v221
                %v223 = vld [vmem:[%s201 + $0xa0] sm:%s194]
                %224 = vst [vmem:[%s202 + $0x50] sm:%s194] %v223
                %v225 = vld [vmem:[%s201 + $0xb0] sm:%s194]
                %226 = vst [vmem:[%s202 + $0x58] sm:%s194] %v225
                %v227 = vld [vmem:[%s201 + $0xc0] sm:%s194]
                %228 = vst [vmem:[%s202 + $0x60] sm:%s194] %v227
                %v229 = vld [vmem:[%s201 + $0xd0] sm:%s194]
                %230 = vst [vmem:[%s202 + $0x68] sm:%s194] %v229
                %v231 = vld [vmem:[%s201 + $0xe0] sm:%s194]
                %232 = vst [vmem:[%s202 + $0x70] sm:%s194] %v231
                %v233 = vld [vmem:[%s201 + $0xf0] sm:%s194]
                %234 = vst [vmem:[%s202 + $0x78] sm:%s194] %v233
                %v235 = vld [vmem:[%s201 + $0x100] sm:%s194]
                %236 = vst [vmem:[%s202 + $0x80] sm:%s194] %v235
                %v237 = vld [vmem:[%s201 + $0x110] sm:%s194]
                %238 = vst [vmem:[%s202 + $0x88] sm:%s194] %v237
                %v239 = vld [vmem:[%s201 + $0x120] sm:%s194]
                %240 = vst [vmem:[%s202 + $0x90] sm:%s194] %v239
                %v241 = vld [vmem:[%s201 + $0x130] sm:%s194]
                %242 = vst [vmem:[%s202 + $0x98] sm:%s194] %v241
                %v243 = vld [vmem:[%s201 + $0x140] sm:%s194]
                %244 = vst [vmem:[%s202 + $0xa0] sm:%s194] %v243
                %v245 = vld [vmem:[%s201 + $0x150] sm:%s194]
                %246 = vst [vmem:[%s202 + $0xa8] sm:%s194] %v245
                %v247 = vld [vmem:[%s201 + $0x160] sm:%s194]
                %248 = vst [vmem:[%s202 + $0xb0] sm:%s194] %v247
                %v249 = vld [vmem:[%s201 + $0x170] sm:%s194]
                %250 = vst [vmem:[%s202 + $0xb8] sm:%s194] %v249
                %v251 = vld [vmem:[%s201 + $0x180] sm:%s194]
                %252 = vst [vmem:[%s202 + $0xc0] sm:%s194] %v251
                %v253 = vld [vmem:[%s201 + $0x190] sm:%s194]
                %254 = vst [vmem:[%s202 + $0xc8] sm:%s194] %v253
                %v255 = vld [vmem:[%s201 + $0x1a0] sm:%s194]
                %256 = vst [vmem:[%s202 + $0xd0] sm:%s194] %v255
                %v257 = vld [vmem:[%s201 + $0x1b0] sm:%s194]
                %258 = vst [vmem:[%s202 + $0xd8] sm:%s194] %v257
                %v259 = vld [vmem:[%s201 + $0x1c0] sm:%s194]
                %260 = vst [vmem:[%s202 + $0xe0] sm:%s194] %v259
                %v261 = vld [vmem:[%s201 + $0x1d0] sm:%s194]
                %262 = vst [vmem:[%s202 + $0xe8] sm:%s194] %v261
                %v263 = vld [vmem:[%s201 + $0x1e0] sm:%s194]
                %264 = vst [vmem:[%s202 + $0xf0] sm:%s194] %v263
                %v265 = vld [vmem:[%s201 + $0x1f0] sm:%s194]
                %266 = vst [vmem:[%s202 + $0xf8] sm:%s194] %v265
                %v267 = vld [vmem:[%s201 + $0x200] sm:%s194]
                %268 = vst [vmem:[%s202 + $0x100] sm:%s194] %v267
                %v269 = vld [vmem:[%s201 + $0x210] sm:%s194]
                %270 = vst [vmem:[%s202 + $0x108] sm:%s194] %v269
                %v271 = vld [vmem:[%s201 + $0x220] sm:%s194]
                %272 = vst [vmem:[%s202 + $0x110] sm:%s194] %v271
                %v273 = vld [vmem:[%s201 + $0x230] sm:%s194]
                %274 = vst [vmem:[%s202 + $0x118] sm:%s194] %v273
                %v275 = vld [vmem:[%s201 + $0x240] sm:%s194]
                %276 = vst [vmem:[%s202 + $0x120] sm:%s194] %v275
                %v277 = vld [vmem:[%s201 + $0x250] sm:%s194]
                %278 = vst [vmem:[%s202 + $0x128] sm:%s194] %v277
                %v279 = vld [vmem:[%s201 + $0x260] sm:%s194]
                %280 = vst [vmem:[%s202 + $0x130] sm:%s194] %v279
                %v281 = vld [vmem:[%s201 + $0x270] sm:%s194]
                %282 = vst [vmem:[%s202 + $0x138] sm:%s194] %v281
                %v283 = vld [vmem:[%s201 + $0x280] sm:%s194]
                %284 = vst [vmem:[%s202 + $0x140] sm:%s194] %v283
                %v285 = vld [vmem:[%s201 + $0x290] sm:%s194]
                %286 = vst [vmem:[%s202 + $0x148] sm:%s194] %v285
                %v287 = vld [vmem:[%s201 + $0x2a0] sm:%s194]
                %288 = vst [vmem:[%s202 + $0x150] sm:%s194] %v287
                %v289 = vld [vmem:[%s201 + $0x2b0] sm:%s194]
                %290 = vst [vmem:[%s202 + $0x158] sm:%s194] %v289
                %v291 = vld [vmem:[%s201 + $0x2c0] sm:%s194]
                %292 = vst [vmem:[%s202 + $0x160] sm:%s194] %v291
                %v293 = vld [vmem:[%s201 + $0x2d0] sm:%s194]
                %294 = vst [vmem:[%s202 + $0x168] sm:%s194] %v293
                %v295 = vld [vmem:[%s201 + $0x2e0] sm:%s194]
                %296 = vst [vmem:[%s202 + $0x170] sm:%s194] %v295
                %v297 = vld [vmem:[%s201 + $0x2f0] sm:%s194]
                %298 = vst [vmem:[%s202 + $0x178] sm:%s194] %v297
                %v299 = vld [vmem:[%s201 + $0x300] sm:%s194]
                %300 = vst [vmem:[%s202 + $0x180] sm:%s194] %v299
                %v301 = vld [vmem:[%s201 + $0x310] sm:%s194]
                %302 = vst [vmem:[%s202 + $0x188] sm:%s194] %v301
                %v303 = vld [vmem:[%s201 + $0x320] sm:%s194]
                %304 = vst [vmem:[%s202 + $0x190] sm:%s194] %v303
                %v305 = vld [vmem:[%s201 + $0x330] sm:%s194]
                %306 = vst [vmem:[%s202 + $0x198] sm:%s194] %v305
                %v307 = vld [vmem:[%s201 + $0x340] sm:%s194]
                %308 = vst [vmem:[%s202 + $0x1a0] sm:%s194] %v307
                %v309 = vld [vmem:[%s201 + $0x350] sm:%s194]
                %310 = vst [vmem:[%s202 + $0x1a8] sm:%s194] %v309
                %v311 = vld [vmem:[%s201 + $0x360] sm:%s194]
                %312 = vst [vmem:[%s202 + $0x1b0] sm:%s194] %v311
                %v313 = vld [vmem:[%s201 + $0x370] sm:%s194]
                %314 = vst [vmem:[%s202 + $0x1b8] sm:%s194] %v313
              $region45: #{tpu_custom_call.1} parent=39 // loop_footer
                %s200 = sadd.s32 1, %s196
              $region46: #{tpu_custom_call.1} parent=39 // loop_footer_branch
                %195 = sbr.rel target = $region42
              $region47: #{tpu_custom_call.1} parent=39 // loop_exit
                _
            $region40: #{tpu_custom_call.1} parent=31 // pred_fallthru
              _
          $region32: #{tpu_custom_call.1} parent=27 // pred_fallthru
            _
          %439 = vnop
        $region28: #{tpu_custom_call.1} parent=23 // pred_fallthru
          _
        // Predicated region
        $region63: #{tpu_custom_call.1} parent=23 // pred_check
          %p440 = pneg %p63
        $region64: #{tpu_custom_call.1} parent=23 // pred_check_branch
          %442 = sbr.rel (%p440) target = $region66
        $region65: #{tpu_custom_call.1} parent=23 // pred_region
          %s443 = sand.u32 %s53, 1
          %s444 = scalar_lea.sflag [#allocation5], %s443
          %s445 = sand.u32 %s53, 1
          %s446 = smul.addr %s445, 1152
          %s447 = scalar_lea.vmem [#allocation4], %s446
          %s449 = ssub.s32 18432, 18432
          %450 = vsyncadd %s444, %s449
          %s451 = smul.addr %s17, 144
          %s452 = smul.addr %s451, 128
          %s453 = scalar_lea.hbm %s1, %s452
          %s454 = sshll.u32 %s447, 4
          %s455 = int_to_ptr.vmem [resolvable:$true] %s454
          %460 = dma.hbm_to_vmem [thread:$0]  %s453, 18432, %s455, %s444, 128, 128, 8
        $region66: #{tpu_custom_call.1} parent=23 // pred_fallthru
          _
      $region24: #{tpu_custom_call.1} parent=5 // pred_fallthru
        _
      %p461 = scmp.le.s32.totalorder 1, %s17
      %p462 = scmp.lt.s32.totalorder %s17, 3
      %p463 = pnand %p461, %p462
      %p464 = pneg %p463
      // Predicated region
      $region67: #{tpu_custom_call.1} parent=5 // pred_check
        _
      $region68: #{tpu_custom_call.1} parent=5 // pred_check_branch
        %466 = sbr.rel (%p463) target = $region70
      $region69: #{tpu_custom_call.1} parent=5 // pred_region
        %s467 = ssub.s32 %s17, 1
        %s468 = sand.u32 %s30, 1
        %s469 = sand.u32 %s30, 1
        %s470 = smul.addr %s469, 448
        %s471 = scalar_lea.vmem [#allocation3], %s470
        // Predicated region
        $region71: #{tpu_custom_call.1} parent=69 // pred_check
          %p472 = pneg %p43
        $region72: #{tpu_custom_call.1} parent=69 // pred_check_branch
          %474 = sbr.rel (%p472) target = $region74
        $region73: #{tpu_custom_call.1} parent=69 // pred_region
          _
        $region74: #{tpu_custom_call.1} parent=69 // pred_fallthru
          _
        %s475 = sand.u32 %s56, 1
        %s476 = scalar_lea.sflag [#allocation5], %s475
        %s477 = sand.u32 %s56, 1
        %s478 = smul.addr %s477, 1152
        %s479 = scalar_lea.vmem [#allocation4], %s478
        // Predicated region
        $region75: #{tpu_custom_call.1} parent=69 // pred_check
          %p480 = pneg %p69
        $region76: #{tpu_custom_call.1} parent=69 // pred_check_branch
          %482 = sbr.rel (%p480) target = $region78
        $region77: #{tpu_custom_call.1} parent=69 // pred_region
          %483 = dma.done %s476, 18432
        $region78: #{tpu_custom_call.1} parent=69 // pred_fallthru
          _
        // Predicated region
        $region79: #{tpu_custom_call.1} parent=69 // pred_check
          %p484 = pneg %p90
        $region80: #{tpu_custom_call.1} parent=69 // pred_check_branch
          %486 = sbr.rel (%p484) target = $region82
        $region81: #{tpu_custom_call.1} parent=69 // pred_region
          %487 = dma.done [#allocation8], 32
        $region82: #{tpu_custom_call.1} parent=69 // pred_fallthru
          _
        // Predicated region
        $region83: #{tpu_custom_call.1} parent=69 // pred_check
          %p488 = pneg %p111
        $region84: #{tpu_custom_call.1} parent=69 // pred_check_branch
          %490 = sbr.rel (%p488) target = $region86
        $region85: #{tpu_custom_call.1} parent=69 // pred_region
          %491 = dma.done [#allocation8], 32
        $region86: #{tpu_custom_call.1} parent=69 // pred_fallthru
          _
        %s492 = sand.u32 %s30, 1
        %s493 = sand.u32 %s30, 1
        %s494 = smul.addr %s493, 448
        %s495 = scalar_lea.vmem [#allocation3], %s494
        %p496 = pneg %p43
        %p497 = pneg %p40
        %s498 = sand.u32 %s56, 1
        %s499 = scalar_lea.sflag [#allocation5], %s498
        %s500 = sand.u32 %s56, 1
        %s501 = smul.addr %s500, 1152
        %s502 = scalar_lea.vmem [#allocation4], %s501
        %p503 = pneg %p69
        %p504 = pneg %p66
        %p505 = pneg %p90
        %p506 = pneg %p87
        %p507 = pneg %p111
        %p508 = pneg %p108
        %p509 = pneg %p137
        %p510 = pneg %p134
        %s511 = sand.u32 %s124, 1
        %s512 = scalar_lea.sflag [#allocation6], %s511
        %s513 = sand.u32 %s124, 1
        %s514 = smul.addr %s513, 448
        %s515 = scalar_lea.vmem [#allocation10], %s514
        %516 = vst [vmem:[#allocation2] sm:$0xff] 0.0
        %517 = vst [vmem:[#allocation2 + $0x8] sm:$0xff] 0.0
        %518 = vst [vmem:[#allocation2 + $0x10] sm:$0xff] 0.0
        %519 = vst [vmem:[#allocation2 + $0x18] sm:$0xff] 0.0
        %520 = vst [vmem:[#allocation2 + $0x20] sm:$0xff] 0.0
        %521 = vst [vmem:[#allocation2 + $0x28] sm:$0xff] 0.0
        %522 = vst [vmem:[#allocation2 + $0x30] sm:$0xff] 0.0
        %523 = vst [vmem:[#allocation2 + $0x38] sm:$0xff] 0.0
        %524 = vst [vmem:[#allocation2 + $0x40] sm:$0xff] 0.0
        %525 = vst [vmem:[#allocation2 + $0x48] sm:$0xff] 0.0
        %526 = vst [vmem:[#allocation2 + $0x50] sm:$0xff] 0.0
        %527 = vst [vmem:[#allocation2 + $0x58] sm:$0xff] 0.0
        %528 = vst [vmem:[#allocation2 + $0x60] sm:$0xff] 0.0
        %529 = vst [vmem:[#allocation2 + $0x68] sm:$0xff] 0.0
        %530 = vst [vmem:[#allocation2 + $0x70] sm:$0xff] 0.0
        %531 = vst [vmem:[#allocation2 + $0x78] sm:$0xff] 0.0
        %532 = vst [vmem:[#allocation2 + $0x80] sm:$0xff] 0.0
        %533 = vst [vmem:[#allocation2 + $0x88] sm:$0xff] 0.0
        %534 = vst [vmem:[#allocation2 + $0x90] sm:$0xff] 0.0
        %535 = vst [vmem:[#allocation2 + $0x98] sm:$0xff] 0.0
        %536 = vst [vmem:[#allocation2 + $0xa0] sm:$0xff] 0.0
        %537 = vst [vmem:[#allocation2 + $0xa8] sm:$0xff] 0.0
        %538 = vst [vmem:[#allocation2 + $0xb0] sm:$0xff] 0.0
        %539 = vst [vmem:[#allocation2 + $0xb8] sm:$0xff] 0.0
        %540 = vst [vmem:[#allocation2 + $0xc0] sm:$0xff] 0.0
        %541 = vst [vmem:[#allocation2 + $0xc8] sm:$0xff] 0.0
        %542 = vst [vmem:[#allocation2 + $0xd0] sm:$0xff] 0.0
        %543 = vst [vmem:[#allocation2 + $0xd8] sm:$0xff] 0.0
        %544 = vst [vmem:[#allocation2 + $0xe0] sm:$0xff] 0.0
        %545 = vst [vmem:[#allocation2 + $0xe8] sm:$0xff] 0.0
        %546 = vst [vmem:[#allocation2 + $0xf0] sm:$0xff] 0.0
        %547 = vst [vmem:[#allocation2 + $0xf8] sm:$0xff] 0.0
        %548 = vst [vmem:[#allocation2 + $0x100] sm:$0xff] 0.0
        %549 = vst [vmem:[#allocation2 + $0x108] sm:$0xff] 0.0
        %550 = vst [vmem:[#allocation2 + $0x110] sm:$0xff] 0.0
        %551 = vst [vmem:[#allocation2 + $0x118] sm:$0xff] 0.0
        %552 = vst [vmem:[#allocation2 + $0x120] sm:$0xff] 0.0
        %553 = vst [vmem:[#allocation2 + $0x128] sm:$0xff] 0.0
        %554 = vst [vmem:[#allocation2 + $0x130] sm:$0xff] 0.0
        %555 = vst [vmem:[#allocation2 + $0x138] sm:$0xff] 0.0
        %556 = vst [vmem:[#allocation2 + $0x140] sm:$0xff] 0.0
        %557 = vst [vmem:[#allocation2 + $0x148] sm:$0xff] 0.0
        %558 = vst [vmem:[#allocation2 + $0x150] sm:$0xff] 0.0
        %559 = vst [vmem:[#allocation2 + $0x158] sm:$0xff] 0.0
        %560 = vst [vmem:[#allocation2 + $0x160] sm:$0xff] 0.0
        %561 = vst [vmem:[#allocation2 + $0x168] sm:$0xff] 0.0
        %562 = vst [vmem:[#allocation2 + $0x170] sm:$0xff] 0.0
        %563 = vst [vmem:[#allocation2 + $0x178] sm:$0xff] 0.0
        %564 = vst [vmem:[#allocation2 + $0x180] sm:$0xff] 0.0
        %565 = vst [vmem:[#allocation2 + $0x188] sm:$0xff] 0.0
        %566 = vst [vmem:[#allocation2 + $0x190] sm:$0xff] 0.0
        %567 = vst [vmem:[#allocation2 + $0x198] sm:$0xff] 0.0
        %568 = vst [vmem:[#allocation2 + $0x1a0] sm:$0xff] 0.0
        %569 = vst [vmem:[#allocation2 + $0x1a8] sm:$0xff] 0.0
        %570 = vst [vmem:[#allocation2 + $0x1b0] sm:$0xff] 0.0
        %571 = vst [vmem:[#allocation2 + $0x1b8] sm:$0xff] 0.0
        %572 = vst [vmem:[#allocation2 + $0x1c0] sm:$0xff] 0.0
        %573 = vst [vmem:[#allocation2 + $0x1c8] sm:$0xff] 0.0
        %574 = vst [vmem:[#allocation2 + $0x1d0] sm:$0xff] 0.0
        %575 = vst [vmem:[#allocation2 + $0x1d8] sm:$0xff] 0.0
        %576 = vst [vmem:[#allocation2 + $0x1e0] sm:$0xff] 0.0
        %577 = vst [vmem:[#allocation2 + $0x1e8] sm:$0xff] 0.0
        %578 = vst [vmem:[#allocation2 + $0x1f0] sm:$0xff] 0.0
        %579 = vst [vmem:[#allocation2 + $0x1f8] sm:$0xff] 0.0
        %v580 = vld [vmem:[%s471] sm:$0xff]
        %v581 = vld [vmem:[%s471 + $0x8] sm:$0x3f]
        %v582 = vld [vmem:[%s471 + $0x10] sm:$0xff]
        %v583 = vld [vmem:[%s471 + $0x18] sm:$0x3f]
        %v584 = vld [vmem:[%s471 + $0x20] sm:$0xff]
        %v585 = vld [vmem:[%s471 + $0x28] sm:$0x3f]
        %v586 = vld [vmem:[%s471 + $0x30] sm:$0xff]
        %v587 = vld [vmem:[%s471 + $0x38] sm:$0x3f]
        %v588 = vld [vmem:[%s471 + $0x40] sm:$0xff]
        %v589 = vld [vmem:[%s471 + $0x48] sm:$0x3f]
        %v590 = vld [vmem:[%s471 + $0x50] sm:$0xff]
        %v591 = vld [vmem:[%s471 + $0x58] sm:$0x3f]
        %v592 = vld [vmem:[%s471 + $0x60] sm:$0xff]
        %v593 = vld [vmem:[%s471 + $0x68] sm:$0x3f]
        %v594 = vld [vmem:[%s471 + $0x70] sm:$0xff]
        %v595 = vld [vmem:[%s471 + $0x78] sm:$0x3f]
        %v596 = vld [vmem:[%s471 + $0x80] sm:$0xff]
        %v597 = vld [vmem:[%s471 + $0x88] sm:$0x3f]
        %v598 = vld [vmem:[%s471 + $0x90] sm:$0xff]
        %v599 = vld [vmem:[%s471 + $0x98] sm:$0x3f]
        %v600 = vld [vmem:[%s471 + $0xa0] sm:$0xff]
        %v601 = vld [vmem:[%s471 + $0xa8] sm:$0x3f]
        %v602 = vld [vmem:[%s471 + $0xb0] sm:$0xff]
        %v603 = vld [vmem:[%s471 + $0xb8] sm:$0x3f]
        %v604 = vld [vmem:[%s471 + $0xc0] sm:$0xff]
        %v605 = vld [vmem:[%s471 + $0xc8] sm:$0x3f]
        %v606 = vld [vmem:[%s471 + $0xd0] sm:$0xff]
        %v607 = vld [vmem:[%s471 + $0xd8] sm:$0x3f]
        %v608 = vld [vmem:[%s471 + $0xe0] sm:$0xff]
        %v609 = vld [vmem:[%s471 + $0xe8] sm:$0x3f]
        %v610 = vld [vmem:[%s471 + $0xf0] sm:$0xff]
        %v611 = vld [vmem:[%s471 + $0xf8] sm:$0x3f]
        %v612 = vld [vmem:[%s471 + $0x100] sm:$0xff]
        %v613 = vld [vmem:[%s471 + $0x108] sm:$0x3f]
        %v614 = vld [vmem:[%s471 + $0x110] sm:$0xff]
        %v615 = vld [vmem:[%s471 + $0x118] sm:$0x3f]
        %v616 = vld [vmem:[%s471 + $0x120] sm:$0xff]
        %v617 = vld [vmem:[%s471 + $0x128] sm:$0x3f]
        %v618 = vld [vmem:[%s471 + $0x130] sm:$0xff]
        %v619 = vld [vmem:[%s471 + $0x138] sm:$0x3f]
        %v620 = vld [vmem:[%s471 + $0x140] sm:$0xff]
        %v621 = vld [vmem:[%s471 + $0x148] sm:$0x3f]
        %v622 = vld [vmem:[%s471 + $0x150] sm:$0xff]
        %v623 = vld [vmem:[%s471 + $0x158] sm:$0x3f]
        %v624 = vld [vmem:[%s471 + $0x160] sm:$0xff]
        %v625 = vld [vmem:[%s471 + $0x168] sm:$0x3f]
        %v626 = vld [vmem:[%s471 + $0x170] sm:$0xff]
        %v627 = vld [vmem:[%s471 + $0x178] sm:$0x3f]
        %v628 = vld [vmem:[%s471 + $0x180] sm:$0xff]
        %v629 = vld [vmem:[%s471 + $0x188] sm:$0x3f]
        %v630 = vld [vmem:[%s471 + $0x190] sm:$0xff]
        %v631 = vld [vmem:[%s471 + $0x198] sm:$0x3f]
        %v632 = vld [vmem:[%s471 + $0x1a0] sm:$0xff]
        %v633 = vld [vmem:[%s471 + $0x1a8] sm:$0x3f]
        %v634 = vld [vmem:[%s471 + $0x1b0] sm:$0xff]
        %v635 = vld [vmem:[%s471 + $0x1b8] sm:$0x3f]
        %v636 = vmax.f32 %v580, 0.0
        %v637 = vmax.f32 %v581, 0.0
        %v638 = vmax.f32 %v582, 0.0
        %v639 = vmax.f32 %v583, 0.0
        %v640 = vmax.f32 %v584, 0.0
        %v641 = vmax.f32 %v585, 0.0
        %v642 = vmax.f32 %v586, 0.0
        %v643 = vmax.f32 %v587, 0.0
        %v644 = vmax.f32 %v588, 0.0
        %v645 = vmax.f32 %v589, 0.0
        %v646 = vmax.f32 %v590, 0.0
        %v647 = vmax.f32 %v591, 0.0
        %v648 = vmax.f32 %v592, 0.0
        %v649 = vmax.f32 %v593, 0.0
        %v650 = vmax.f32 %v594, 0.0
        %v651 = vmax.f32 %v595, 0.0
        %v652 = vmax.f32 %v596, 0.0
        %v653 = vmax.f32 %v597, 0.0
        %v654 = vmax.f32 %v598, 0.0
        %v655 = vmax.f32 %v599, 0.0
        %v656 = vmax.f32 %v600, 0.0
        %v657 = vmax.f32 %v601, 0.0
        %v658 = vmax.f32 %v602, 0.0
        %v659 = vmax.f32 %v603, 0.0
        %v660 = vmax.f32 %v604, 0.0
        %v661 = vmax.f32 %v605, 0.0
        %v662 = vmax.f32 %v606, 0.0
        %v663 = vmax.f32 %v607, 0.0
        %v664 = vmax.f32 %v608, 0.0
        %v665 = vmax.f32 %v609, 0.0
        %v666 = vmax.f32 %v610, 0.0
        %v667 = vmax.f32 %v611, 0.0
        %v668 = vmax.f32 %v612, 0.0
        %v669 = vmax.f32 %v613, 0.0
        %v670 = vmax.f32 %v614, 0.0
        %v671 = vmax.f32 %v615, 0.0
        %v672 = vmax.f32 %v616, 0.0
        %v673 = vmax.f32 %v617, 0.0
        %v674 = vmax.f32 %v618, 0.0
        %v675 = vmax.f32 %v619, 0.0
        %v676 = vmax.f32 %v620, 0.0
        %v677 = vmax.f32 %v621, 0.0
        %v678 = vmax.f32 %v622, 0.0
        %v679 = vmax.f32 %v623, 0.0
        %v680 = vmax.f32 %v624, 0.0
        %v681 = vmax.f32 %v625, 0.0
        %v682 = vmax.f32 %v626, 0.0
        %v683 = vmax.f32 %v627, 0.0
        %v684 = vmax.f32 %v628, 0.0
        %v685 = vmax.f32 %v629, 0.0
        %v686 = vmax.f32 %v630, 0.0
        %v687 = vmax.f32 %v631, 0.0
        %v688 = vmax.f32 %v632, 0.0
        %v689 = vmax.f32 %v633, 0.0
        %v690 = vmax.f32 %v634, 0.0
        %v691 = vmax.f32 %v635, 0.0
        %s692 = scalar_lea.vmem [#allocation2], 16
        %693 = vst [vmem:[%s692 + $0x1] sm:$0xff] %v636
        %694 = vst [vmem:[%s692 + $0x9] sm:$0x3f] %v637
        %695 = vst [vmem:[%s692 + $0x11] sm:$0xff] %v638
        %696 = vst [vmem:[%s692 + $0x19] sm:$0x3f] %v639
        %697 = vst [vmem:[%s692 + $0x21] sm:$0xff] %v640
        %698 = vst [vmem:[%s692 + $0x29] sm:$0x3f] %v641
        %699 = vst [vmem:[%s692 + $0x31] sm:$0xff] %v642
        %700 = vst [vmem:[%s692 + $0x39] sm:$0x3f] %v643
        %701 = vst [vmem:[%s692 + $0x41] sm:$0xff] %v644
        %702 = vst [vmem:[%s692 + $0x49] sm:$0x3f] %v645
        %703 = vst [vmem:[%s692 + $0x51] sm:$0xff] %v646
        %704 = vst [vmem:[%s692 + $0x59] sm:$0x3f] %v647
        %705 = vst [vmem:[%s692 + $0x61] sm:$0xff] %v648
        %706 = vst [vmem:[%s692 + $0x69] sm:$0x3f] %v649
        %707 = vst [vmem:[%s692 + $0x71] sm:$0xff] %v650
        %708 = vst [vmem:[%s692 + $0x79] sm:$0x3f] %v651
        %709 = vst [vmem:[%s692 + $0x81] sm:$0xff] %v652
        %710 = vst [vmem:[%s692 + $0x89] sm:$0x3f] %v653
        %711 = vst [vmem:[%s692 + $0x91] sm:$0xff] %v654
        %712 = vst [vmem:[%s692 + $0x99] sm:$0x3f] %v655
        %713 = vst [vmem:[%s692 + $0xa1] sm:$0xff] %v656
        %714 = vst [vmem:[%s692 + $0xa9] sm:$0x3f] %v657
        %715 = vst [vmem:[%s692 + $0xb1] sm:$0xff] %v658
        %716 = vst [vmem:[%s692 + $0xb9] sm:$0x3f] %v659
        %717 = vst [vmem:[%s692 + $0xc1] sm:$0xff] %v660
        %718 = vst [vmem:[%s692 + $0xc9] sm:$0x3f] %v661
        %719 = vst [vmem:[%s692 + $0xd1] sm:$0xff] %v662
        %720 = vst [vmem:[%s692 + $0xd9] sm:$0x3f] %v663
        %721 = vst [vmem:[%s692 + $0x101] sm:$0xff] %v664
        %722 = vst [vmem:[%s692 + $0x109] sm:$0x3f] %v665
        %723 = vst [vmem:[%s692 + $0x111] sm:$0xff] %v666
        %724 = vst [vmem:[%s692 + $0x119] sm:$0x3f] %v667
        %725 = vst [vmem:[%s692 + $0x121] sm:$0xff] %v668
        %726 = vst [vmem:[%s692 + $0x129] sm:$0x3f] %v669
        %727 = vst [vmem:[%s692 + $0x131] sm:$0xff] %v670
        %728 = vst [vmem:[%s692 + $0x139] sm:$0x3f] %v671
        %729 = vst [vmem:[%s692 + $0x141] sm:$0xff] %v672
        %730 = vst [vmem:[%s692 + $0x149] sm:$0x3f] %v673
        %731 = vst [vmem:[%s692 + $0x151] sm:$0xff] %v674
        %732 = vst [vmem:[%s692 + $0x159] sm:$0x3f] %v675
        %733 = vst [vmem:[%s692 + $0x161] sm:$0xff] %v676
        %734 = vst [vmem:[%s692 + $0x169] sm:$0x3f] %v677
        %735 = vst [vmem:[%s692 + $0x171] sm:$0xff] %v678
        %736 = vst [vmem:[%s692 + $0x179] sm:$0x3f] %v679
        %737 = vst [vmem:[%s692 + $0x181] sm:$0xff] %v680
        %738 = vst [vmem:[%s692 + $0x189] sm:$0x3f] %v681
        %739 = vst [vmem:[%s692 + $0x191] sm:$0xff] %v682
        %740 = vst [vmem:[%s692 + $0x199] sm:$0x3f] %v683
        %741 = vst [vmem:[%s692 + $0x1a1] sm:$0xff] %v684
        %742 = vst [vmem:[%s692 + $0x1a9] sm:$0x3f] %v685
        %743 = vst [vmem:[%s692 + $0x1b1] sm:$0xff] %v686
        %744 = vst [vmem:[%s692 + $0x1b9] sm:$0x3f] %v687
        %745 = vst [vmem:[%s692 + $0x1c1] sm:$0xff] %v688
        %746 = vst [vmem:[%s692 + $0x1c9] sm:$0x3f] %v689
        %747 = vst [vmem:[%s692 + $0x1d1] sm:$0xff] %v690
        %748 = vst [vmem:[%s692 + $0x1d9] sm:$0x3f] %v691
        %v749 = vld [vmem:[#allocation2] sm:$0xff]
        %v750 = vld [vmem:[#allocation2 + $0x8] sm:$0xff]
        %v751 = vld [vmem:[#allocation2 + $0x10] sm:$0xff]
        %v752 = vld [vmem:[#allocation2 + $0x18] sm:$0xff]
        %v753 = vld [vmem:[#allocation2 + $0x20] sm:$0xff]
        %v754 = vld [vmem:[#allocation2 + $0x28] sm:$0xff]
        %v755 = vld [vmem:[#allocation2 + $0x30] sm:$0xff]
        %v756 = vld [vmem:[#allocation2 + $0x38] sm:$0xff]
        %v757 = vld [vmem:[#allocation2 + $0x40] sm:$0xff]
        %v758 = vld [vmem:[#allocation2 + $0x48] sm:$0xff]
        %v759 = vld [vmem:[#allocation2 + $0x50] sm:$0xff]
        %v760 = vld [vmem:[#allocation2 + $0x58] sm:$0xff]
        %v761 = vld [vmem:[#allocation2 + $0x60] sm:$0xff]
        %v762 = vld [vmem:[#allocation2 + $0x68] sm:$0xff]
        %v763 = vld [vmem:[#allocation2 + $0x70] sm:$0xff]
        %v764 = vld [vmem:[#allocation2 + $0x78] sm:$0xff]
        %v765 = vld [vmem:[#allocation2 + $0x80] sm:$0xff]
        %v766 = vld [vmem:[#allocation2 + $0x88] sm:$0xff]
        %v767 = vld [vmem:[#allocation2 + $0x90] sm:$0xff]
        %v768 = vld [vmem:[#allocation2 + $0x98] sm:$0xff]
        %v769 = vld [vmem:[#allocation2 + $0xa0] sm:$0xff]
        %v770 = vld [vmem:[#allocation2 + $0xa8] sm:$0xff]
        %v771 = vld [vmem:[#allocation2 + $0xb0] sm:$0xff]
        %v772 = vld [vmem:[#allocation2 + $0xb8] sm:$0xff]
        %v773 = vld [vmem:[#allocation2 + $0xc0] sm:$0xff]
        %v774 = vld [vmem:[#allocation2 + $0xc8] sm:$0xff]
        %v775 = vld [vmem:[#allocation2 + $0xd0] sm:$0xff]
        %v776 = vld [vmem:[#allocation2 + $0xd8] sm:$0xff]
        %v777 = vld [vmem:[#allocation2 + $0x100] sm:$0xff]
        %v778 = vld [vmem:[#allocation2 + $0x108] sm:$0xff]
        %v779 = vld [vmem:[#allocation2 + $0x110] sm:$0xff]
        %v780 = vld [vmem:[#allocation2 + $0x118] sm:$0xff]
        %v781 = vld [vmem:[#allocation2 + $0x120] sm:$0xff]
        %v782 = vld [vmem:[#allocation2 + $0x128] sm:$0xff]
        %v783 = vld [vmem:[#allocation2 + $0x130] sm:$0xff]
        %v784 = vld [vmem:[#allocation2 + $0x138] sm:$0xff]
        %v785 = vld [vmem:[#allocation2 + $0x140] sm:$0xff]
        %v786 = vld [vmem:[#allocation2 + $0x148] sm:$0xff]
        %v787 = vld [vmem:[#allocation2 + $0x150] sm:$0xff]
        %v788 = vld [vmem:[#allocation2 + $0x158] sm:$0xff]
        %v789 = vld [vmem:[#allocation2 + $0x160] sm:$0xff]
        %v790 = vld [vmem:[#allocation2 + $0x168] sm:$0xff]
        %v791 = vld [vmem:[#allocation2 + $0x170] sm:$0xff]
        %v792 = vld [vmem:[#allocation2 + $0x178] sm:$0xff]
        %v793 = vld [vmem:[#allocation2 + $0x180] sm:$0xff]
        %v794 = vld [vmem:[#allocation2 + $0x188] sm:$0xff]
        %v795 = vld [vmem:[#allocation2 + $0x190] sm:$0xff]
        %v796 = vld [vmem:[#allocation2 + $0x198] sm:$0xff]
        %v797 = vld [vmem:[#allocation2 + $0x1a0] sm:$0xff]
        %v798 = vld [vmem:[#allocation2 + $0x1a8] sm:$0xff]
        %v799 = vld [vmem:[#allocation2 + $0x1b0] sm:$0xff]
        %v800 = vld [vmem:[#allocation2 + $0x1b8] sm:$0xff]
        %v801 = vld [vmem:[#allocation2 + $0x1c0] sm:$0xff]
        %v802 = vld [vmem:[#allocation2 + $0x1c8] sm:$0xff]
        %v803 = vld [vmem:[#allocation2 + $0x1d0] sm:$0xff]
        %v804 = vld [vmem:[#allocation2 + $0x1d8] sm:$0xff]
        %v805 = vld [vmem:[%s692] sm:$0xff]
        %v806 = vld [vmem:[%s692 + $0x8] sm:$0xff]
        %v807 = vld [vmem:[%s692 + $0x10] sm:$0xff]
        %v808 = vld [vmem:[%s692 + $0x18] sm:$0xff]
        %v809 = vld [vmem:[%s692 + $0x20] sm:$0xff]
        %v810 = vld [vmem:[%s692 + $0x28] sm:$0xff]
        %v811 = vld [vmem:[%s692 + $0x30] sm:$0xff]
        %v812 = vld [vmem:[%s692 + $0x38] sm:$0xff]
        %v813 = vld [vmem:[%s692 + $0x40] sm:$0xff]
        %v814 = vld [vmem:[%s692 + $0x48] sm:$0xff]
        %v815 = vld [vmem:[%s692 + $0x50] sm:$0xff]
        %v816 = vld [vmem:[%s692 + $0x58] sm:$0xff]
        %v817 = vld [vmem:[%s692 + $0x60] sm:$0xff]
        %v818 = vld [vmem:[%s692 + $0x68] sm:$0xff]
        %v819 = vld [vmem:[%s692 + $0x70] sm:$0xff]
        %v820 = vld [vmem:[%s692 + $0x78] sm:$0xff]
        %v821 = vld [vmem:[%s692 + $0x80] sm:$0xff]
        %v822 = vld [vmem:[%s692 + $0x88] sm:$0xff]
        %v823 = vld [vmem:[%s692 + $0x90] sm:$0xff]
        %v824 = vld [vmem:[%s692 + $0x98] sm:$0xff]
        %v825 = vld [vmem:[%s692 + $0xa0] sm:$0xff]
        %v826 = vld [vmem:[%s692 + $0xa8] sm:$0xff]
        %v827 = vld [vmem:[%s692 + $0xb0] sm:$0xff]
        %v828 = vld [vmem:[%s692 + $0xb8] sm:$0xff]
        %v829 = vld [vmem:[%s692 + $0xc0] sm:$0xff]
        %v830 = vld [vmem:[%s692 + $0xc8] sm:$0xff]
        %v831 = vld [vmem:[%s692 + $0xd0] sm:$0xff]
        %v832 = vld [vmem:[%s692 + $0xd8] sm:$0xff]
        %v833 = vld [vmem:[%s692 + $0x100] sm:$0xff]
        %v834 = vld [vmem:[%s692 + $0x108] sm:$0xff]
        %v835 = vld [vmem:[%s692 + $0x110] sm:$0xff]
        %v836 = vld [vmem:[%s692 + $0x118] sm:$0xff]
        %v837 = vld [vmem:[%s692 + $0x120] sm:$0xff]
        %v838 = vld [vmem:[%s692 + $0x128] sm:$0xff]
        %v839 = vld [vmem:[%s692 + $0x130] sm:$0xff]
        %v840 = vld [vmem:[%s692 + $0x138] sm:$0xff]
        %v841 = vld [vmem:[%s692 + $0x140] sm:$0xff]
        %v842 = vld [vmem:[%s692 + $0x148] sm:$0xff]
        %v843 = vld [vmem:[%s692 + $0x150] sm:$0xff]
        %v844 = vld [vmem:[%s692 + $0x158] sm:$0xff]
        %v845 = vld [vmem:[%s692 + $0x160] sm:$0xff]
        %v846 = vld [vmem:[%s692 + $0x168] sm:$0xff]
        %v847 = vld [vmem:[%s692 + $0x170] sm:$0xff]
        %v848 = vld [vmem:[%s692 + $0x178] sm:$0xff]
        %v849 = vld [vmem:[%s692 + $0x180] sm:$0xff]
        %v850 = vld [vmem:[%s692 + $0x188] sm:$0xff]
        %v851 = vld [vmem:[%s692 + $0x190] sm:$0xff]
        %v852 = vld [vmem:[%s692 + $0x198] sm:$0xff]
        %v853 = vld [vmem:[%s692 + $0x1a0] sm:$0xff]
        %v854 = vld [vmem:[%s692 + $0x1a8] sm:$0xff]
        %v855 = vld [vmem:[%s692 + $0x1b0] sm:$0xff]
        %v856 = vld [vmem:[%s692 + $0x1b8] sm:$0xff]
        %v857 = vld [vmem:[%s692 + $0x1c0] sm:$0xff]
        %v858 = vld [vmem:[%s692 + $0x1c8] sm:$0xff]
        %v859 = vld [vmem:[%s692 + $0x1d0] sm:$0xff]
        %v860 = vld [vmem:[%s692 + $0x1d8] sm:$0xff]
        %s861 = scalar_lea.vmem [#allocation2], 32
        %v862 = vld [vmem:[%s861] sm:$0xff]
        %v863 = vld [vmem:[%s861 + $0x8] sm:$0xff]
        %v864 = vld [vmem:[%s861 + $0x10] sm:$0xff]
        %v865 = vld [vmem:[%s861 + $0x18] sm:$0xff]
        %v866 = vld [vmem:[%s861 + $0x20] sm:$0xff]
        %v867 = vld [vmem:[%s861 + $0x28] sm:$0xff]
        %v868 = vld [vmem:[%s861 + $0x30] sm:$0xff]
        %v869 = vld [vmem:[%s861 + $0x38] sm:$0xff]
        %v870 = vld [vmem:[%s861 + $0x40] sm:$0xff]
        %v871 = vld [vmem:[%s861 + $0x48] sm:$0xff]
        %v872 = vld [vmem:[%s861 + $0x50] sm:$0xff]
        %v873 = vld [vmem:[%s861 + $0x58] sm:$0xff]
        %v874 = vld [vmem:[%s861 + $0x60] sm:$0xff]
        %v875 = vld [vmem:[%s861 + $0x68] sm:$0xff]
        %v876 = vld [vmem:[%s861 + $0x70] sm:$0xff]
        %v877 = vld [vmem:[%s861 + $0x78] sm:$0xff]
        %v878 = vld [vmem:[%s861 + $0x80] sm:$0xff]
        %v879 = vld [vmem:[%s861 + $0x88] sm:$0xff]
        %v880 = vld [vmem:[%s861 + $0x90] sm:$0xff]
        %v881 = vld [vmem:[%s861 + $0x98] sm:$0xff]
        %v882 = vld [vmem:[%s861 + $0xa0] sm:$0xff]
        %v883 = vld [vmem:[%s861 + $0xa8] sm:$0xff]
        %v884 = vld [vmem:[%s861 + $0xb0] sm:$0xff]
        %v885 = vld [vmem:[%s861 + $0xb8] sm:$0xff]
        %v886 = vld [vmem:[%s861 + $0xc0] sm:$0xff]
        %v887 = vld [vmem:[%s861 + $0xc8] sm:$0xff]
        %v888 = vld [vmem:[%s861 + $0xd0] sm:$0xff]
        %v889 = vld [vmem:[%s861 + $0xd8] sm:$0xff]
        %v890 = vld [vmem:[%s861 + $0x100] sm:$0xff]
        %v891 = vld [vmem:[%s861 + $0x108] sm:$0xff]
        %v892 = vld [vmem:[%s861 + $0x110] sm:$0xff]
        %v893 = vld [vmem:[%s861 + $0x118] sm:$0xff]
        %v894 = vld [vmem:[%s861 + $0x120] sm:$0xff]
        %v895 = vld [vmem:[%s861 + $0x128] sm:$0xff]
        %v896 = vld [vmem:[%s861 + $0x130] sm:$0xff]
        %v897 = vld [vmem:[%s861 + $0x138] sm:$0xff]
        %v898 = vld [vmem:[%s861 + $0x140] sm:$0xff]
        %v899 = vld [vmem:[%s861 + $0x148] sm:$0xff]
        %v900 = vld [vmem:[%s861 + $0x150] sm:$0xff]
        %v901 = vld [vmem:[%s861 + $0x158] sm:$0xff]
        %v902 = vld [vmem:[%s861 + $0x160] sm:$0xff]
        %v903 = vld [vmem:[%s861 + $0x168] sm:$0xff]
        %v904 = vld [vmem:[%s861 + $0x170] sm:$0xff]
        %v905 = vld [vmem:[%s861 + $0x178] sm:$0xff]
        %v906 = vld [vmem:[%s861 + $0x180] sm:$0xff]
        %v907 = vld [vmem:[%s861 + $0x188] sm:$0xff]
        %v908 = vld [vmem:[%s861 + $0x190] sm:$0xff]
        %v909 = vld [vmem:[%s861 + $0x198] sm:$0xff]
        %v910 = vld [vmem:[%s861 + $0x1a0] sm:$0xff]
        %v911 = vld [vmem:[%s861 + $0x1a8] sm:$0xff]
        %v912 = vld [vmem:[%s861 + $0x1b0] sm:$0xff]
        %v913 = vld [vmem:[%s861 + $0x1b8] sm:$0xff]
        %v914 = vld [vmem:[%s861 + $0x1c0] sm:$0xff]
        %v915 = vld [vmem:[%s861 + $0x1c8] sm:$0xff]
        %v916 = vld [vmem:[%s861 + $0x1d0] sm:$0xff]
        %v917 = vld [vmem:[%s861 + $0x1d8] sm:$0xff]
        %vm974 = vcmask 1046528
        %v975 = vrot.slane %v749, 1
        %v976 = vrot.slane %v750, 1
        %v977 = vsel %vm974, %v975, %v976
        %v978 = vrot.slane %v751, 1
        %v979 = vsel %vm974, %v976, %v978
        %v980 = vrot.slane %v752, 1
        %v981 = vsel %vm974, %v978, %v980
        %v982 = vrot.slane %v753, 1
        %v983 = vsel %vm974, %v980, %v982
        %v984 = vrot.slane %v754, 1
        %v985 = vsel %vm974, %v982, %v984
        %v986 = vrot.slane %v755, 1
        %v987 = vsel %vm974, %v984, %v986
        %v988 = vrot.slane %v756, 1
        %v989 = vsel %vm974, %v986, %v988
        %v990 = vrot.slane %v757, 1
        %v991 = vsel %vm974, %v988, %v990
        %v992 = vrot.slane %v758, 1
        %v993 = vsel %vm974, %v990, %v992
        %v994 = vrot.slane %v759, 1
        %v995 = vsel %vm974, %v992, %v994
        %v996 = vrot.slane %v760, 1
        %v997 = vsel %vm974, %v994, %v996
        %v998 = vrot.slane %v761, 1
        %v999 = vsel %vm974, %v996, %v998
        %v1000 = vrot.slane %v762, 1
        %v1001 = vsel %vm974, %v998, %v1000
        %v1002 = vrot.slane %v763, 1
        %v1003 = vsel %vm974, %v1000, %v1002
        %v1004 = vrot.slane %v764, 1
        %v1005 = vsel %vm974, %v1002, %v1004
        %v1006 = vrot.slane %v765, 1
        %v1007 = vsel %vm974, %v1004, %v1006
        %v1008 = vrot.slane %v766, 1
        %v1009 = vsel %vm974, %v1006, %v1008
        %v1010 = vrot.slane %v767, 1
        %v1011 = vsel %vm974, %v1008, %v1010
        %v1012 = vrot.slane %v768, 1
        %v1013 = vsel %vm974, %v1010, %v1012
        %v1014 = vrot.slane %v769, 1
        %v1015 = vsel %vm974, %v1012, %v1014
        %v1016 = vrot.slane %v770, 1
        %v1017 = vsel %vm974, %v1014, %v1016
        %v1018 = vrot.slane %v771, 1
        %v1019 = vsel %vm974, %v1016, %v1018
        %v1020 = vrot.slane %v772, 1
        %v1021 = vsel %vm974, %v1018, %v1020
        %v1022 = vrot.slane %v773, 1
        %v1023 = vsel %vm974, %v1020, %v1022
        %v1024 = vrot.slane %v774, 1
        %v1025 = vsel %vm974, %v1022, %v1024
        %v1026 = vrot.slane %v775, 1
        %v1027 = vsel %vm974, %v1024, %v1026
        %v1028 = vrot.slane %v776, 1
        %v1029 = vsel %vm974, %v1026, %v1028
        %v1030 = vrot.slane %v777, 1
        %v1031 = vsel %vm974, %v1028, %v1030
        %v1032 = vrot.slane %v778, 1
        %v1033 = vsel %vm974, %v1030, %v1032
        %v1034 = vrot.slane %v779, 1
        %v1035 = vsel %vm974, %v1032, %v1034
        %v1036 = vrot.slane %v780, 1
        %v1037 = vsel %vm974, %v1034, %v1036
        %v1038 = vrot.slane %v781, 1
        %v1039 = vsel %vm974, %v1036, %v1038
        %v1040 = vrot.slane %v782, 1
        %v1041 = vsel %vm974, %v1038, %v1040
        %v1042 = vrot.slane %v783, 1
        %v1043 = vsel %vm974, %v1040, %v1042
        %v1044 = vrot.slane %v784, 1
        %v1045 = vsel %vm974, %v1042, %v1044
        %v1046 = vrot.slane %v785, 1
        %v1047 = vsel %vm974, %v1044, %v1046
        %v1048 = vrot.slane %v786, 1
        %v1049 = vsel %vm974, %v1046, %v1048
        %v1050 = vrot.slane %v787, 1
        %v1051 = vsel %vm974, %v1048, %v1050
        %v1052 = vrot.slane %v788, 1
        %v1053 = vsel %vm974, %v1050, %v1052
        %v1054 = vrot.slane %v789, 1
        %v1055 = vsel %vm974, %v1052, %v1054
        %v1056 = vrot.slane %v790, 1
        %v1057 = vsel %vm974, %v1054, %v1056
        %v1058 = vrot.slane %v791, 1
        %v1059 = vsel %vm974, %v1056, %v1058
        %v1060 = vrot.slane %v792, 1
        %v1061 = vsel %vm974, %v1058, %v1060
        %v1062 = vrot.slane %v793, 1
        %v1063 = vsel %vm974, %v1060, %v1062
        %v1064 = vrot.slane %v794, 1
        %v1065 = vsel %vm974, %v1062, %v1064
        %v1066 = vrot.slane %v795, 1
        %v1067 = vsel %vm974, %v1064, %v1066
        %v1068 = vrot.slane %v796, 1
        %v1069 = vsel %vm974, %v1066, %v1068
        %v1070 = vrot.slane %v797, 1
        %v1071 = vsel %vm974, %v1068, %v1070
        %v1072 = vrot.slane %v798, 1
        %v1073 = vsel %vm974, %v1070, %v1072
        %v1074 = vrot.slane %v799, 1
        %v1075 = vsel %vm974, %v1072, %v1074
        %v1076 = vrot.slane %v800, 1
        %v1077 = vsel %vm974, %v1074, %v1076
        %v1078 = vrot.slane %v801, 1
        %v1079 = vsel %vm974, %v1076, %v1078
        %v1080 = vrot.slane %v802, 1
        %v1081 = vsel %vm974, %v1078, %v1080
        %v1082 = vrot.slane %v803, 1
        %v1083 = vsel %vm974, %v1080, %v1082
        %v1084 = vrot.slane %v804, 1
        %v1085 = vsel %vm974, %v1082, %v1084
        %vm1142 = vcmask 1045504
        %v1143 = vrot.slane %v749, 2
        %v1144 = vrot.slane %v750, 2
        %v1145 = vsel %vm1142, %v1143, %v1144
        %v1146 = vrot.slane %v751, 2
        %v1147 = vsel %vm1142, %v1144, %v1146
        %v1148 = vrot.slane %v752, 2
        %v1149 = vsel %vm1142, %v1146, %v1148
        %v1150 = vrot.slane %v753, 2
        %v1151 = vsel %vm1142, %v1148, %v1150
        %v1152 = vrot.slane %v754, 2
        %v1153 = vsel %vm1142, %v1150, %v1152
        %v1154 = vrot.slane %v755, 2
        %v1155 = vsel %vm1142, %v1152, %v1154
        %v1156 = vrot.slane %v756, 2
        %v1157 = vsel %vm1142, %v1154, %v1156
        %v1158 = vrot.slane %v757, 2
        %v1159 = vsel %vm1142, %v1156, %v1158
        %v1160 = vrot.slane %v758, 2
        %v1161 = vsel %vm1142, %v1158, %v1160
        %v1162 = vrot.slane %v759, 2
        %v1163 = vsel %vm1142, %v1160, %v1162
        %v1164 = vrot.slane %v760, 2
        %v1165 = vsel %vm1142, %v1162, %v1164
        %v1166 = vrot.slane %v761, 2
        %v1167 = vsel %vm1142, %v1164, %v1166
        %v1168 = vrot.slane %v762, 2
        %v1169 = vsel %vm1142, %v1166, %v1168
        %v1170 = vrot.slane %v763, 2
        %v1171 = vsel %vm1142, %v1168, %v1170
        %v1172 = vrot.slane %v764, 2
        %v1173 = vsel %vm1142, %v1170, %v1172
        %v1174 = vrot.slane %v765, 2
        %v1175 = vsel %vm1142, %v1172, %v1174
        %v1176 = vrot.slane %v766, 2
        %v1177 = vsel %vm1142, %v1174, %v1176
        %v1178 = vrot.slane %v767, 2
        %v1179 = vsel %vm1142, %v1176, %v1178
        %v1180 = vrot.slane %v768, 2
        %v1181 = vsel %vm1142, %v1178, %v1180
        %v1182 = vrot.slane %v769, 2
        %v1183 = vsel %vm1142, %v1180, %v1182
        %v1184 = vrot.slane %v770, 2
        %v1185 = vsel %vm1142, %v1182, %v1184
        %v1186 = vrot.slane %v771, 2
        %v1187 = vsel %vm1142, %v1184, %v1186
        %v1188 = vrot.slane %v772, 2
        %v1189 = vsel %vm1142, %v1186, %v1188
        %v1190 = vrot.slane %v773, 2
        %v1191 = vsel %vm1142, %v1188, %v1190
        %v1192 = vrot.slane %v774, 2
        %v1193 = vsel %vm1142, %v1190, %v1192
        %v1194 = vrot.slane %v775, 2
        %v1195 = vsel %vm1142, %v1192, %v1194
        %v1196 = vrot.slane %v776, 2
        %v1197 = vsel %vm1142, %v1194, %v1196
        %v1198 = vrot.slane %v777, 2
        %v1199 = vsel %vm1142, %v1196, %v1198
        %v1200 = vrot.slane %v778, 2
        %v1201 = vsel %vm1142, %v1198, %v1200
        %v1202 = vrot.slane %v779, 2
        %v1203 = vsel %vm1142, %v1200, %v1202
        %v1204 = vrot.slane %v780, 2
        %v1205 = vsel %vm1142, %v1202, %v1204
        %v1206 = vrot.slane %v781, 2
        %v1207 = vsel %vm1142, %v1204, %v1206
        %v1208 = vrot.slane %v782, 2
        %v1209 = vsel %vm1142, %v1206, %v1208
        %v1210 = vrot.slane %v783, 2
        %v1211 = vsel %vm1142, %v1208, %v1210
        %v1212 = vrot.slane %v784, 2
        %v1213 = vsel %vm1142, %v1210, %v1212
        %v1214 = vrot.slane %v785, 2
        %v1215 = vsel %vm1142, %v1212, %v1214
        %v1216 = vrot.slane %v786, 2
        %v1217 = vsel %vm1142, %v1214, %v1216
        %v1218 = vrot.slane %v787, 2
        %v1219 = vsel %vm1142, %v1216, %v1218
        %v1220 = vrot.slane %v788, 2
        %v1221 = vsel %vm1142, %v1218, %v1220
        %v1222 = vrot.slane %v789, 2
        %v1223 = vsel %vm1142, %v1220, %v1222
        %v1224 = vrot.slane %v790, 2
        %v1225 = vsel %vm1142, %v1222, %v1224
        %v1226 = vrot.slane %v791, 2
        %v1227 = vsel %vm1142, %v1224, %v1226
        %v1228 = vrot.slane %v792, 2
        %v1229 = vsel %vm1142, %v1226, %v1228
        %v1230 = vrot.slane %v793, 2
        %v1231 = vsel %vm1142, %v1228, %v1230
        %v1232 = vrot.slane %v794, 2
        %v1233 = vsel %vm1142, %v1230, %v1232
        %v1234 = vrot.slane %v795, 2
        %v1235 = vsel %vm1142, %v1232, %v1234
        %v1236 = vrot.slane %v796, 2
        %v1237 = vsel %vm1142, %v1234, %v1236
        %v1238 = vrot.slane %v797, 2
        %v1239 = vsel %vm1142, %v1236, %v1238
        %v1240 = vrot.slane %v798, 2
        %v1241 = vsel %vm1142, %v1238, %v1240
        %v1242 = vrot.slane %v799, 2
        %v1243 = vsel %vm1142, %v1240, %v1242
        %v1244 = vrot.slane %v800, 2
        %v1245 = vsel %vm1142, %v1242, %v1244
        %v1246 = vrot.slane %v801, 2
        %v1247 = vsel %vm1142, %v1244, %v1246
        %v1248 = vrot.slane %v802, 2
        %v1249 = vsel %vm1142, %v1246, %v1248
        %v1250 = vrot.slane %v803, 2
        %v1251 = vsel %vm1142, %v1248, %v1250
        %v1252 = vrot.slane %v804, 2
        %v1253 = vsel %vm1142, %v1250, %v1252
        %v1366 = vrot.slane %v805, 1
        %v1367 = vrot.slane %v806, 1
        %v1368 = vsel %vm974, %v1366, %v1367
        %v1369 = vrot.slane %v807, 1
        %v1370 = vsel %vm974, %v1367, %v1369
        %v1371 = vrot.slane %v808, 1
        %v1372 = vsel %vm974, %v1369, %v1371
        %v1373 = vrot.slane %v809, 1
        %v1374 = vsel %vm974, %v1371, %v1373
        %v1375 = vrot.slane %v810, 1
        %v1376 = vsel %vm974, %v1373, %v1375
        %v1377 = vrot.slane %v811, 1
        %v1378 = vsel %vm974, %v1375, %v1377
        %v1379 = vrot.slane %v812, 1
        %v1380 = vsel %vm974, %v1377, %v1379
        %v1381 = vrot.slane %v813, 1
        %v1382 = vsel %vm974, %v1379, %v1381
        %v1383 = vrot.slane %v814, 1
        %v1384 = vsel %vm974, %v1381, %v1383
        %v1385 = vrot.slane %v815, 1
        %v1386 = vsel %vm974, %v1383, %v1385
        %v1387 = vrot.slane %v816, 1
        %v1388 = vsel %vm974, %v1385, %v1387
        %v1389 = vrot.slane %v817, 1
        %v1390 = vsel %vm974, %v1387, %v1389
        %v1391 = vrot.slane %v818, 1
        %v1392 = vsel %vm974, %v1389, %v1391
        %v1393 = vrot.slane %v819, 1
        %v1394 = vsel %vm974, %v1391, %v1393
        %v1395 = vrot.slane %v820, 1
        %v1396 = vsel %vm974, %v1393, %v1395
        %v1397 = vrot.slane %v821, 1
        %v1398 = vsel %vm974, %v1395, %v1397
        %v1399 = vrot.slane %v822, 1
        %v1400 = vsel %vm974, %v1397, %v1399
        %v1401 = vrot.slane %v823, 1
        %v1402 = vsel %vm974, %v1399, %v1401
        %v1403 = vrot.slane %v824, 1
        %v1404 = vsel %vm974, %v1401, %v1403
        %v1405 = vrot.slane %v825, 1
        %v1406 = vsel %vm974, %v1403, %v1405
        %v1407 = vrot.slane %v826, 1
        %v1408 = vsel %vm974, %v1405, %v1407
        %v1409 = vrot.slane %v827, 1
        %v1410 = vsel %vm974, %v1407, %v1409
        %v1411 = vrot.slane %v828, 1
        %v1412 = vsel %vm974, %v1409, %v1411
        %v1413 = vrot.slane %v829, 1
        %v1414 = vsel %vm974, %v1411, %v1413
        %v1415 = vrot.slane %v830, 1
        %v1416 = vsel %vm974, %v1413, %v1415
        %v1417 = vrot.slane %v831, 1
        %v1418 = vsel %vm974, %v1415, %v1417
        %v1419 = vrot.slane %v832, 1
        %v1420 = vsel %vm974, %v1417, %v1419
        %v1421 = vrot.slane %v833, 1
        %v1422 = vsel %vm974, %v1419, %v1421
        %v1423 = vrot.slane %v834, 1
        %v1424 = vsel %vm974, %v1421, %v1423
        %v1425 = vrot.slane %v835, 1
        %v1426 = vsel %vm974, %v1423, %v1425
        %v1427 = vrot.slane %v836, 1
        %v1428 = vsel %vm974, %v1425, %v1427
        %v1429 = vrot.slane %v837, 1
        %v1430 = vsel %vm974, %v1427, %v1429
        %v1431 = vrot.slane %v838, 1
        %v1432 = vsel %vm974, %v1429, %v1431
        %v1433 = vrot.slane %v839, 1
        %v1434 = vsel %vm974, %v1431, %v1433
        %v1435 = vrot.slane %v840, 1
        %v1436 = vsel %vm974, %v1433, %v1435
        %v1437 = vrot.slane %v841, 1
        %v1438 = vsel %vm974, %v1435, %v1437
        %v1439 = vrot.slane %v842, 1
        %v1440 = vsel %vm974, %v1437, %v1439
        %v1441 = vrot.slane %v843, 1
        %v1442 = vsel %vm974, %v1439, %v1441
        %v1443 = vrot.slane %v844, 1
        %v1444 = vsel %vm974, %v1441, %v1443
        %v1445 = vrot.slane %v845, 1
        %v1446 = vsel %vm974, %v1443, %v1445
        %v1447 = vrot.slane %v846, 1
        %v1448 = vsel %vm974, %v1445, %v1447
        %v1449 = vrot.slane %v847, 1
        %v1450 = vsel %vm974, %v1447, %v1449
        %v1451 = vrot.slane %v848, 1
        %v1452 = vsel %vm974, %v1449, %v1451
        %v1453 = vrot.slane %v849, 1
        %v1454 = vsel %vm974, %v1451, %v1453
        %v1455 = vrot.slane %v850, 1
        %v1456 = vsel %vm974, %v1453, %v1455
        %v1457 = vrot.slane %v851, 1
        %v1458 = vsel %vm974, %v1455, %v1457
        %v1459 = vrot.slane %v852, 1
        %v1460 = vsel %vm974, %v1457, %v1459
        %v1461 = vrot.slane %v853, 1
        %v1462 = vsel %vm974, %v1459, %v1461
        %v1463 = vrot.slane %v854, 1
        %v1464 = vsel %vm974, %v1461, %v1463
        %v1465 = vrot.slane %v855, 1
        %v1466 = vsel %vm974, %v1463, %v1465
        %v1467 = vrot.slane %v856, 1
        %v1468 = vsel %vm974, %v1465, %v1467
        %v1469 = vrot.slane %v857, 1
        %v1470 = vsel %vm974, %v1467, %v1469
        %v1471 = vrot.slane %v858, 1
        %v1472 = vsel %vm974, %v1469, %v1471
        %v1473 = vrot.slane %v859, 1
        %v1474 = vsel %vm974, %v1471, %v1473
        %v1475 = vrot.slane %v860, 1
        %v1476 = vsel %vm974, %v1473, %v1475
        %v1533 = vrot.slane %v805, 2
        %v1534 = vrot.slane %v806, 2
        %v1535 = vsel %vm1142, %v1533, %v1534
        %v1536 = vrot.slane %v807, 2
        %v1537 = vsel %vm1142, %v1534, %v1536
        %v1538 = vrot.slane %v808, 2
        %v1539 = vsel %vm1142, %v1536, %v1538
        %v1540 = vrot.slane %v809, 2
        %v1541 = vsel %vm1142, %v1538, %v1540
        %v1542 = vrot.slane %v810, 2
        %v1543 = vsel %vm1142, %v1540, %v1542
        %v1544 = vrot.slane %v811, 2
        %v1545 = vsel %vm1142, %v1542, %v1544
        %v1546 = vrot.slane %v812, 2
        %v1547 = vsel %vm1142, %v1544, %v1546
        %v1548 = vrot.slane %v813, 2
        %v1549 = vsel %vm1142, %v1546, %v1548
        %v1550 = vrot.slane %v814, 2
        %v1551 = vsel %vm1142, %v1548, %v1550
        %v1552 = vrot.slane %v815, 2
        %v1553 = vsel %vm1142, %v1550, %v1552
        %v1554 = vrot.slane %v816, 2
        %v1555 = vsel %vm1142, %v1552, %v1554
        %v1556 = vrot.slane %v817, 2
        %v1557 = vsel %vm1142, %v1554, %v1556
        %v1558 = vrot.slane %v818, 2
        %v1559 = vsel %vm1142, %v1556, %v1558
        %v1560 = vrot.slane %v819, 2
        %v1561 = vsel %vm1142, %v1558, %v1560
        %v1562 = vrot.slane %v820, 2
        %v1563 = vsel %vm1142, %v1560, %v1562
        %v1564 = vrot.slane %v821, 2
        %v1565 = vsel %vm1142, %v1562, %v1564
        %v1566 = vrot.slane %v822, 2
        %v1567 = vsel %vm1142, %v1564, %v1566
        %v1568 = vrot.slane %v823, 2
        %v1569 = vsel %vm1142, %v1566, %v1568
        %v1570 = vrot.slane %v824, 2
        %v1571 = vsel %vm1142, %v1568, %v1570
        %v1572 = vrot.slane %v825, 2
        %v1573 = vsel %vm1142, %v1570, %v1572
        %v1574 = vrot.slane %v826, 2
        %v1575 = vsel %vm1142, %v1572, %v1574
        %v1576 = vrot.slane %v827, 2
        %v1577 = vsel %vm1142, %v1574, %v1576
        %v1578 = vrot.slane %v828, 2
        %v1579 = vsel %vm1142, %v1576, %v1578
        %v1580 = vrot.slane %v829, 2
        %v1581 = vsel %vm1142, %v1578, %v1580
        %v1582 = vrot.slane %v830, 2
        %v1583 = vsel %vm1142, %v1580, %v1582
        %v1584 = vrot.slane %v831, 2
        %v1585 = vsel %vm1142, %v1582, %v1584
        %v1586 = vrot.slane %v832, 2
        %v1587 = vsel %vm1142, %v1584, %v1586
        %v1588 = vrot.slane %v833, 2
        %v1589 = vsel %vm1142, %v1586, %v1588
        %v1590 = vrot.slane %v834, 2
        %v1591 = vsel %vm1142, %v1588, %v1590
        %v1592 = vrot.slane %v835, 2
        %v1593 = vsel %vm1142, %v1590, %v1592
        %v1594 = vrot.slane %v836, 2
        %v1595 = vsel %vm1142, %v1592, %v1594
        %v1596 = vrot.slane %v837, 2
        %v1597 = vsel %vm1142, %v1594, %v1596
        %v1598 = vrot.slane %v838, 2
        %v1599 = vsel %vm1142, %v1596, %v1598
        %v1600 = vrot.slane %v839, 2
        %v1601 = vsel %vm1142, %v1598, %v1600
        %v1602 = vrot.slane %v840, 2
        %v1603 = vsel %vm1142, %v1600, %v1602
        %v1604 = vrot.slane %v841, 2
        %v1605 = vsel %vm1142, %v1602, %v1604
        %v1606 = vrot.slane %v842, 2
        %v1607 = vsel %vm1142, %v1604, %v1606
        %v1608 = vrot.slane %v843, 2
        %v1609 = vsel %vm1142, %v1606, %v1608
        %v1610 = vrot.slane %v844, 2
        %v1611 = vsel %vm1142, %v1608, %v1610
        %v1612 = vrot.slane %v845, 2
        %v1613 = vsel %vm1142, %v1610, %v1612
        %v1614 = vrot.slane %v846, 2
        %v1615 = vsel %vm1142, %v1612, %v1614
        %v1616 = vrot.slane %v847, 2
        %v1617 = vsel %vm1142, %v1614, %v1616
        %v1618 = vrot.slane %v848, 2
        %v1619 = vsel %vm1142, %v1616, %v1618
        %v1620 = vrot.slane %v849, 2
        %v1621 = vsel %vm1142, %v1618, %v1620
        %v1622 = vrot.slane %v850, 2
        %v1623 = vsel %vm1142, %v1620, %v1622
        %v1624 = vrot.slane %v851, 2
        %v1625 = vsel %vm1142, %v1622, %v1624
        %v1626 = vrot.slane %v852, 2
        %v1627 = vsel %vm1142, %v1624, %v1626
        %v1628 = vrot.slane %v853, 2
        %v1629 = vsel %vm1142, %v1626, %v1628
        %v1630 = vrot.slane %v854, 2
        %v1631 = vsel %vm1142, %v1628, %v1630
        %v1632 = vrot.slane %v855, 2
        %v1633 = vsel %vm1142, %v1630, %v1632
        %v1634 = vrot.slane %v856, 2
        %v1635 = vsel %vm1142, %v1632, %v1634
        %v1636 = vrot.slane %v857, 2
        %v1637 = vsel %vm1142, %v1634, %v1636
        %v1638 = vrot.slane %v858, 2
        %v1639 = vsel %vm1142, %v1636, %v1638
        %v1640 = vrot.slane %v859, 2
        %v1641 = vsel %vm1142, %v1638, %v1640
        %v1642 = vrot.slane %v860, 2
        %v1643 = vsel %vm1142, %v1640, %v1642
        %v1756 = vrot.slane %v862, 1
        %v1757 = vrot.slane %v863, 1
        %v1758 = vsel %vm974, %v1756, %v1757
        %v1759 = vrot.slane %v864, 1
        %v1760 = vsel %vm974, %v1757, %v1759
        %v1761 = vrot.slane %v865, 1
        %v1762 = vsel %vm974, %v1759, %v1761
        %v1763 = vrot.slane %v866, 1
        %v1764 = vsel %vm974, %v1761, %v1763
        %v1765 = vrot.slane %v867, 1
        %v1766 = vsel %vm974, %v1763, %v1765
        %v1767 = vrot.slane %v868, 1
        %v1768 = vsel %vm974, %v1765, %v1767
        %v1769 = vrot.slane %v869, 1
        %v1770 = vsel %vm974, %v1767, %v1769
        %v1771 = vrot.slane %v870, 1
        %v1772 = vsel %vm974, %v1769, %v1771
        %v1773 = vrot.slane %v871, 1
        %v1774 = vsel %vm974, %v1771, %v1773
        %v1775 = vrot.slane %v872, 1
        %v1776 = vsel %vm974, %v1773, %v1775
        %v1777 = vrot.slane %v873, 1
        %v1778 = vsel %vm974, %v1775, %v1777
        %v1779 = vrot.slane %v874, 1
        %v1780 = vsel %vm974, %v1777, %v1779
        %v1781 = vrot.slane %v875, 1
        %v1782 = vsel %vm974, %v1779, %v1781
        %v1783 = vrot.slane %v876, 1
        %v1784 = vsel %vm974, %v1781, %v1783
        %v1785 = vrot.slane %v877, 1
        %v1786 = vsel %vm974, %v1783, %v1785
        %v1787 = vrot.slane %v878, 1
        %v1788 = vsel %vm974, %v1785, %v1787
        %v1789 = vrot.slane %v879, 1
        %v1790 = vsel %vm974, %v1787, %v1789
        %v1791 = vrot.slane %v880, 1
        %v1792 = vsel %vm974, %v1789, %v1791
        %v1793 = vrot.slane %v881, 1
        %v1794 = vsel %vm974, %v1791, %v1793
        %v1795 = vrot.slane %v882, 1
        %v1796 = vsel %vm974, %v1793, %v1795
        %v1797 = vrot.slane %v883, 1
        %v1798 = vsel %vm974, %v1795, %v1797
        %v1799 = vrot.slane %v884, 1
        %v1800 = vsel %vm974, %v1797, %v1799
        %v1801 = vrot.slane %v885, 1
        %v1802 = vsel %vm974, %v1799, %v1801
        %v1803 = vrot.slane %v886, 1
        %v1804 = vsel %vm974, %v1801, %v1803
        %v1805 = vrot.slane %v887, 1
        %v1806 = vsel %vm974, %v1803, %v1805
        %v1807 = vrot.slane %v888, 1
        %v1808 = vsel %vm974, %v1805, %v1807
        %v1809 = vrot.slane %v889, 1
        %v1810 = vsel %vm974, %v1807, %v1809
        %v1811 = vrot.slane %v890, 1
        %v1812 = vsel %vm974, %v1809, %v1811
        %v1813 = vrot.slane %v891, 1
        %v1814 = vsel %vm974, %v1811, %v1813
        %v1815 = vrot.slane %v892, 1
        %v1816 = vsel %vm974, %v1813, %v1815
        %v1817 = vrot.slane %v893, 1
        %v1818 = vsel %vm974, %v1815, %v1817
        %v1819 = vrot.slane %v894, 1
        %v1820 = vsel %vm974, %v1817, %v1819
        %v1821 = vrot.slane %v895, 1
        %v1822 = vsel %vm974, %v1819, %v1821
        %v1823 = vrot.slane %v896, 1
        %v1824 = vsel %vm974, %v1821, %v1823
        %v1825 = vrot.slane %v897, 1
        %v1826 = vsel %vm974, %v1823, %v1825
        %v1827 = vrot.slane %v898, 1
        %v1828 = vsel %vm974, %v1825, %v1827
        %v1829 = vrot.slane %v899, 1
        %v1830 = vsel %vm974, %v1827, %v1829
        %v1831 = vrot.slane %v900, 1
        %v1832 = vsel %vm974, %v1829, %v1831
        %v1833 = vrot.slane %v901, 1
        %v1834 = vsel %vm974, %v1831, %v1833
        %v1835 = vrot.slane %v902, 1
        %v1836 = vsel %vm974, %v1833, %v1835
        %v1837 = vrot.slane %v903, 1
        %v1838 = vsel %vm974, %v1835, %v1837
        %v1839 = vrot.slane %v904, 1
        %v1840 = vsel %vm974, %v1837, %v1839
        %v1841 = vrot.slane %v905, 1
        %v1842 = vsel %vm974, %v1839, %v1841
        %v1843 = vrot.slane %v906, 1
        %v1844 = vsel %vm974, %v1841, %v1843
        %v1845 = vrot.slane %v907, 1
        %v1846 = vsel %vm974, %v1843, %v1845
        %v1847 = vrot.slane %v908, 1
        %v1848 = vsel %vm974, %v1845, %v1847
        %v1849 = vrot.slane %v909, 1
        %v1850 = vsel %vm974, %v1847, %v1849
        %v1851 = vrot.slane %v910, 1
        %v1852 = vsel %vm974, %v1849, %v1851
        %v1853 = vrot.slane %v911, 1
        %v1854 = vsel %vm974, %v1851, %v1853
        %v1855 = vrot.slane %v912, 1
        %v1856 = vsel %vm974, %v1853, %v1855
        %v1857 = vrot.slane %v913, 1
        %v1858 = vsel %vm974, %v1855, %v1857
        %v1859 = vrot.slane %v914, 1
        %v1860 = vsel %vm974, %v1857, %v1859
        %v1861 = vrot.slane %v915, 1
        %v1862 = vsel %vm974, %v1859, %v1861
        %v1863 = vrot.slane %v916, 1
        %v1864 = vsel %vm974, %v1861, %v1863
        %v1865 = vrot.slane %v917, 1
        %v1866 = vsel %vm974, %v1863, %v1865
        %v1923 = vrot.slane %v862, 2
        %v1924 = vrot.slane %v863, 2
        %v1925 = vsel %vm1142, %v1923, %v1924
        %v1926 = vrot.slane %v864, 2
        %v1927 = vsel %vm1142, %v1924, %v1926
        %v1928 = vrot.slane %v865, 2
        %v1929 = vsel %vm1142, %v1926, %v1928
        %v1930 = vrot.slane %v866, 2
        %v1931 = vsel %vm1142, %v1928, %v1930
        %v1932 = vrot.slane %v867, 2
        %v1933 = vsel %vm1142, %v1930, %v1932
        %v1934 = vrot.slane %v868, 2
        %v1935 = vsel %vm1142, %v1932, %v1934
        %v1936 = vrot.slane %v869, 2
        %v1937 = vsel %vm1142, %v1934, %v1936
        %v1938 = vrot.slane %v870, 2
        %v1939 = vsel %vm1142, %v1936, %v1938
        %v1940 = vrot.slane %v871, 2
        %v1941 = vsel %vm1142, %v1938, %v1940
        %v1942 = vrot.slane %v872, 2
        %v1943 = vsel %vm1142, %v1940, %v1942
        %v1944 = vrot.slane %v873, 2
        %v1945 = vsel %vm1142, %v1942, %v1944
        %v1946 = vrot.slane %v874, 2
        %v1947 = vsel %vm1142, %v1944, %v1946
        %v1948 = vrot.slane %v875, 2
        %v1949 = vsel %vm1142, %v1946, %v1948
        %v1950 = vrot.slane %v876, 2
        %v1951 = vsel %vm1142, %v1948, %v1950
        %v1952 = vrot.slane %v877, 2
        %v1953 = vsel %vm1142, %v1950, %v1952
        %v1954 = vrot.slane %v878, 2
        %v1955 = vsel %vm1142, %v1952, %v1954
        %v1956 = vrot.slane %v879, 2
        %v1957 = vsel %vm1142, %v1954, %v1956
        %v1958 = vrot.slane %v880, 2
        %v1959 = vsel %vm1142, %v1956, %v1958
        %v1960 = vrot.slane %v881, 2
        %v1961 = vsel %vm1142, %v1958, %v1960
        %v1962 = vrot.slane %v882, 2
        %v1963 = vsel %vm1142, %v1960, %v1962
        %v1964 = vrot.slane %v883, 2
        %v1965 = vsel %vm1142, %v1962, %v1964
        %v1966 = vrot.slane %v884, 2
        %v1967 = vsel %vm1142, %v1964, %v1966
        %v1968 = vrot.slane %v885, 2
        %v1969 = vsel %vm1142, %v1966, %v1968
        %v1970 = vrot.slane %v886, 2
        %v1971 = vsel %vm1142, %v1968, %v1970
        %v1972 = vrot.slane %v887, 2
        %v1973 = vsel %vm1142, %v1970, %v1972
        %v1974 = vrot.slane %v888, 2
        %v1975 = vsel %vm1142, %v1972, %v1974
        %v1976 = vrot.slane %v889, 2
        %v1977 = vsel %vm1142, %v1974, %v1976
        %v1978 = vrot.slane %v890, 2
        %v1979 = vsel %vm1142, %v1976, %v1978
        %v1980 = vrot.slane %v891, 2
        %v1981 = vsel %vm1142, %v1978, %v1980
        %v1982 = vrot.slane %v892, 2
        %v1983 = vsel %vm1142, %v1980, %v1982
        %v1984 = vrot.slane %v893, 2
        %v1985 = vsel %vm1142, %v1982, %v1984
        %v1986 = vrot.slane %v894, 2
        %v1987 = vsel %vm1142, %v1984, %v1986
        %v1988 = vrot.slane %v895, 2
        %v1989 = vsel %vm1142, %v1986, %v1988
        %v1990 = vrot.slane %v896, 2
        %v1991 = vsel %vm1142, %v1988, %v1990
        %v1992 = vrot.slane %v897, 2
        %v1993 = vsel %vm1142, %v1990, %v1992
        %v1994 = vrot.slane %v898, 2
        %v1995 = vsel %vm1142, %v1992, %v1994
        %v1996 = vrot.slane %v899, 2
        %v1997 = vsel %vm1142, %v1994, %v1996
        %v1998 = vrot.slane %v900, 2
        %v1999 = vsel %vm1142, %v1996, %v1998
        %v2000 = vrot.slane %v901, 2
        %v2001 = vsel %vm1142, %v1998, %v2000
        %v2002 = vrot.slane %v902, 2
        %v2003 = vsel %vm1142, %v2000, %v2002
        %v2004 = vrot.slane %v903, 2
        %v2005 = vsel %vm1142, %v2002, %v2004
        %v2006 = vrot.slane %v904, 2
        %v2007 = vsel %vm1142, %v2004, %v2006
        %v2008 = vrot.slane %v905, 2
        %v2009 = vsel %vm1142, %v2006, %v2008
        %v2010 = vrot.slane %v906, 2
        %v2011 = vsel %vm1142, %v2008, %v2010
        %v2012 = vrot.slane %v907, 2
        %v2013 = vsel %vm1142, %v2010, %v2012
        %v2014 = vrot.slane %v908, 2
        %v2015 = vsel %vm1142, %v2012, %v2014
        %v2016 = vrot.slane %v909, 2
        %v2017 = vsel %vm1142, %v2014, %v2016
        %v2018 = vrot.slane %v910, 2
        %v2019 = vsel %vm1142, %v2016, %v2018
        %v2020 = vrot.slane %v911, 2
        %v2021 = vsel %vm1142, %v2018, %v2020
        %v2022 = vrot.slane %v912, 2
        %v2023 = vsel %vm1142, %v2020, %v2022
        %v2024 = vrot.slane %v913, 2
        %v2025 = vsel %vm1142, %v2022, %v2024
        %v2026 = vrot.slane %v914, 2
        %v2027 = vsel %vm1142, %v2024, %v2026
        %v2028 = vrot.slane %v915, 2
        %v2029 = vsel %vm1142, %v2026, %v2028
        %v2030 = vrot.slane %v916, 2
        %v2031 = vsel %vm1142, %v2028, %v2030
        %v2032 = vrot.slane %v917, 2
        %v2033 = vsel %vm1142, %v2030, %v2032
        %v2090 = vld [vmem:[%s479] sm:$0xff]
        %v2091 = vld [vmem:[%s479 + $0x8] sm:$0xff]
        %v2092 = vld [vmem:[%s479 + $0x10] sm:$0xff]
        %v2093 = vld [vmem:[%s479 + $0x18] sm:$0xff]
        %v2094 = vld [vmem:[%s479 + $0x20] sm:$0xff]
        %v2095 = vld [vmem:[%s479 + $0x28] sm:$0xff]
        %v2096 = vld [vmem:[%s479 + $0x30] sm:$0xff]
        %v2097 = vld [vmem:[%s479 + $0x38] sm:$0xff]
        %v2098 = vld [vmem:[%s479 + $0x40] sm:$0xff]
        %v2099 = vld [vmem:[%s479 + $0x48] sm:$0xff]
        %v2100 = vld [vmem:[%s479 + $0x50] sm:$0xff]
        %v2101 = vld [vmem:[%s479 + $0x58] sm:$0xff]
        %v2102 = vld [vmem:[%s479 + $0x60] sm:$0xff]
        %v2103 = vld [vmem:[%s479 + $0x68] sm:$0xff]
        %v2104 = vld [vmem:[%s479 + $0x70] sm:$0xff]
        %v2105 = vld [vmem:[%s479 + $0x78] sm:$0xff]
        %v2106 = vld [vmem:[%s479 + $0x80] sm:$0xff]
        %v2107 = vld [vmem:[%s479 + $0x88] sm:$0xff]
        %v2108 = vld [vmem:[%s479 + $0x90] sm:$0xff]
        %v2109 = vld [vmem:[%s479 + $0x98] sm:$0xff]
        %v2110 = vld [vmem:[%s479 + $0xa0] sm:$0xff]
        %v2111 = vld [vmem:[%s479 + $0xa8] sm:$0xff]
        %v2112 = vld [vmem:[%s479 + $0xb0] sm:$0xff]
        %v2113 = vld [vmem:[%s479 + $0xb8] sm:$0xff]
        %v2114 = vld [vmem:[%s479 + $0xc0] sm:$0xff]
        %v2115 = vld [vmem:[%s479 + $0xc8] sm:$0xff]
        %v2116 = vld [vmem:[%s479 + $0xd0] sm:$0xff]
        %v2117 = vld [vmem:[%s479 + $0xd8] sm:$0xff]
        %v2118 = vld [vmem:[%s479 + $0xe0] sm:$0xff]
        %v2119 = vld [vmem:[%s479 + $0xe8] sm:$0xff]
        %v2120 = vld [vmem:[%s479 + $0xf0] sm:$0xff]
        %v2121 = vld [vmem:[%s479 + $0xf8] sm:$0xff]
        %v2122 = vld [vmem:[%s479 + $0x100] sm:$0xff]
        %v2123 = vld [vmem:[%s479 + $0x108] sm:$0xff]
        %v2124 = vld [vmem:[%s479 + $0x110] sm:$0xff]
        %v2125 = vld [vmem:[%s479 + $0x118] sm:$0xff]
        %v2126 = vld [vmem:[%s479 + $0x120] sm:$0xff]
        %v2127 = vld [vmem:[%s479 + $0x128] sm:$0xff]
        %v2128 = vld [vmem:[%s479 + $0x130] sm:$0xff]
        %v2129 = vld [vmem:[%s479 + $0x138] sm:$0xff]
        %v2130 = vld [vmem:[%s479 + $0x140] sm:$0xff]
        %v2131 = vld [vmem:[%s479 + $0x148] sm:$0xff]
        %v2132 = vld [vmem:[%s479 + $0x150] sm:$0xff]
        %v2133 = vld [vmem:[%s479 + $0x158] sm:$0xff]
        %v2134 = vld [vmem:[%s479 + $0x160] sm:$0xff]
        %v2135 = vld [vmem:[%s479 + $0x168] sm:$0xff]
        %v2136 = vld [vmem:[%s479 + $0x170] sm:$0xff]
        %v2137 = vld [vmem:[%s479 + $0x178] sm:$0xff]
        %v2138 = vld [vmem:[%s479 + $0x180] sm:$0xff]
        %v2139 = vld [vmem:[%s479 + $0x188] sm:$0xff]
        %v2140 = vld [vmem:[%s479 + $0x190] sm:$0xff]
        %v2141 = vld [vmem:[%s479 + $0x198] sm:$0xff]
        %v2142 = vld [vmem:[%s479 + $0x1a0] sm:$0xff]
        %v2143 = vld [vmem:[%s479 + $0x1a8] sm:$0xff]
        %v2144 = vld [vmem:[%s479 + $0x1b0] sm:$0xff]
        %v2145 = vld [vmem:[%s479 + $0x1b8] sm:$0xff]
        %v2146 = vld [vmem:[%s479 + $0x1c0] sm:$0xff]
        %v2147 = vld [vmem:[%s479 + $0x1c8] sm:$0xff]
        %v2148 = vld [vmem:[%s479 + $0x1d0] sm:$0xff]
        %v2149 = vld [vmem:[%s479 + $0x1d8] sm:$0xff]
        %v2150 = vld [vmem:[%s479 + $0x1e0] sm:$0xff]
        %v2151 = vld [vmem:[%s479 + $0x1e8] sm:$0xff]
        %v2152 = vld [vmem:[%s479 + $0x1f0] sm:$0xff]
        %v2153 = vld [vmem:[%s479 + $0x1f8] sm:$0xff]
        %v2154 = vld [vmem:[%s479 + $0x200] sm:$0xff]
        %v2155 = vld [vmem:[%s479 + $0x208] sm:$0xff]
        %v2156 = vld [vmem:[%s479 + $0x210] sm:$0xff]
        %v2157 = vld [vmem:[%s479 + $0x218] sm:$0xff]
        %v2158 = vld [vmem:[%s479 + $0x220] sm:$0xff]
        %v2159 = vld [vmem:[%s479 + $0x228] sm:$0xff]
        %v2160 = vld [vmem:[%s479 + $0x230] sm:$0xff]
        %v2161 = vld [vmem:[%s479 + $0x238] sm:$0xff]
        %v2162 = vld [vmem:[%s479 + $0x240] sm:$0xff]
        %v2163 = vld [vmem:[%s479 + $0x248] sm:$0xff]
        %v2164 = vld [vmem:[%s479 + $0x250] sm:$0xff]
        %v2165 = vld [vmem:[%s479 + $0x258] sm:$0xff]
        %v2166 = vld [vmem:[%s479 + $0x260] sm:$0xff]
        %v2167 = vld [vmem:[%s479 + $0x268] sm:$0xff]
        %v2168 = vld [vmem:[%s479 + $0x270] sm:$0xff]
        %v2169 = vld [vmem:[%s479 + $0x278] sm:$0xff]
        %v2170 = vld [vmem:[%s479 + $0x280] sm:$0xff]
        %v2171 = vld [vmem:[%s479 + $0x288] sm:$0xff]
        %v2172 = vld [vmem:[%s479 + $0x290] sm:$0xff]
        %v2173 = vld [vmem:[%s479 + $0x298] sm:$0xff]
        %v2174 = vld [vmem:[%s479 + $0x2a0] sm:$0xff]
        %v2175 = vld [vmem:[%s479 + $0x2a8] sm:$0xff]
        %v2176 = vld [vmem:[%s479 + $0x2b0] sm:$0xff]
        %v2177 = vld [vmem:[%s479 + $0x2b8] sm:$0xff]
        %v2178 = vld [vmem:[%s479 + $0x2c0] sm:$0xff]
        %v2179 = vld [vmem:[%s479 + $0x2c8] sm:$0xff]
        %v2180 = vld [vmem:[%s479 + $0x2d0] sm:$0xff]
        %v2181 = vld [vmem:[%s479 + $0x2d8] sm:$0xff]
        %v2182 = vld [vmem:[%s479 + $0x2e0] sm:$0xff]
        %v2183 = vld [vmem:[%s479 + $0x2e8] sm:$0xff]
        %v2184 = vld [vmem:[%s479 + $0x2f0] sm:$0xff]
        %v2185 = vld [vmem:[%s479 + $0x2f8] sm:$0xff]
        %v2186 = vld [vmem:[%s479 + $0x300] sm:$0xff]
        %v2187 = vld [vmem:[%s479 + $0x308] sm:$0xff]
        %v2188 = vld [vmem:[%s479 + $0x310] sm:$0xff]
        %v2189 = vld [vmem:[%s479 + $0x318] sm:$0xff]
        %v2190 = vld [vmem:[%s479 + $0x320] sm:$0xff]
        %v2191 = vld [vmem:[%s479 + $0x328] sm:$0xff]
        %v2192 = vld [vmem:[%s479 + $0x330] sm:$0xff]
        %v2193 = vld [vmem:[%s479 + $0x338] sm:$0xff]
        %v2194 = vld [vmem:[%s479 + $0x340] sm:$0xff]
        %v2195 = vld [vmem:[%s479 + $0x348] sm:$0xff]
        %v2196 = vld [vmem:[%s479 + $0x350] sm:$0xff]
        %v2197 = vld [vmem:[%s479 + $0x358] sm:$0xff]
        %v2198 = vld [vmem:[%s479 + $0x360] sm:$0xff]
        %v2199 = vld [vmem:[%s479 + $0x368] sm:$0xff]
        %v2200 = vld [vmem:[%s479 + $0x370] sm:$0xff]
        %v2201 = vld [vmem:[%s479 + $0x378] sm:$0xff]
        %v2202 = vld [vmem:[%s479 + $0x380] sm:$0xff]
        %v2203 = vld [vmem:[%s479 + $0x388] sm:$0xff]
        %v2204 = vld [vmem:[%s479 + $0x390] sm:$0xff]
        %v2205 = vld [vmem:[%s479 + $0x398] sm:$0xff]
        %v2206 = vld [vmem:[%s479 + $0x3a0] sm:$0xff]
        %v2207 = vld [vmem:[%s479 + $0x3a8] sm:$0xff]
        %v2208 = vld [vmem:[%s479 + $0x3b0] sm:$0xff]
        %v2209 = vld [vmem:[%s479 + $0x3b8] sm:$0xff]
        %v2210 = vld [vmem:[%s479 + $0x3c0] sm:$0xff]
        %v2211 = vld [vmem:[%s479 + $0x3c8] sm:$0xff]
        %v2212 = vld [vmem:[%s479 + $0x3d0] sm:$0xff]
        %v2213 = vld [vmem:[%s479 + $0x3d8] sm:$0xff]
        %v2214 = vld [vmem:[%s479 + $0x3e0] sm:$0xff]
        %v2215 = vld [vmem:[%s479 + $0x3e8] sm:$0xff]
        %v2216 = vld [vmem:[%s479 + $0x3f0] sm:$0xff]
        %v2217 = vld [vmem:[%s479 + $0x3f8] sm:$0xff]
        %v2218 = vld [vmem:[%s479 + $0x400] sm:$0xff]
        %v2219 = vld [vmem:[%s479 + $0x408] sm:$0xff]
        %v2220 = vld [vmem:[%s479 + $0x410] sm:$0xff]
        %v2221 = vld [vmem:[%s479 + $0x418] sm:$0xff]
        %v2222 = vld [vmem:[%s479 + $0x420] sm:$0xff]
        %v2223 = vld [vmem:[%s479 + $0x428] sm:$0xff]
        %v2224 = vld [vmem:[%s479 + $0x430] sm:$0xff]
        %v2225 = vld [vmem:[%s479 + $0x438] sm:$0xff]
        %v2226 = vld [vmem:[%s479 + $0x440] sm:$0xff]
        %v2227 = vld [vmem:[%s479 + $0x448] sm:$0xff]
        %v2228 = vld [vmem:[%s479 + $0x450] sm:$0xff]
        %v2229 = vld [vmem:[%s479 + $0x458] sm:$0xff]
        %v2230 = vld [vmem:[%s479 + $0x460] sm:$0xff]
        %v2231 = vld [vmem:[%s479 + $0x468] sm:$0xff]
        %v2232 = vld [vmem:[%s479 + $0x470] sm:$0xff]
        %v2233 = vld [vmem:[%s479 + $0x478] sm:$0xff]
        %2234 = vmatprep.subr.mxu0 0.0
        %2235 = vmatpush1.msra.mxu0 %v2105
        %2236 = vmatprep.subr.mxu0 0.0
        %2237 = vmatpush1.msra.mxu0 %v2104
        %2238 = vmatprep.subr.mxu0 0.0
        %2239 = vmatpush1.msra.mxu0 %v2103
        %2240 = vmatprep.subr.mxu0 0.0
        %2241 = vmatpush1.msra.mxu0 %v2102
        %2242 = vmatprep.subr.mxu0 0.0
        %2243 = vmatpush1.msra.mxu0 %v2101
        %2244 = vmatprep.subr.mxu0 0.0
        %2245 = vmatpush1.msra.mxu0 %v2100
        %2246 = vmatprep.subr.mxu0 0.0
        %2247 = vmatpush1.msra.mxu0 %v2099
        %2248 = vmatprep.subr.mxu0 0.0
        %2249 = vmatpush1.msra.mxu0 %v2098
        %2250 = vmatprep.subr.mxu0 0.0
        %2251 = vmatpush1.msra.mxu0 %v2097
        %2252 = vmatprep.subr.mxu0 0.0
        %2253 = vmatpush1.msra.mxu0 %v2096
        %2254 = vmatprep.subr.mxu0 0.0
        %2255 = vmatpush1.msra.mxu0 %v2095
        %2256 = vmatprep.subr.mxu0 0.0
        %2257 = vmatpush1.msra.mxu0 %v2094
        %2258 = vmatprep.subr.mxu0 0.0
        %2259 = vmatpush1.msra.mxu0 %v2093
        %2260 = vmatprep.subr.mxu0 0.0
        %2261 = vmatpush1.msra.mxu0 %v2092
        %2262 = vmatprep.subr.mxu0 0.0
        %2263 = vmatpush1.msra.mxu0 %v2091
        %2264 = vmatprep.subr.mxu0 0.0
        %2265 = vmatpush1.msra.mxu0 %v2090
        %2266 = vmatprep.subr.mxu0 0.0
        %2267 = vmatpush2.msra.mxu0 %v2121
        %2268 = vmatprep.subr.mxu0 0.0
        %2269 = vmatpush2.msra.mxu0 %v2120
        %2270 = vmatprep.subr.mxu0 0.0
        %2271 = vmatpush2.msra.mxu0 %v2119
        %2272 = vmatprep.subr.mxu0 0.0
        %2273 = vmatpush2.msra.mxu0 %v2118
        %2274 = vmatprep.subr.mxu0 0.0
        %2275 = vmatpush2.msra.mxu0 %v2117
        %2276 = vmatprep.subr.mxu0 0.0
        %2277 = vmatpush2.msra.mxu0 %v2116
        %2278 = vmatprep.subr.mxu0 0.0
        %2279 = vmatpush2.msra.mxu0 %v2115
        %2280 = vmatprep.subr.mxu0 0.0
        %2281 = vmatpush2.msra.mxu0 %v2114
        %2282 = vmatprep.subr.mxu0 0.0
        %2283 = vmatpush2.msra.mxu0 %v2113
        %2284 = vmatprep.subr.mxu0 0.0
        %2285 = vmatpush2.msra.mxu0 %v2112
        %2286 = vmatprep.subr.mxu0 0.0
        %2287 = vmatpush2.msra.mxu0 %v2111
        %2288 = vmatprep.subr.mxu0 0.0
        %2289 = vmatpush2.msra.mxu0 %v2110
        %2290 = vmatprep.subr.mxu0 0.0
        %2291 = vmatpush2.msra.mxu0 %v2109
        %2292 = vmatprep.subr.mxu0 0.0
        %2293 = vmatpush2.msra.mxu0 %v2108
        %2294 = vmatprep.subr.mxu0 0.0
        %2295 = vmatpush2.msra.mxu0 %v2107
        %2296 = vmatprep.subr.mxu0 0.0
        %2297 = vmatpush2.msra.mxu0 %v2106
        %2298 = vmatprep.mubr.f32.mxu0 %v977
        %2299 = vmatmul.mubr.f32.gmra.mxu0 %v749
        %v2300 = vpop.f32.mrf.mxu0
        %v2301 = vadd.f32 0.0, %v2300
        %v2302 = vpop.f32.mrf.mxu0
        %2303 = vmatprep.mubr.f32.mxu0 %v979
        %2304 = vmatmul.mubr.f32.gmra.mxu0 %v750
        %v2305 = vpop.f32.mrf.mxu0
        %v2306 = vadd.f32 0.0, %v2305
        %v2307 = vpop.f32.mrf.mxu0
        %2308 = vmatprep.mubr.f32.mxu0 %v981
        %2309 = vmatmul.mubr.f32.gmra.mxu0 %v751
        %v2310 = vpop.f32.mrf.mxu0
        %v2311 = vadd.f32 0.0, %v2310
        %v2312 = vpop.f32.mrf.mxu0
        %2313 = vmatprep.mubr.f32.mxu0 %v983
        %2314 = vmatmul.mubr.f32.gmra.mxu0 %v752
        %v2315 = vpop.f32.mrf.mxu0
        %v2316 = vadd.f32 0.0, %v2315
        %v2317 = vpop.f32.mrf.mxu0
        %2318 = vmatprep.mubr.f32.mxu0 %v985
        %2319 = vmatmul.mubr.f32.gmra.mxu0 %v753
        %v2320 = vpop.f32.mrf.mxu0
        %v2321 = vadd.f32 0.0, %v2320
        %v2322 = vpop.f32.mrf.mxu0
        %2323 = vmatprep.mubr.f32.mxu0 %v987
        %2324 = vmatmul.mubr.f32.gmra.mxu0 %v754
        %v2325 = vpop.f32.mrf.mxu0
        %v2326 = vadd.f32 0.0, %v2325
        %v2327 = vpop.f32.mrf.mxu0
        %2328 = vmatprep.mubr.f32.mxu0 %v989
        %2329 = vmatmul.mubr.f32.gmra.mxu0 %v755
        %v2330 = vpop.f32.mrf.mxu0
        %v2331 = vadd.f32 0.0, %v2330
        %v2332 = vpop.f32.mrf.mxu0
        %2333 = vmatprep.mubr.f32.mxu0 %v991
        %2334 = vmatmul.mubr.f32.gmra.mxu0 %v756
        %v2335 = vpop.f32.mrf.mxu0
        %v2336 = vadd.f32 0.0, %v2335
        %v2337 = vpop.f32.mrf.mxu0
        %2338 = vmatprep.mubr.f32.mxu0 %v993
        %2339 = vmatmul.mubr.f32.gmra.mxu0 %v757
        %v2340 = vpop.f32.mrf.mxu0
        %v2341 = vadd.f32 0.0, %v2340
        %v2342 = vpop.f32.mrf.mxu0
        %2343 = vmatprep.mubr.f32.mxu0 %v995
        %2344 = vmatmul.mubr.f32.gmra.mxu0 %v758
        %v2345 = vpop.f32.mrf.mxu0
        %v2346 = vadd.f32 0.0, %v2345
        %v2347 = vpop.f32.mrf.mxu0
        %2348 = vmatprep.mubr.f32.mxu0 %v997
        %2349 = vmatmul.mubr.f32.gmra.mxu0 %v759
        %v2350 = vpop.f32.mrf.mxu0
        %v2351 = vadd.f32 0.0, %v2350
        %v2352 = vpop.f32.mrf.mxu0
        %2353 = vmatprep.mubr.f32.mxu0 %v999
        %2354 = vmatmul.mubr.f32.gmra.mxu0 %v760
        %v2355 = vpop.f32.mrf.mxu0
        %v2356 = vadd.f32 0.0, %v2355
        %v2357 = vpop.f32.mrf.mxu0
        %2358 = vmatprep.mubr.f32.mxu0 %v1001
        %2359 = vmatmul.mubr.f32.gmra.mxu0 %v761
        %v2360 = vpop.f32.mrf.mxu0
        %v2361 = vadd.f32 0.0, %v2360
        %v2362 = vpop.f32.mrf.mxu0
        %2363 = vmatprep.mubr.f32.mxu0 %v1003
        %2364 = vmatmul.mubr.f32.gmra.mxu0 %v762
        %v2365 = vpop.f32.mrf.mxu0
        %v2366 = vadd.f32 0.0, %v2365
        %v2367 = vpop.f32.mrf.mxu0
        %2368 = vmatprep.mubr.f32.mxu0 %v1005
        %2369 = vmatmul.mubr.f32.gmra.mxu0 %v763
        %v2370 = vpop.f32.mrf.mxu0
        %v2371 = vadd.f32 0.0, %v2370
        %v2372 = vpop.f32.mrf.mxu0
        %2373 = vmatprep.mubr.f32.mxu0 %v1007
        %2374 = vmatmul.mubr.f32.gmra.mxu0 %v764
        %v2375 = vpop.f32.mrf.mxu0
        %v2376 = vadd.f32 0.0, %v2375
        %v2377 = vpop.f32.mrf.mxu0
        %2378 = vmatprep.mubr.f32.mxu0 %v1009
        %2379 = vmatmul.mubr.f32.gmra.mxu0 %v765
        %v2380 = vpop.f32.mrf.mxu0
        %v2381 = vadd.f32 0.0, %v2380
        %v2382 = vpop.f32.mrf.mxu0
        %2383 = vmatprep.mubr.f32.mxu0 %v1011
        %2384 = vmatmul.mubr.f32.gmra.mxu0 %v766
        %v2385 = vpop.f32.mrf.mxu0
        %v2386 = vadd.f32 0.0, %v2385
        %v2387 = vpop.f32.mrf.mxu0
        %2388 = vmatprep.mubr.f32.mxu0 %v1013
        %2389 = vmatmul.mubr.f32.gmra.mxu0 %v767
        %v2390 = vpop.f32.mrf.mxu0
        %v2391 = vadd.f32 0.0, %v2390
        %v2392 = vpop.f32.mrf.mxu0
        %2393 = vmatprep.mubr.f32.mxu0 %v1015
        %2394 = vmatmul.mubr.f32.gmra.mxu0 %v768
        %v2395 = vpop.f32.mrf.mxu0
        %v2396 = vadd.f32 0.0, %v2395
        %v2397 = vpop.f32.mrf.mxu0
        %2398 = vmatprep.mubr.f32.mxu0 %v1017
        %2399 = vmatmul.mubr.f32.gmra.mxu0 %v769
        %v2400 = vpop.f32.mrf.mxu0
        %v2401 = vadd.f32 0.0, %v2400
        %v2402 = vpop.f32.mrf.mxu0
        %2403 = vmatprep.mubr.f32.mxu0 %v1019
        %2404 = vmatmul.mubr.f32.gmra.mxu0 %v770
        %v2405 = vpop.f32.mrf.mxu0
        %v2406 = vadd.f32 0.0, %v2405
        %v2407 = vpop.f32.mrf.mxu0
        %2408 = vmatprep.mubr.f32.mxu0 %v1021
        %2409 = vmatmul.mubr.f32.gmra.mxu0 %v771
        %v2410 = vpop.f32.mrf.mxu0
        %v2411 = vadd.f32 0.0, %v2410
        %v2412 = vpop.f32.mrf.mxu0
        %2413 = vmatprep.mubr.f32.mxu0 %v1023
        %2414 = vmatmul.mubr.f32.gmra.mxu0 %v772
        %v2415 = vpop.f32.mrf.mxu0
        %v2416 = vadd.f32 0.0, %v2415
        %v2417 = vpop.f32.mrf.mxu0
        %2418 = vmatprep.mubr.f32.mxu0 %v1025
        %2419 = vmatmul.mubr.f32.gmra.mxu0 %v773
        %v2420 = vpop.f32.mrf.mxu0
        %v2421 = vadd.f32 0.0, %v2420
        %v2422 = vpop.f32.mrf.mxu0
        %2423 = vmatprep.mubr.f32.mxu0 %v1027
        %2424 = vmatmul.mubr.f32.gmra.mxu0 %v774
        %v2425 = vpop.f32.mrf.mxu0
        %v2426 = vadd.f32 0.0, %v2425
        %v2427 = vpop.f32.mrf.mxu0
        %2428 = vmatprep.mubr.f32.mxu0 %v1029
        %2429 = vmatmul.mubr.f32.gmra.mxu0 %v775
        %v2430 = vpop.f32.mrf.mxu0
        %v2431 = vadd.f32 0.0, %v2430
        %v2432 = vpop.f32.mrf.mxu0
        %2433 = vmatprep.mubr.f32.mxu0 %v1031
        %2434 = vmatmul.mubr.f32.gmra.mxu0 %v776
        %v2435 = vpop.f32.mrf.mxu0
        %v2436 = vadd.f32 0.0, %v2435
        %v2437 = vpop.f32.mrf.mxu0
        %2438 = vmatprep.mubr.f32.mxu0 %v1033
        %2439 = vmatmul.mubr.f32.gmra.mxu0 %v777
        %v2440 = vpop.f32.mrf.mxu0
        %v2441 = vadd.f32 0.0, %v2440
        %v2442 = vpop.f32.mrf.mxu0
        %2443 = vmatprep.mubr.f32.mxu0 %v1035
        %2444 = vmatmul.mubr.f32.gmra.mxu0 %v778
        %v2445 = vpop.f32.mrf.mxu0
        %v2446 = vadd.f32 0.0, %v2445
        %v2447 = vpop.f32.mrf.mxu0
        %2448 = vmatprep.mubr.f32.mxu0 %v1037
        %2449 = vmatmul.mubr.f32.gmra.mxu0 %v779
        %v2450 = vpop.f32.mrf.mxu0
        %v2451 = vadd.f32 0.0, %v2450
        %v2452 = vpop.f32.mrf.mxu0
        %2453 = vmatprep.mubr.f32.mxu0 %v1039
        %2454 = vmatmul.mubr.f32.gmra.mxu0 %v780
        %v2455 = vpop.f32.mrf.mxu0
        %v2456 = vadd.f32 0.0, %v2455
        %v2457 = vpop.f32.mrf.mxu0
        %2458 = vmatprep.mubr.f32.mxu0 %v1041
        %2459 = vmatmul.mubr.f32.gmra.mxu0 %v781
        %v2460 = vpop.f32.mrf.mxu0
        %v2461 = vadd.f32 0.0, %v2460
        %v2462 = vpop.f32.mrf.mxu0
        %2463 = vmatprep.mubr.f32.mxu0 %v1043
        %2464 = vmatmul.mubr.f32.gmra.mxu0 %v782
        %v2465 = vpop.f32.mrf.mxu0
        %v2466 = vadd.f32 0.0, %v2465
        %v2467 = vpop.f32.mrf.mxu0
        %2468 = vmatprep.mubr.f32.mxu0 %v1045
        %2469 = vmatmul.mubr.f32.gmra.mxu0 %v783
        %v2470 = vpop.f32.mrf.mxu0
        %v2471 = vadd.f32 0.0, %v2470
        %v2472 = vpop.f32.mrf.mxu0
        %2473 = vmatprep.mubr.f32.mxu0 %v1047
        %2474 = vmatmul.mubr.f32.gmra.mxu0 %v784
        %v2475 = vpop.f32.mrf.mxu0
        %v2476 = vadd.f32 0.0, %v2475
        %v2477 = vpop.f32.mrf.mxu0
        %2478 = vmatprep.mubr.f32.mxu0 %v1049
        %2479 = vmatmul.mubr.f32.gmra.mxu0 %v785
        %v2480 = vpop.f32.mrf.mxu0
        %v2481 = vadd.f32 0.0, %v2480
        %v2482 = vpop.f32.mrf.mxu0
        %2483 = vmatprep.mubr.f32.mxu0 %v1051
        %2484 = vmatmul.mubr.f32.gmra.mxu0 %v786
        %v2485 = vpop.f32.mrf.mxu0
        %v2486 = vadd.f32 0.0, %v2485
        %v2487 = vpop.f32.mrf.mxu0
        %2488 = vmatprep.mubr.f32.mxu0 %v1053
        %2489 = vmatmul.mubr.f32.gmra.mxu0 %v787
        %v2490 = vpop.f32.mrf.mxu0
        %v2491 = vadd.f32 0.0, %v2490
        %v2492 = vpop.f32.mrf.mxu0
        %2493 = vmatprep.mubr.f32.mxu0 %v1055
        %2494 = vmatmul.mubr.f32.gmra.mxu0 %v788
        %v2495 = vpop.f32.mrf.mxu0
        %v2496 = vadd.f32 0.0, %v2495
        %v2497 = vpop.f32.mrf.mxu0
        %2498 = vmatprep.mubr.f32.mxu0 %v1057
        %2499 = vmatmul.mubr.f32.gmra.mxu0 %v789
        %v2500 = vpop.f32.mrf.mxu0
        %v2501 = vadd.f32 0.0, %v2500
        %v2502 = vpop.f32.mrf.mxu0
        %2503 = vmatprep.mubr.f32.mxu0 %v1059
        %2504 = vmatmul.mubr.f32.gmra.mxu0 %v790
        %v2505 = vpop.f32.mrf.mxu0
        %v2506 = vadd.f32 0.0, %v2505
        %v2507 = vpop.f32.mrf.mxu0
        %2508 = vmatprep.mubr.f32.mxu0 %v1061
        %2509 = vmatmul.mubr.f32.gmra.mxu0 %v791
        %v2510 = vpop.f32.mrf.mxu0
        %v2511 = vadd.f32 0.0, %v2510
        %v2512 = vpop.f32.mrf.mxu0
        %2513 = vmatprep.mubr.f32.mxu0 %v1063
        %2514 = vmatmul.mubr.f32.gmra.mxu0 %v792
        %v2515 = vpop.f32.mrf.mxu0
        %v2516 = vadd.f32 0.0, %v2515
        %v2517 = vpop.f32.mrf.mxu0
        %2518 = vmatprep.mubr.f32.mxu0 %v1065
        %2519 = vmatmul.mubr.f32.gmra.mxu0 %v793
        %v2520 = vpop.f32.mrf.mxu0
        %v2521 = vadd.f32 0.0, %v2520
        %v2522 = vpop.f32.mrf.mxu0
        %2523 = vmatprep.mubr.f32.mxu0 %v1067
        %2524 = vmatmul.mubr.f32.gmra.mxu0 %v794
        %v2525 = vpop.f32.mrf.mxu0
        %v2526 = vadd.f32 0.0, %v2525
        %v2527 = vpop.f32.mrf.mxu0
        %2528 = vmatprep.mubr.f32.mxu0 %v1069
        %2529 = vmatmul.mubr.f32.gmra.mxu0 %v795
        %v2530 = vpop.f32.mrf.mxu0
        %v2531 = vadd.f32 0.0, %v2530
        %v2532 = vpop.f32.mrf.mxu0
        %2533 = vmatprep.mubr.f32.mxu0 %v1071
        %2534 = vmatmul.mubr.f32.gmra.mxu0 %v796
        %v2535 = vpop.f32.mrf.mxu0
        %v2536 = vadd.f32 0.0, %v2535
        %v2537 = vpop.f32.mrf.mxu0
        %2538 = vmatprep.mubr.f32.mxu0 %v1073
        %2539 = vmatmul.mubr.f32.gmra.mxu0 %v797
        %v2540 = vpop.f32.mrf.mxu0
        %v2541 = vadd.f32 0.0, %v2540
        %v2542 = vpop.f32.mrf.mxu0
        %2543 = vmatprep.mubr.f32.mxu0 %v1075
        %2544 = vmatmul.mubr.f32.gmra.mxu0 %v798
        %v2545 = vpop.f32.mrf.mxu0
        %v2546 = vadd.f32 0.0, %v2545
        %v2547 = vpop.f32.mrf.mxu0
        %2548 = vmatprep.mubr.f32.mxu0 %v1077
        %2549 = vmatmul.mubr.f32.gmra.mxu0 %v799
        %v2550 = vpop.f32.mrf.mxu0
        %v2551 = vadd.f32 0.0, %v2550
        %v2552 = vpop.f32.mrf.mxu0
        %2553 = vmatprep.mubr.f32.mxu0 %v1079
        %2554 = vmatmul.mubr.f32.gmra.mxu0 %v800
        %v2555 = vpop.f32.mrf.mxu0
        %v2556 = vadd.f32 0.0, %v2555
        %v2557 = vpop.f32.mrf.mxu0
        %2558 = vmatprep.mubr.f32.mxu0 %v1081
        %2559 = vmatmul.mubr.f32.gmra.mxu0 %v801
        %v2560 = vpop.f32.mrf.mxu0
        %v2561 = vadd.f32 0.0, %v2560
        %v2562 = vpop.f32.mrf.mxu0
        %2563 = vmatprep.mubr.f32.mxu0 %v1083
        %2564 = vmatmul.mubr.f32.gmra.mxu0 %v802
        %v2565 = vpop.f32.mrf.mxu0
        %v2566 = vadd.f32 0.0, %v2565
        %v2567 = vpop.f32.mrf.mxu0
        %2568 = vmatprep.mubr.f32.mxu0 %v1085
        %2569 = vmatmul.mubr.f32.gmra.mxu0 %v803
        %v2570 = vpop.f32.mrf.mxu0
        %v2571 = vadd.f32 0.0, %v2570
        %v2572 = vpop.f32.mrf.mxu0
        %2573 = vmatprep.mubr.f32.mxu0 %v1084
        %2574 = vmatmul.mubr.f32.gmra.mxu0 %v804
        %v2575 = vpop.f32.mrf.mxu0
        %v2576 = vadd.f32 0.0, %v2575
        %v2577 = vpop.f32.mrf.mxu0
        %2578 = vdwg.mxu0
        %2579 = vmatprep.subr.mxu0 0.0
        %2580 = vmatpush1.msra.mxu0 %v2137
        %2581 = vmatprep.subr.mxu0 0.0
        %2582 = vmatpush1.msra.mxu0 %v2136
        %2583 = vmatprep.subr.mxu0 0.0
        %2584 = vmatpush1.msra.mxu0 %v2135
        %2585 = vmatprep.subr.mxu0 0.0
        %2586 = vmatpush1.msra.mxu0 %v2134
        %2587 = vmatprep.subr.mxu0 0.0
        %2588 = vmatpush1.msra.mxu0 %v2133
        %2589 = vmatprep.subr.mxu0 0.0
        %2590 = vmatpush1.msra.mxu0 %v2132
        %2591 = vmatprep.subr.mxu0 0.0
        %2592 = vmatpush1.msra.mxu0 %v2131
        %2593 = vmatprep.subr.mxu0 0.0
        %2594 = vmatpush1.msra.mxu0 %v2130
        %2595 = vmatprep.subr.mxu0 0.0
        %2596 = vmatpush1.msra.mxu0 %v2129
        %2597 = vmatprep.subr.mxu0 0.0
        %2598 = vmatpush1.msra.mxu0 %v2128
        %2599 = vmatprep.subr.mxu0 0.0
        %2600 = vmatpush1.msra.mxu0 %v2127
        %2601 = vmatprep.subr.mxu0 0.0
        %2602 = vmatpush1.msra.mxu0 %v2126
        %2603 = vmatprep.subr.mxu0 0.0
        %2604 = vmatpush1.msra.mxu0 %v2125
        %2605 = vmatprep.subr.mxu0 0.0
        %2606 = vmatpush1.msra.mxu0 %v2124
        %2607 = vmatprep.subr.mxu0 0.0
        %2608 = vmatpush1.msra.mxu0 %v2123
        %2609 = vmatprep.subr.mxu0 0.0
        %2610 = vmatpush1.msra.mxu0 %v2122
        %2611 = vmatprep.subr.mxu0 0.0
        %2612 = vmatpush2.msra.mxu0 %v2153
        %2613 = vmatprep.subr.mxu0 0.0
        %2614 = vmatpush2.msra.mxu0 %v2152
        %2615 = vmatprep.subr.mxu0 0.0
        %2616 = vmatpush2.msra.mxu0 %v2151
        %2617 = vmatprep.subr.mxu0 0.0
        %2618 = vmatpush2.msra.mxu0 %v2150
        %2619 = vmatprep.subr.mxu0 0.0
        %2620 = vmatpush2.msra.mxu0 %v2149
        %2621 = vmatprep.subr.mxu0 0.0
        %2622 = vmatpush2.msra.mxu0 %v2148
        %2623 = vmatprep.subr.mxu0 0.0
        %2624 = vmatpush2.msra.mxu0 %v2147
        %2625 = vmatprep.subr.mxu0 0.0
        %2626 = vmatpush2.msra.mxu0 %v2146
        %2627 = vmatprep.subr.mxu0 0.0
        %2628 = vmatpush2.msra.mxu0 %v2145
        %2629 = vmatprep.subr.mxu0 0.0
        %2630 = vmatpush2.msra.mxu0 %v2144
        %2631 = vmatprep.subr.mxu0 0.0
        %2632 = vmatpush2.msra.mxu0 %v2143
        %2633 = vmatprep.subr.mxu0 0.0
        %2634 = vmatpush2.msra.mxu0 %v2142
        %2635 = vmatprep.subr.mxu0 0.0
        %2636 = vmatpush2.msra.mxu0 %v2141
        %2637 = vmatprep.subr.mxu0 0.0
        %2638 = vmatpush2.msra.mxu0 %v2140
        %2639 = vmatprep.subr.mxu0 0.0
        %2640 = vmatpush2.msra.mxu0 %v2139
        %2641 = vmatprep.subr.mxu0 0.0
        %2642 = vmatpush2.msra.mxu0 %v2138
        %2643 = vmatprep.mubr.f32.mxu0 %v805
        %2644 = vmatmul.mubr.f32.gmra.mxu0 %v1145
        %v2645 = vpop.f32.mrf.mxu0
        %v2646 = vadd.f32 %v2301, %v2645
        %v2647 = vpop.f32.mrf.mxu0
        %2648 = vmatprep.mubr.f32.mxu0 %v806
        %2649 = vmatmul.mubr.f32.gmra.mxu0 %v1147
        %v2650 = vpop.f32.mrf.mxu0
        %v2651 = vadd.f32 %v2306, %v2650
        %v2652 = vpop.f32.mrf.mxu0
        %2653 = vmatprep.mubr.f32.mxu0 %v807
        %2654 = vmatmul.mubr.f32.gmra.mxu0 %v1149
        %v2655 = vpop.f32.mrf.mxu0
        %v2656 = vadd.f32 %v2311, %v2655
        %v2657 = vpop.f32.mrf.mxu0
        %2658 = vmatprep.mubr.f32.mxu0 %v808
        %2659 = vmatmul.mubr.f32.gmra.mxu0 %v1151
        %v2660 = vpop.f32.mrf.mxu0
        %v2661 = vadd.f32 %v2316, %v2660
        %v2662 = vpop.f32.mrf.mxu0
        %2663 = vmatprep.mubr.f32.mxu0 %v809
        %2664 = vmatmul.mubr.f32.gmra.mxu0 %v1153
        %v2665 = vpop.f32.mrf.mxu0
        %v2666 = vadd.f32 %v2321, %v2665
        %v2667 = vpop.f32.mrf.mxu0
        %2668 = vmatprep.mubr.f32.mxu0 %v810
        %2669 = vmatmul.mubr.f32.gmra.mxu0 %v1155
        %v2670 = vpop.f32.mrf.mxu0
        %v2671 = vadd.f32 %v2326, %v2670
        %v2672 = vpop.f32.mrf.mxu0
        %2673 = vmatprep.mubr.f32.mxu0 %v811
        %2674 = vmatmul.mubr.f32.gmra.mxu0 %v1157
        %v2675 = vpop.f32.mrf.mxu0
        %v2676 = vadd.f32 %v2331, %v2675
        %v2677 = vpop.f32.mrf.mxu0
        %2678 = vmatprep.mubr.f32.mxu0 %v812
        %2679 = vmatmul.mubr.f32.gmra.mxu0 %v1159
        %v2680 = vpop.f32.mrf.mxu0
        %v2681 = vadd.f32 %v2336, %v2680
        %v2682 = vpop.f32.mrf.mxu0
        %2683 = vmatprep.mubr.f32.mxu0 %v813
        %2684 = vmatmul.mubr.f32.gmra.mxu0 %v1161
        %v2685 = vpop.f32.mrf.mxu0
        %v2686 = vadd.f32 %v2341, %v2685
        %v2687 = vpop.f32.mrf.mxu0
        %2688 = vmatprep.mubr.f32.mxu0 %v814
        %2689 = vmatmul.mubr.f32.gmra.mxu0 %v1163
        %v2690 = vpop.f32.mrf.mxu0
        %v2691 = vadd.f32 %v2346, %v2690
        %v2692 = vpop.f32.mrf.mxu0
        %2693 = vmatprep.mubr.f32.mxu0 %v815
        %2694 = vmatmul.mubr.f32.gmra.mxu0 %v1165
        %v2695 = vpop.f32.mrf.mxu0
        %v2696 = vadd.f32 %v2351, %v2695
        %v2697 = vpop.f32.mrf.mxu0
        %2698 = vmatprep.mubr.f32.mxu0 %v816
        %2699 = vmatmul.mubr.f32.gmra.mxu0 %v1167
        %v2700 = vpop.f32.mrf.mxu0
        %v2701 = vadd.f32 %v2356, %v2700
        %v2702 = vpop.f32.mrf.mxu0
        %2703 = vmatprep.mubr.f32.mxu0 %v817
        %2704 = vmatmul.mubr.f32.gmra.mxu0 %v1169
        %v2705 = vpop.f32.mrf.mxu0
        %v2706 = vadd.f32 %v2361, %v2705
        %v2707 = vpop.f32.mrf.mxu0
        %2708 = vmatprep.mubr.f32.mxu0 %v818
        %2709 = vmatmul.mubr.f32.gmra.mxu0 %v1171
        %v2710 = vpop.f32.mrf.mxu0
        %v2711 = vadd.f32 %v2366, %v2710
        %v2712 = vpop.f32.mrf.mxu0
        %2713 = vmatprep.mubr.f32.mxu0 %v819
        %2714 = vmatmul.mubr.f32.gmra.mxu0 %v1173
        %v2715 = vpop.f32.mrf.mxu0
        %v2716 = vadd.f32 %v2371, %v2715
        %v2717 = vpop.f32.mrf.mxu0
        %2718 = vmatprep.mubr.f32.mxu0 %v820
        %2719 = vmatmul.mubr.f32.gmra.mxu0 %v1175
        %v2720 = vpop.f32.mrf.mxu0
        %v2721 = vadd.f32 %v2376, %v2720
        %v2722 = vpop.f32.mrf.mxu0
        %2723 = vmatprep.mubr.f32.mxu0 %v821
        %2724 = vmatmul.mubr.f32.gmra.mxu0 %v1177
        %v2725 = vpop.f32.mrf.mxu0
        %v2726 = vadd.f32 %v2381, %v2725
        %v2727 = vpop.f32.mrf.mxu0
        %2728 = vmatprep.mubr.f32.mxu0 %v822
        %2729 = vmatmul.mubr.f32.gmra.mxu0 %v1179
        %v2730 = vpop.f32.mrf.mxu0
        %v2731 = vadd.f32 %v2386, %v2730
        %v2732 = vpop.f32.mrf.mxu0
        %2733 = vmatprep.mubr.f32.mxu0 %v823
        %2734 = vmatmul.mubr.f32.gmra.mxu0 %v1181
        %v2735 = vpop.f32.mrf.mxu0
        %v2736 = vadd.f32 %v2391, %v2735
        %v2737 = vpop.f32.mrf.mxu0
        %2738 = vmatprep.mubr.f32.mxu0 %v824
        %2739 = vmatmul.mubr.f32.gmra.mxu0 %v1183
        %v2740 = vpop.f32.mrf.mxu0
        %v2741 = vadd.f32 %v2396, %v2740
        %v2742 = vpop.f32.mrf.mxu0
        %2743 = vmatprep.mubr.f32.mxu0 %v825
        %2744 = vmatmul.mubr.f32.gmra.mxu0 %v1185
        %v2745 = vpop.f32.mrf.mxu0
        %v2746 = vadd.f32 %v2401, %v2745
        %v2747 = vpop.f32.mrf.mxu0
        %2748 = vmatprep.mubr.f32.mxu0 %v826
        %2749 = vmatmul.mubr.f32.gmra.mxu0 %v1187
        %v2750 = vpop.f32.mrf.mxu0
        %v2751 = vadd.f32 %v2406, %v2750
        %v2752 = vpop.f32.mrf.mxu0
        %2753 = vmatprep.mubr.f32.mxu0 %v827
        %2754 = vmatmul.mubr.f32.gmra.mxu0 %v1189
        %v2755 = vpop.f32.mrf.mxu0
        %v2756 = vadd.f32 %v2411, %v2755
        %v2757 = vpop.f32.mrf.mxu0
        %2758 = vmatprep.mubr.f32.mxu0 %v828
        %2759 = vmatmul.mubr.f32.gmra.mxu0 %v1191
        %v2760 = vpop.f32.mrf.mxu0
        %v2761 = vadd.f32 %v2416, %v2760
        %v2762 = vpop.f32.mrf.mxu0
        %2763 = vmatprep.mubr.f32.mxu0 %v829
        %2764 = vmatmul.mubr.f32.gmra.mxu0 %v1193
        %v2765 = vpop.f32.mrf.mxu0
        %v2766 = vadd.f32 %v2421, %v2765
        %v2767 = vpop.f32.mrf.mxu0
        %2768 = vmatprep.mubr.f32.mxu0 %v830
        %2769 = vmatmul.mubr.f32.gmra.mxu0 %v1195
        %v2770 = vpop.f32.mrf.mxu0
        %v2771 = vadd.f32 %v2426, %v2770
        %v2772 = vpop.f32.mrf.mxu0
        %2773 = vmatprep.mubr.f32.mxu0 %v831
        %2774 = vmatmul.mubr.f32.gmra.mxu0 %v1197
        %v2775 = vpop.f32.mrf.mxu0
        %v2776 = vadd.f32 %v2431, %v2775
        %v2777 = vpop.f32.mrf.mxu0
        %2778 = vmatprep.mubr.f32.mxu0 %v832
        %2779 = vmatmul.mubr.f32.gmra.mxu0 %v1199
        %v2780 = vpop.f32.mrf.mxu0
        %v2781 = vadd.f32 %v2436, %v2780
        %v2782 = vpop.f32.mrf.mxu0
        %2783 = vmatprep.mubr.f32.mxu0 %v833
        %2784 = vmatmul.mubr.f32.gmra.mxu0 %v1201
        %v2785 = vpop.f32.mrf.mxu0
        %v2786 = vadd.f32 %v2441, %v2785
        %v2787 = vpop.f32.mrf.mxu0
        %2788 = vmatprep.mubr.f32.mxu0 %v834
        %2789 = vmatmul.mubr.f32.gmra.mxu0 %v1203
        %v2790 = vpop.f32.mrf.mxu0
        %v2791 = vadd.f32 %v2446, %v2790
        %v2792 = vpop.f32.mrf.mxu0
        %2793 = vmatprep.mubr.f32.mxu0 %v835
        %2794 = vmatmul.mubr.f32.gmra.mxu0 %v1205
        %v2795 = vpop.f32.mrf.mxu0
        %v2796 = vadd.f32 %v2451, %v2795
        %v2797 = vpop.f32.mrf.mxu0
        %2798 = vmatprep.mubr.f32.mxu0 %v836
        %2799 = vmatmul.mubr.f32.gmra.mxu0 %v1207
        %v2800 = vpop.f32.mrf.mxu0
        %v2801 = vadd.f32 %v2456, %v2800
        %v2802 = vpop.f32.mrf.mxu0
        %2803 = vmatprep.mubr.f32.mxu0 %v837
        %2804 = vmatmul.mubr.f32.gmra.mxu0 %v1209
        %v2805 = vpop.f32.mrf.mxu0
        %v2806 = vadd.f32 %v2461, %v2805
        %v2807 = vpop.f32.mrf.mxu0
        %2808 = vmatprep.mubr.f32.mxu0 %v838
        %2809 = vmatmul.mubr.f32.gmra.mxu0 %v1211
        %v2810 = vpop.f32.mrf.mxu0
        %v2811 = vadd.f32 %v2466, %v2810
        %v2812 = vpop.f32.mrf.mxu0
        %2813 = vmatprep.mubr.f32.mxu0 %v839
        %2814 = vmatmul.mubr.f32.gmra.mxu0 %v1213
        %v2815 = vpop.f32.mrf.mxu0
        %v2816 = vadd.f32 %v2471, %v2815
        %v2817 = vpop.f32.mrf.mxu0
        %2818 = vmatprep.mubr.f32.mxu0 %v840
        %2819 = vmatmul.mubr.f32.gmra.mxu0 %v1215
        %v2820 = vpop.f32.mrf.mxu0
        %v2821 = vadd.f32 %v2476, %v2820
        %v2822 = vpop.f32.mrf.mxu0
        %2823 = vmatprep.mubr.f32.mxu0 %v841
        %2824 = vmatmul.mubr.f32.gmra.mxu0 %v1217
        %v2825 = vpop.f32.mrf.mxu0
        %v2826 = vadd.f32 %v2481, %v2825
        %v2827 = vpop.f32.mrf.mxu0
        %2828 = vmatprep.mubr.f32.mxu0 %v842
        %2829 = vmatmul.mubr.f32.gmra.mxu0 %v1219
        %v2830 = vpop.f32.mrf.mxu0
        %v2831 = vadd.f32 %v2486, %v2830
        %v2832 = vpop.f32.mrf.mxu0
        %2833 = vmatprep.mubr.f32.mxu0 %v843
        %2834 = vmatmul.mubr.f32.gmra.mxu0 %v1221
        %v2835 = vpop.f32.mrf.mxu0
        %v2836 = vadd.f32 %v2491, %v2835
        %v2837 = vpop.f32.mrf.mxu0
        %2838 = vmatprep.mubr.f32.mxu0 %v844
        %2839 = vmatmul.mubr.f32.gmra.mxu0 %v1223
        %v2840 = vpop.f32.mrf.mxu0
        %v2841 = vadd.f32 %v2496, %v2840
        %v2842 = vpop.f32.mrf.mxu0
        %2843 = vmatprep.mubr.f32.mxu0 %v845
        %2844 = vmatmul.mubr.f32.gmra.mxu0 %v1225
        %v2845 = vpop.f32.mrf.mxu0
        %v2846 = vadd.f32 %v2501, %v2845
        %v2847 = vpop.f32.mrf.mxu0
        %2848 = vmatprep.mubr.f32.mxu0 %v846
        %2849 = vmatmul.mubr.f32.gmra.mxu0 %v1227
        %v2850 = vpop.f32.mrf.mxu0
        %v2851 = vadd.f32 %v2506, %v2850
        %v2852 = vpop.f32.mrf.mxu0
        %2853 = vmatprep.mubr.f32.mxu0 %v847
        %2854 = vmatmul.mubr.f32.gmra.mxu0 %v1229
        %v2855 = vpop.f32.mrf.mxu0
        %v2856 = vadd.f32 %v2511, %v2855
        %v2857 = vpop.f32.mrf.mxu0
        %2858 = vmatprep.mubr.f32.mxu0 %v848
        %2859 = vmatmul.mubr.f32.gmra.mxu0 %v1231
        %v2860 = vpop.f32.mrf.mxu0
        %v2861 = vadd.f32 %v2516, %v2860
        %v2862 = vpop.f32.mrf.mxu0
        %2863 = vmatprep.mubr.f32.mxu0 %v849
        %2864 = vmatmul.mubr.f32.gmra.mxu0 %v1233
        %v2865 = vpop.f32.mrf.mxu0
        %v2866 = vadd.f32 %v2521, %v2865
        %v2867 = vpop.f32.mrf.mxu0
        %2868 = vmatprep.mubr.f32.mxu0 %v850
        %2869 = vmatmul.mubr.f32.gmra.mxu0 %v1235
        %v2870 = vpop.f32.mrf.mxu0
        %v2871 = vadd.f32 %v2526, %v2870
        %v2872 = vpop.f32.mrf.mxu0
        %2873 = vmatprep.mubr.f32.mxu0 %v851
        %2874 = vmatmul.mubr.f32.gmra.mxu0 %v1237
        %v2875 = vpop.f32.mrf.mxu0
        %v2876 = vadd.f32 %v2531, %v2875
        %v2877 = vpop.f32.mrf.mxu0
        %2878 = vmatprep.mubr.f32.mxu0 %v852
        %2879 = vmatmul.mubr.f32.gmra.mxu0 %v1239
        %v2880 = vpop.f32.mrf.mxu0
        %v2881 = vadd.f32 %v2536, %v2880
        %v2882 = vpop.f32.mrf.mxu0
        %2883 = vmatprep.mubr.f32.mxu0 %v853
        %2884 = vmatmul.mubr.f32.gmra.mxu0 %v1241
        %v2885 = vpop.f32.mrf.mxu0
        %v2886 = vadd.f32 %v2541, %v2885
        %v2887 = vpop.f32.mrf.mxu0
        %2888 = vmatprep.mubr.f32.mxu0 %v854
        %2889 = vmatmul.mubr.f32.gmra.mxu0 %v1243
        %v2890 = vpop.f32.mrf.mxu0
        %v2891 = vadd.f32 %v2546, %v2890
        %v2892 = vpop.f32.mrf.mxu0
        %2893 = vmatprep.mubr.f32.mxu0 %v855
        %2894 = vmatmul.mubr.f32.gmra.mxu0 %v1245
        %v2895 = vpop.f32.mrf.mxu0
        %v2896 = vadd.f32 %v2551, %v2895
        %v2897 = vpop.f32.mrf.mxu0
        %2898 = vmatprep.mubr.f32.mxu0 %v856
        %2899 = vmatmul.mubr.f32.gmra.mxu0 %v1247
        %v2900 = vpop.f32.mrf.mxu0
        %v2901 = vadd.f32 %v2556, %v2900
        %v2902 = vpop.f32.mrf.mxu0
        %2903 = vmatprep.mubr.f32.mxu0 %v857
        %2904 = vmatmul.mubr.f32.gmra.mxu0 %v1249
        %v2905 = vpop.f32.mrf.mxu0
        %v2906 = vadd.f32 %v2561, %v2905
        %v2907 = vpop.f32.mrf.mxu0
        %2908 = vmatprep.mubr.f32.mxu0 %v858
        %2909 = vmatmul.mubr.f32.gmra.mxu0 %v1251
        %v2910 = vpop.f32.mrf.mxu0
        %v2911 = vadd.f32 %v2566, %v2910
        %v2912 = vpop.f32.mrf.mxu0
        %2913 = vmatprep.mubr.f32.mxu0 %v859
        %2914 = vmatmul.mubr.f32.gmra.mxu0 %v1253
        %v2915 = vpop.f32.mrf.mxu0
        %v2916 = vadd.f32 %v2571, %v2915
        %v2917 = vpop.f32.mrf.mxu0
        %2918 = vmatprep.mubr.f32.mxu0 %v860
        %2919 = vmatmul.mubr.f32.gmra.mxu0 %v1252
        %v2920 = vpop.f32.mrf.mxu0
        %v2921 = vadd.f32 %v2576, %v2920
        %v2922 = vpop.f32.mrf.mxu0
        %2923 = vdwg.mxu0
        %2924 = vmatprep.subr.mxu0 0.0
        %2925 = vmatpush1.msra.mxu0 %v2169
        %2926 = vmatprep.subr.mxu0 0.0
        %2927 = vmatpush1.msra.mxu0 %v2168
        %2928 = vmatprep.subr.mxu0 0.0
        %2929 = vmatpush1.msra.mxu0 %v2167
        %2930 = vmatprep.subr.mxu0 0.0
        %2931 = vmatpush1.msra.mxu0 %v2166
        %2932 = vmatprep.subr.mxu0 0.0
        %2933 = vmatpush1.msra.mxu0 %v2165
        %2934 = vmatprep.subr.mxu0 0.0
        %2935 = vmatpush1.msra.mxu0 %v2164
        %2936 = vmatprep.subr.mxu0 0.0
        %2937 = vmatpush1.msra.mxu0 %v2163
        %2938 = vmatprep.subr.mxu0 0.0
        %2939 = vmatpush1.msra.mxu0 %v2162
        %2940 = vmatprep.subr.mxu0 0.0
        %2941 = vmatpush1.msra.mxu0 %v2161
        %2942 = vmatprep.subr.mxu0 0.0
        %2943 = vmatpush1.msra.mxu0 %v2160
        %2944 = vmatprep.subr.mxu0 0.0
        %2945 = vmatpush1.msra.mxu0 %v2159
        %2946 = vmatprep.subr.mxu0 0.0
        %2947 = vmatpush1.msra.mxu0 %v2158
        %2948 = vmatprep.subr.mxu0 0.0
        %2949 = vmatpush1.msra.mxu0 %v2157
        %2950 = vmatprep.subr.mxu0 0.0
        %2951 = vmatpush1.msra.mxu0 %v2156
        %2952 = vmatprep.subr.mxu0 0.0
        %2953 = vmatpush1.msra.mxu0 %v2155
        %2954 = vmatprep.subr.mxu0 0.0
        %2955 = vmatpush1.msra.mxu0 %v2154
        %2956 = vmatprep.subr.mxu0 0.0
        %2957 = vmatpush2.msra.mxu0 %v2185
        %2958 = vmatprep.subr.mxu0 0.0
        %2959 = vmatpush2.msra.mxu0 %v2184
        %2960 = vmatprep.subr.mxu0 0.0
        %2961 = vmatpush2.msra.mxu0 %v2183
        %2962 = vmatprep.subr.mxu0 0.0
        %2963 = vmatpush2.msra.mxu0 %v2182
        %2964 = vmatprep.subr.mxu0 0.0
        %2965 = vmatpush2.msra.mxu0 %v2181
        %2966 = vmatprep.subr.mxu0 0.0
        %2967 = vmatpush2.msra.mxu0 %v2180
        %2968 = vmatprep.subr.mxu0 0.0
        %2969 = vmatpush2.msra.mxu0 %v2179
        %2970 = vmatprep.subr.mxu0 0.0
        %2971 = vmatpush2.msra.mxu0 %v2178
        %2972 = vmatprep.subr.mxu0 0.0
        %2973 = vmatpush2.msra.mxu0 %v2177
        %2974 = vmatprep.subr.mxu0 0.0
        %2975 = vmatpush2.msra.mxu0 %v2176
        %2976 = vmatprep.subr.mxu0 0.0
        %2977 = vmatpush2.msra.mxu0 %v2175
        %2978 = vmatprep.subr.mxu0 0.0
        %2979 = vmatpush2.msra.mxu0 %v2174
        %2980 = vmatprep.subr.mxu0 0.0
        %2981 = vmatpush2.msra.mxu0 %v2173
        %2982 = vmatprep.subr.mxu0 0.0
        %2983 = vmatpush2.msra.mxu0 %v2172
        %2984 = vmatprep.subr.mxu0 0.0
        %2985 = vmatpush2.msra.mxu0 %v2171
        %2986 = vmatprep.subr.mxu0 0.0
        %2987 = vmatpush2.msra.mxu0 %v2170
        %2988 = vmatprep.mubr.f32.mxu0 %v1535
        %2989 = vmatmul.mubr.f32.gmra.mxu0 %v1368
        %v2990 = vpop.f32.mrf.mxu0
        %v2991 = vadd.f32 %v2646, %v2990
        %v2992 = vpop.f32.mrf.mxu0
        %2993 = vmatprep.mubr.f32.mxu0 %v1537
        %2994 = vmatmul.mubr.f32.gmra.mxu0 %v1370
        %v2995 = vpop.f32.mrf.mxu0
        %v2996 = vadd.f32 %v2651, %v2995
        %v2997 = vpop.f32.mrf.mxu0
        %2998 = vmatprep.mubr.f32.mxu0 %v1539
        %2999 = vmatmul.mubr.f32.gmra.mxu0 %v1372
        %v3000 = vpop.f32.mrf.mxu0
        %v3001 = vadd.f32 %v2656, %v3000
        %v3002 = vpop.f32.mrf.mxu0
        %3003 = vmatprep.mubr.f32.mxu0 %v1541
        %3004 = vmatmul.mubr.f32.gmra.mxu0 %v1374
        %v3005 = vpop.f32.mrf.mxu0
        %v3006 = vadd.f32 %v2661, %v3005
        %v3007 = vpop.f32.mrf.mxu0
        %3008 = vmatprep.mubr.f32.mxu0 %v1543
        %3009 = vmatmul.mubr.f32.gmra.mxu0 %v1376
        %v3010 = vpop.f32.mrf.mxu0
        %v3011 = vadd.f32 %v2666, %v3010
        %v3012 = vpop.f32.mrf.mxu0
        %3013 = vmatprep.mubr.f32.mxu0 %v1545
        %3014 = vmatmul.mubr.f32.gmra.mxu0 %v1378
        %v3015 = vpop.f32.mrf.mxu0
        %v3016 = vadd.f32 %v2671, %v3015
        %v3017 = vpop.f32.mrf.mxu0
        %3018 = vmatprep.mubr.f32.mxu0 %v1547
        %3019 = vmatmul.mubr.f32.gmra.mxu0 %v1380
        %v3020 = vpop.f32.mrf.mxu0
        %v3021 = vadd.f32 %v2676, %v3020
        %v3022 = vpop.f32.mrf.mxu0
        %3023 = vmatprep.mubr.f32.mxu0 %v1549
        %3024 = vmatmul.mubr.f32.gmra.mxu0 %v1382
        %v3025 = vpop.f32.mrf.mxu0
        %v3026 = vadd.f32 %v2681, %v3025
        %v3027 = vpop.f32.mrf.mxu0
        %3028 = vmatprep.mubr.f32.mxu0 %v1551
        %3029 = vmatmul.mubr.f32.gmra.mxu0 %v1384
        %v3030 = vpop.f32.mrf.mxu0
        %v3031 = vadd.f32 %v2686, %v3030
        %v3032 = vpop.f32.mrf.mxu0
        %3033 = vmatprep.mubr.f32.mxu0 %v1553
        %3034 = vmatmul.mubr.f32.gmra.mxu0 %v1386
        %v3035 = vpop.f32.mrf.mxu0
        %v3036 = vadd.f32 %v2691, %v3035
        %v3037 = vpop.f32.mrf.mxu0
        %3038 = vmatprep.mubr.f32.mxu0 %v1555
        %3039 = vmatmul.mubr.f32.gmra.mxu0 %v1388
        %v3040 = vpop.f32.mrf.mxu0
        %v3041 = vadd.f32 %v2696, %v3040
        %v3042 = vpop.f32.mrf.mxu0
        %3043 = vmatprep.mubr.f32.mxu0 %v1557
        %3044 = vmatmul.mubr.f32.gmra.mxu0 %v1390
        %v3045 = vpop.f32.mrf.mxu0
        %v3046 = vadd.f32 %v2701, %v3045
        %v3047 = vpop.f32.mrf.mxu0
        %3048 = vmatprep.mubr.f32.mxu0 %v1559
        %3049 = vmatmul.mubr.f32.gmra.mxu0 %v1392
        %v3050 = vpop.f32.mrf.mxu0
        %v3051 = vadd.f32 %v2706, %v3050
        %v3052 = vpop.f32.mrf.mxu0
        %3053 = vmatprep.mubr.f32.mxu0 %v1561
        %3054 = vmatmul.mubr.f32.gmra.mxu0 %v1394
        %v3055 = vpop.f32.mrf.mxu0
        %v3056 = vadd.f32 %v2711, %v3055
        %v3057 = vpop.f32.mrf.mxu0
        %3058 = vmatprep.mubr.f32.mxu0 %v1563
        %3059 = vmatmul.mubr.f32.gmra.mxu0 %v1396
        %v3060 = vpop.f32.mrf.mxu0
        %v3061 = vadd.f32 %v2716, %v3060
        %v3062 = vpop.f32.mrf.mxu0
        %3063 = vmatprep.mubr.f32.mxu0 %v1565
        %3064 = vmatmul.mubr.f32.gmra.mxu0 %v1398
        %v3065 = vpop.f32.mrf.mxu0
        %v3066 = vadd.f32 %v2721, %v3065
        %v3067 = vpop.f32.mrf.mxu0
        %3068 = vmatprep.mubr.f32.mxu0 %v1567
        %3069 = vmatmul.mubr.f32.gmra.mxu0 %v1400
        %v3070 = vpop.f32.mrf.mxu0
        %v3071 = vadd.f32 %v2726, %v3070
        %v3072 = vpop.f32.mrf.mxu0
        %3073 = vmatprep.mubr.f32.mxu0 %v1569
        %3074 = vmatmul.mubr.f32.gmra.mxu0 %v1402
        %v3075 = vpop.f32.mrf.mxu0
        %v3076 = vadd.f32 %v2731, %v3075
        %v3077 = vpop.f32.mrf.mxu0
        %3078 = vmatprep.mubr.f32.mxu0 %v1571
        %3079 = vmatmul.mubr.f32.gmra.mxu0 %v1404
        %v3080 = vpop.f32.mrf.mxu0
        %v3081 = vadd.f32 %v2736, %v3080
        %v3082 = vpop.f32.mrf.mxu0
        %3083 = vmatprep.mubr.f32.mxu0 %v1573
        %3084 = vmatmul.mubr.f32.gmra.mxu0 %v1406
        %v3085 = vpop.f32.mrf.mxu0
        %v3086 = vadd.f32 %v2741, %v3085
        %v3087 = vpop.f32.mrf.mxu0
        %3088 = vmatprep.mubr.f32.mxu0 %v1575
        %3089 = vmatmul.mubr.f32.gmra.mxu0 %v1408
        %v3090 = vpop.f32.mrf.mxu0
        %v3091 = vadd.f32 %v2746, %v3090
        %v3092 = vpop.f32.mrf.mxu0
        %3093 = vmatprep.mubr.f32.mxu0 %v1577
        %3094 = vmatmul.mubr.f32.gmra.mxu0 %v1410
        %v3095 = vpop.f32.mrf.mxu0
        %v3096 = vadd.f32 %v2751, %v3095
        %v3097 = vpop.f32.mrf.mxu0
        %3098 = vmatprep.mubr.f32.mxu0 %v1579
        %3099 = vmatmul.mubr.f32.gmra.mxu0 %v1412
        %v3100 = vpop.f32.mrf.mxu0
        %v3101 = vadd.f32 %v2756, %v3100
        %v3102 = vpop.f32.mrf.mxu0
        %3103 = vmatprep.mubr.f32.mxu0 %v1581
        %3104 = vmatmul.mubr.f32.gmra.mxu0 %v1414
        %v3105 = vpop.f32.mrf.mxu0
        %v3106 = vadd.f32 %v2761, %v3105
        %v3107 = vpop.f32.mrf.mxu0
        %3108 = vmatprep.mubr.f32.mxu0 %v1583
        %3109 = vmatmul.mubr.f32.gmra.mxu0 %v1416
        %v3110 = vpop.f32.mrf.mxu0
        %v3111 = vadd.f32 %v2766, %v3110
        %v3112 = vpop.f32.mrf.mxu0
        %3113 = vmatprep.mubr.f32.mxu0 %v1585
        %3114 = vmatmul.mubr.f32.gmra.mxu0 %v1418
        %v3115 = vpop.f32.mrf.mxu0
        %v3116 = vadd.f32 %v2771, %v3115
        %v3117 = vpop.f32.mrf.mxu0
        %3118 = vmatprep.mubr.f32.mxu0 %v1587
        %3119 = vmatmul.mubr.f32.gmra.mxu0 %v1420
        %v3120 = vpop.f32.mrf.mxu0
        %v3121 = vadd.f32 %v2776, %v3120
        %v3122 = vpop.f32.mrf.mxu0
        %3123 = vmatprep.mubr.f32.mxu0 %v1589
        %3124 = vmatmul.mubr.f32.gmra.mxu0 %v1422
        %v3125 = vpop.f32.mrf.mxu0
        %v3126 = vadd.f32 %v2781, %v3125
        %v3127 = vpop.f32.mrf.mxu0
        %3128 = vmatprep.mubr.f32.mxu0 %v1591
        %3129 = vmatmul.mubr.f32.gmra.mxu0 %v1424
        %v3130 = vpop.f32.mrf.mxu0
        %v3131 = vadd.f32 %v2786, %v3130
        %v3132 = vpop.f32.mrf.mxu0
        %3133 = vmatprep.mubr.f32.mxu0 %v1593
        %3134 = vmatmul.mubr.f32.gmra.mxu0 %v1426
        %v3135 = vpop.f32.mrf.mxu0
        %v3136 = vadd.f32 %v2791, %v3135
        %v3137 = vpop.f32.mrf.mxu0
        %3138 = vmatprep.mubr.f32.mxu0 %v1595
        %3139 = vmatmul.mubr.f32.gmra.mxu0 %v1428
        %v3140 = vpop.f32.mrf.mxu0
        %v3141 = vadd.f32 %v2796, %v3140
        %v3142 = vpop.f32.mrf.mxu0
        %3143 = vmatprep.mubr.f32.mxu0 %v1597
        %3144 = vmatmul.mubr.f32.gmra.mxu0 %v1430
        %v3145 = vpop.f32.mrf.mxu0
        %v3146 = vadd.f32 %v2801, %v3145
        %v3147 = vpop.f32.mrf.mxu0
        %3148 = vmatprep.mubr.f32.mxu0 %v1599
        %3149 = vmatmul.mubr.f32.gmra.mxu0 %v1432
        %v3150 = vpop.f32.mrf.mxu0
        %v3151 = vadd.f32 %v2806, %v3150
        %v3152 = vpop.f32.mrf.mxu0
        %3153 = vmatprep.mubr.f32.mxu0 %v1601
        %3154 = vmatmul.mubr.f32.gmra.mxu0 %v1434
        %v3155 = vpop.f32.mrf.mxu0
        %v3156 = vadd.f32 %v2811, %v3155
        %v3157 = vpop.f32.mrf.mxu0
        %3158 = vmatprep.mubr.f32.mxu0 %v1603
        %3159 = vmatmul.mubr.f32.gmra.mxu0 %v1436
        %v3160 = vpop.f32.mrf.mxu0
        %v3161 = vadd.f32 %v2816, %v3160
        %v3162 = vpop.f32.mrf.mxu0
        %3163 = vmatprep.mubr.f32.mxu0 %v1605
        %3164 = vmatmul.mubr.f32.gmra.mxu0 %v1438
        %v3165 = vpop.f32.mrf.mxu0
        %v3166 = vadd.f32 %v2821, %v3165
        %v3167 = vpop.f32.mrf.mxu0
        %3168 = vmatprep.mubr.f32.mxu0 %v1607
        %3169 = vmatmul.mubr.f32.gmra.mxu0 %v1440
        %v3170 = vpop.f32.mrf.mxu0
        %v3171 = vadd.f32 %v2826, %v3170
        %v3172 = vpop.f32.mrf.mxu0
        %3173 = vmatprep.mubr.f32.mxu0 %v1609
        %3174 = vmatmul.mubr.f32.gmra.mxu0 %v1442
        %v3175 = vpop.f32.mrf.mxu0
        %v3176 = vadd.f32 %v2831, %v3175
        %v3177 = vpop.f32.mrf.mxu0
        %3178 = vmatprep.mubr.f32.mxu0 %v1611
        %3179 = vmatmul.mubr.f32.gmra.mxu0 %v1444
        %v3180 = vpop.f32.mrf.mxu0
        %v3181 = vadd.f32 %v2836, %v3180
        %v3182 = vpop.f32.mrf.mxu0
        %3183 = vmatprep.mubr.f32.mxu0 %v1613
        %3184 = vmatmul.mubr.f32.gmra.mxu0 %v1446
        %v3185 = vpop.f32.mrf.mxu0
        %v3186 = vadd.f32 %v2841, %v3185
        %v3187 = vpop.f32.mrf.mxu0
        %3188 = vmatprep.mubr.f32.mxu0 %v1615
        %3189 = vmatmul.mubr.f32.gmra.mxu0 %v1448
        %v3190 = vpop.f32.mrf.mxu0
        %v3191 = vadd.f32 %v2846, %v3190
        %v3192 = vpop.f32.mrf.mxu0
        %3193 = vmatprep.mubr.f32.mxu0 %v1617
        %3194 = vmatmul.mubr.f32.gmra.mxu0 %v1450
        %v3195 = vpop.f32.mrf.mxu0
        %v3196 = vadd.f32 %v2851, %v3195
        %v3197 = vpop.f32.mrf.mxu0
        %3198 = vmatprep.mubr.f32.mxu0 %v1619
        %3199 = vmatmul.mubr.f32.gmra.mxu0 %v1452
        %v3200 = vpop.f32.mrf.mxu0
        %v3201 = vadd.f32 %v2856, %v3200
        %v3202 = vpop.f32.mrf.mxu0
        %3203 = vmatprep.mubr.f32.mxu0 %v1621
        %3204 = vmatmul.mubr.f32.gmra.mxu0 %v1454
        %v3205 = vpop.f32.mrf.mxu0
        %v3206 = vadd.f32 %v2861, %v3205
        %v3207 = vpop.f32.mrf.mxu0
        %3208 = vmatprep.mubr.f32.mxu0 %v1623
        %3209 = vmatmul.mubr.f32.gmra.mxu0 %v1456
        %v3210 = vpop.f32.mrf.mxu0
        %v3211 = vadd.f32 %v2866, %v3210
        %v3212 = vpop.f32.mrf.mxu0
        %3213 = vmatprep.mubr.f32.mxu0 %v1625
        %3214 = vmatmul.mubr.f32.gmra.mxu0 %v1458
        %v3215 = vpop.f32.mrf.mxu0
        %v3216 = vadd.f32 %v2871, %v3215
        %v3217 = vpop.f32.mrf.mxu0
        %3218 = vmatprep.mubr.f32.mxu0 %v1627
        %3219 = vmatmul.mubr.f32.gmra.mxu0 %v1460
        %v3220 = vpop.f32.mrf.mxu0
        %v3221 = vadd.f32 %v2876, %v3220
        %v3222 = vpop.f32.mrf.mxu0
        %3223 = vmatprep.mubr.f32.mxu0 %v1629
        %3224 = vmatmul.mubr.f32.gmra.mxu0 %v1462
        %v3225 = vpop.f32.mrf.mxu0
        %v3226 = vadd.f32 %v2881, %v3225
        %v3227 = vpop.f32.mrf.mxu0
        %3228 = vmatprep.mubr.f32.mxu0 %v1631
        %3229 = vmatmul.mubr.f32.gmra.mxu0 %v1464
        %v3230 = vpop.f32.mrf.mxu0
        %v3231 = vadd.f32 %v2886, %v3230
        %v3232 = vpop.f32.mrf.mxu0
        %3233 = vmatprep.mubr.f32.mxu0 %v1633
        %3234 = vmatmul.mubr.f32.gmra.mxu0 %v1466
        %v3235 = vpop.f32.mrf.mxu0
        %v3236 = vadd.f32 %v2891, %v3235
        %v3237 = vpop.f32.mrf.mxu0
        %3238 = vmatprep.mubr.f32.mxu0 %v1635
        %3239 = vmatmul.mubr.f32.gmra.mxu0 %v1468
        %v3240 = vpop.f32.mrf.mxu0
        %v3241 = vadd.f32 %v2896, %v3240
        %v3242 = vpop.f32.mrf.mxu0
        %3243 = vmatprep.mubr.f32.mxu0 %v1637
        %3244 = vmatmul.mubr.f32.gmra.mxu0 %v1470
        %v3245 = vpop.f32.mrf.mxu0
        %v3246 = vadd.f32 %v2901, %v3245
        %v3247 = vpop.f32.mrf.mxu0
        %3248 = vmatprep.mubr.f32.mxu0 %v1639
        %3249 = vmatmul.mubr.f32.gmra.mxu0 %v1472
        %v3250 = vpop.f32.mrf.mxu0
        %v3251 = vadd.f32 %v2906, %v3250
        %v3252 = vpop.f32.mrf.mxu0
        %3253 = vmatprep.mubr.f32.mxu0 %v1641
        %3254 = vmatmul.mubr.f32.gmra.mxu0 %v1474
        %v3255 = vpop.f32.mrf.mxu0
        %v3256 = vadd.f32 %v2911, %v3255
        %v3257 = vpop.f32.mrf.mxu0
        %3258 = vmatprep.mubr.f32.mxu0 %v1643
        %3259 = vmatmul.mubr.f32.gmra.mxu0 %v1476
        %v3260 = vpop.f32.mrf.mxu0
        %v3261 = vadd.f32 %v2916, %v3260
        %v3262 = vpop.f32.mrf.mxu0
        %3263 = vmatprep.mubr.f32.mxu0 %v1642
        %3264 = vmatmul.mubr.f32.gmra.mxu0 %v1475
        %v3265 = vpop.f32.mrf.mxu0
        %v3266 = vadd.f32 %v2921, %v3265
        %v3267 = vpop.f32.mrf.mxu0
        %3268 = vdwg.mxu0
        %3269 = vmatprep.subr.mxu0 0.0
        %3270 = vmatpush1.msra.mxu0 %v2201
        %3271 = vmatprep.subr.mxu0 0.0
        %3272 = vmatpush1.msra.mxu0 %v2200
        %3273 = vmatprep.subr.mxu0 0.0
        %3274 = vmatpush1.msra.mxu0 %v2199
        %3275 = vmatprep.subr.mxu0 0.0
        %3276 = vmatpush1.msra.mxu0 %v2198
        %3277 = vmatprep.subr.mxu0 0.0
        %3278 = vmatpush1.msra.mxu0 %v2197
        %3279 = vmatprep.subr.mxu0 0.0
        %3280 = vmatpush1.msra.mxu0 %v2196
        %3281 = vmatprep.subr.mxu0 0.0
        %3282 = vmatpush1.msra.mxu0 %v2195
        %3283 = vmatprep.subr.mxu0 0.0
        %3284 = vmatpush1.msra.mxu0 %v2194
        %3285 = vmatprep.subr.mxu0 0.0
        %3286 = vmatpush1.msra.mxu0 %v2193
        %3287 = vmatprep.subr.mxu0 0.0
        %3288 = vmatpush1.msra.mxu0 %v2192
        %3289 = vmatprep.subr.mxu0 0.0
        %3290 = vmatpush1.msra.mxu0 %v2191
        %3291 = vmatprep.subr.mxu0 0.0
        %3292 = vmatpush1.msra.mxu0 %v2190
        %3293 = vmatprep.subr.mxu0 0.0
        %3294 = vmatpush1.msra.mxu0 %v2189
        %3295 = vmatprep.subr.mxu0 0.0
        %3296 = vmatpush1.msra.mxu0 %v2188
        %3297 = vmatprep.subr.mxu0 0.0
        %3298 = vmatpush1.msra.mxu0 %v2187
        %3299 = vmatprep.subr.mxu0 0.0
        %3300 = vmatpush1.msra.mxu0 %v2186
        %3301 = vmatprep.subr.mxu0 0.0
        %3302 = vmatpush2.msra.mxu0 %v2217
        %3303 = vmatprep.subr.mxu0 0.0
        %3304 = vmatpush2.msra.mxu0 %v2216
        %3305 = vmatprep.subr.mxu0 0.0
        %3306 = vmatpush2.msra.mxu0 %v2215
        %3307 = vmatprep.subr.mxu0 0.0
        %3308 = vmatpush2.msra.mxu0 %v2214
        %3309 = vmatprep.subr.mxu0 0.0
        %3310 = vmatpush2.msra.mxu0 %v2213
        %3311 = vmatprep.subr.mxu0 0.0
        %3312 = vmatpush2.msra.mxu0 %v2212
        %3313 = vmatprep.subr.mxu0 0.0
        %3314 = vmatpush2.msra.mxu0 %v2211
        %3315 = vmatprep.subr.mxu0 0.0
        %3316 = vmatpush2.msra.mxu0 %v2210
        %3317 = vmatprep.subr.mxu0 0.0
        %3318 = vmatpush2.msra.mxu0 %v2209
        %3319 = vmatprep.subr.mxu0 0.0
        %3320 = vmatpush2.msra.mxu0 %v2208
        %3321 = vmatprep.subr.mxu0 0.0
        %3322 = vmatpush2.msra.mxu0 %v2207
        %3323 = vmatprep.subr.mxu0 0.0
        %3324 = vmatpush2.msra.mxu0 %v2206
        %3325 = vmatprep.subr.mxu0 0.0
        %3326 = vmatpush2.msra.mxu0 %v2205
        %3327 = vmatprep.subr.mxu0 0.0
        %3328 = vmatpush2.msra.mxu0 %v2204
        %3329 = vmatprep.subr.mxu0 0.0
        %3330 = vmatpush2.msra.mxu0 %v2203
        %3331 = vmatprep.subr.mxu0 0.0
        %3332 = vmatpush2.msra.mxu0 %v2202
        %3333 = vmatprep.mubr.f32.mxu0 %v1758
        %3334 = vmatmul.mubr.f32.gmra.mxu0 %v862
        %v3335 = vpop.f32.mrf.mxu0
        %v3336 = vadd.f32 %v2991, %v3335
        %v3337 = vpop.f32.mrf.mxu0
        %3338 = vmatprep.mubr.f32.mxu0 %v1760
        %3339 = vmatmul.mubr.f32.gmra.mxu0 %v863
        %v3340 = vpop.f32.mrf.mxu0
        %v3341 = vadd.f32 %v2996, %v3340
        %v3342 = vpop.f32.mrf.mxu0
        %3343 = vmatprep.mubr.f32.mxu0 %v1762
        %3344 = vmatmul.mubr.f32.gmra.mxu0 %v864
        %v3345 = vpop.f32.mrf.mxu0
        %v3346 = vadd.f32 %v3001, %v3345
        %v3347 = vpop.f32.mrf.mxu0
        %3348 = vmatprep.mubr.f32.mxu0 %v1764
        %3349 = vmatmul.mubr.f32.gmra.mxu0 %v865
        %v3350 = vpop.f32.mrf.mxu0
        %v3351 = vadd.f32 %v3006, %v3350
        %v3352 = vpop.f32.mrf.mxu0
        %3353 = vmatprep.mubr.f32.mxu0 %v1766
        %3354 = vmatmul.mubr.f32.gmra.mxu0 %v866
        %v3355 = vpop.f32.mrf.mxu0
        %v3356 = vadd.f32 %v3011, %v3355
        %v3357 = vpop.f32.mrf.mxu0
        %3358 = vmatprep.mubr.f32.mxu0 %v1768
        %3359 = vmatmul.mubr.f32.gmra.mxu0 %v867
        %v3360 = vpop.f32.mrf.mxu0
        %v3361 = vadd.f32 %v3016, %v3360
        %v3362 = vpop.f32.mrf.mxu0
        %3363 = vmatprep.mubr.f32.mxu0 %v1770
        %3364 = vmatmul.mubr.f32.gmra.mxu0 %v868
        %v3365 = vpop.f32.mrf.mxu0
        %v3366 = vadd.f32 %v3021, %v3365
        %v3367 = vpop.f32.mrf.mxu0
        %3368 = vmatprep.mubr.f32.mxu0 %v1772
        %3369 = vmatmul.mubr.f32.gmra.mxu0 %v869
        %v3370 = vpop.f32.mrf.mxu0
        %v3371 = vadd.f32 %v3026, %v3370
        %v3372 = vpop.f32.mrf.mxu0
        %3373 = vmatprep.mubr.f32.mxu0 %v1774
        %3374 = vmatmul.mubr.f32.gmra.mxu0 %v870
        %v3375 = vpop.f32.mrf.mxu0
        %v3376 = vadd.f32 %v3031, %v3375
        %v3377 = vpop.f32.mrf.mxu0
        %3378 = vmatprep.mubr.f32.mxu0 %v1776
        %3379 = vmatmul.mubr.f32.gmra.mxu0 %v871
        %v3380 = vpop.f32.mrf.mxu0
        %v3381 = vadd.f32 %v3036, %v3380
        %v3382 = vpop.f32.mrf.mxu0
        %3383 = vmatprep.mubr.f32.mxu0 %v1778
        %3384 = vmatmul.mubr.f32.gmra.mxu0 %v872
        %v3385 = vpop.f32.mrf.mxu0
        %v3386 = vadd.f32 %v3041, %v3385
        %v3387 = vpop.f32.mrf.mxu0
        %3388 = vmatprep.mubr.f32.mxu0 %v1780
        %3389 = vmatmul.mubr.f32.gmra.mxu0 %v873
        %v3390 = vpop.f32.mrf.mxu0
        %v3391 = vadd.f32 %v3046, %v3390
        %v3392 = vpop.f32.mrf.mxu0
        %3393 = vmatprep.mubr.f32.mxu0 %v1782
        %3394 = vmatmul.mubr.f32.gmra.mxu0 %v874
        %v3395 = vpop.f32.mrf.mxu0
        %v3396 = vadd.f32 %v3051, %v3395
        %v3397 = vpop.f32.mrf.mxu0
        %3398 = vmatprep.mubr.f32.mxu0 %v1784
        %3399 = vmatmul.mubr.f32.gmra.mxu0 %v875
        %v3400 = vpop.f32.mrf.mxu0
        %v3401 = vadd.f32 %v3056, %v3400
        %v3402 = vpop.f32.mrf.mxu0
        %3403 = vmatprep.mubr.f32.mxu0 %v1786
        %3404 = vmatmul.mubr.f32.gmra.mxu0 %v876
        %v3405 = vpop.f32.mrf.mxu0
        %v3406 = vadd.f32 %v3061, %v3405
        %v3407 = vpop.f32.mrf.mxu0
        %3408 = vmatprep.mubr.f32.mxu0 %v1788
        %3409 = vmatmul.mubr.f32.gmra.mxu0 %v877
        %v3410 = vpop.f32.mrf.mxu0
        %v3411 = vadd.f32 %v3066, %v3410
        %v3412 = vpop.f32.mrf.mxu0
        %3413 = vmatprep.mubr.f32.mxu0 %v1790
        %3414 = vmatmul.mubr.f32.gmra.mxu0 %v878
        %v3415 = vpop.f32.mrf.mxu0
        %v3416 = vadd.f32 %v3071, %v3415
        %v3417 = vpop.f32.mrf.mxu0
        %3418 = vmatprep.mubr.f32.mxu0 %v1792
        %3419 = vmatmul.mubr.f32.gmra.mxu0 %v879
        %v3420 = vpop.f32.mrf.mxu0
        %v3421 = vadd.f32 %v3076, %v3420
        %v3422 = vpop.f32.mrf.mxu0
        %3423 = vmatprep.mubr.f32.mxu0 %v1794
        %3424 = vmatmul.mubr.f32.gmra.mxu0 %v880
        %v3425 = vpop.f32.mrf.mxu0
        %v3426 = vadd.f32 %v3081, %v3425
        %v3427 = vpop.f32.mrf.mxu0
        %3428 = vmatprep.mubr.f32.mxu0 %v1796
        %3429 = vmatmul.mubr.f32.gmra.mxu0 %v881
        %v3430 = vpop.f32.mrf.mxu0
        %v3431 = vadd.f32 %v3086, %v3430
        %v3432 = vpop.f32.mrf.mxu0
        %3433 = vmatprep.mubr.f32.mxu0 %v1798
        %3434 = vmatmul.mubr.f32.gmra.mxu0 %v882
        %v3435 = vpop.f32.mrf.mxu0
        %v3436 = vadd.f32 %v3091, %v3435
        %v3437 = vpop.f32.mrf.mxu0
        %3438 = vmatprep.mubr.f32.mxu0 %v1800
        %3439 = vmatmul.mubr.f32.gmra.mxu0 %v883
        %v3440 = vpop.f32.mrf.mxu0
        %v3441 = vadd.f32 %v3096, %v3440
        %v3442 = vpop.f32.mrf.mxu0
        %3443 = vmatprep.mubr.f32.mxu0 %v1802
        %3444 = vmatmul.mubr.f32.gmra.mxu0 %v884
        %v3445 = vpop.f32.mrf.mxu0
        %v3446 = vadd.f32 %v3101, %v3445
        %v3447 = vpop.f32.mrf.mxu0
        %3448 = vmatprep.mubr.f32.mxu0 %v1804
        %3449 = vmatmul.mubr.f32.gmra.mxu0 %v885
        %v3450 = vpop.f32.mrf.mxu0
        %v3451 = vadd.f32 %v3106, %v3450
        %v3452 = vpop.f32.mrf.mxu0
        %3453 = vmatprep.mubr.f32.mxu0 %v1806
        %3454 = vmatmul.mubr.f32.gmra.mxu0 %v886
        %v3455 = vpop.f32.mrf.mxu0
        %v3456 = vadd.f32 %v3111, %v3455
        %v3457 = vpop.f32.mrf.mxu0
        %3458 = vmatprep.mubr.f32.mxu0 %v1808
        %3459 = vmatmul.mubr.f32.gmra.mxu0 %v887
        %v3460 = vpop.f32.mrf.mxu0
        %v3461 = vadd.f32 %v3116, %v3460
        %v3462 = vpop.f32.mrf.mxu0
        %3463 = vmatprep.mubr.f32.mxu0 %v1810
        %3464 = vmatmul.mubr.f32.gmra.mxu0 %v888
        %v3465 = vpop.f32.mrf.mxu0
        %v3466 = vadd.f32 %v3121, %v3465
        %v3467 = vpop.f32.mrf.mxu0
        %3468 = vmatprep.mubr.f32.mxu0 %v1812
        %3469 = vmatmul.mubr.f32.gmra.mxu0 %v889
        %v3470 = vpop.f32.mrf.mxu0
        %v3471 = vadd.f32 %v3126, %v3470
        %v3472 = vpop.f32.mrf.mxu0
        %3473 = vmatprep.mubr.f32.mxu0 %v1814
        %3474 = vmatmul.mubr.f32.gmra.mxu0 %v890
        %v3475 = vpop.f32.mrf.mxu0
        %v3476 = vadd.f32 %v3131, %v3475
        %v3477 = vpop.f32.mrf.mxu0
        %3478 = vmatprep.mubr.f32.mxu0 %v1816
        %3479 = vmatmul.mubr.f32.gmra.mxu0 %v891
        %v3480 = vpop.f32.mrf.mxu0
        %v3481 = vadd.f32 %v3136, %v3480
        %v3482 = vpop.f32.mrf.mxu0
        %3483 = vmatprep.mubr.f32.mxu0 %v1818
        %3484 = vmatmul.mubr.f32.gmra.mxu0 %v892
        %v3485 = vpop.f32.mrf.mxu0
        %v3486 = vadd.f32 %v3141, %v3485
        %v3487 = vpop.f32.mrf.mxu0
        %3488 = vmatprep.mubr.f32.mxu0 %v1820
        %3489 = vmatmul.mubr.f32.gmra.mxu0 %v893
        %v3490 = vpop.f32.mrf.mxu0
        %v3491 = vadd.f32 %v3146, %v3490
        %v3492 = vpop.f32.mrf.mxu0
        %3493 = vmatprep.mubr.f32.mxu0 %v1822
        %3494 = vmatmul.mubr.f32.gmra.mxu0 %v894
        %v3495 = vpop.f32.mrf.mxu0
        %v3496 = vadd.f32 %v3151, %v3495
        %v3497 = vpop.f32.mrf.mxu0
        %3498 = vmatprep.mubr.f32.mxu0 %v1824
        %3499 = vmatmul.mubr.f32.gmra.mxu0 %v895
        %v3500 = vpop.f32.mrf.mxu0
        %v3501 = vadd.f32 %v3156, %v3500
        %v3502 = vpop.f32.mrf.mxu0
        %3503 = vmatprep.mubr.f32.mxu0 %v1826
        %3504 = vmatmul.mubr.f32.gmra.mxu0 %v896
        %v3505 = vpop.f32.mrf.mxu0
        %v3506 = vadd.f32 %v3161, %v3505
        %v3507 = vpop.f32.mrf.mxu0
        %3508 = vmatprep.mubr.f32.mxu0 %v1828
        %3509 = vmatmul.mubr.f32.gmra.mxu0 %v897
        %v3510 = vpop.f32.mrf.mxu0
        %v3511 = vadd.f32 %v3166, %v3510
        %v3512 = vpop.f32.mrf.mxu0
        %3513 = vmatprep.mubr.f32.mxu0 %v1830
        %3514 = vmatmul.mubr.f32.gmra.mxu0 %v898
        %v3515 = vpop.f32.mrf.mxu0
        %v3516 = vadd.f32 %v3171, %v3515
        %v3517 = vpop.f32.mrf.mxu0
        %3518 = vmatprep.mubr.f32.mxu0 %v1832
        %3519 = vmatmul.mubr.f32.gmra.mxu0 %v899
        %v3520 = vpop.f32.mrf.mxu0
        %v3521 = vadd.f32 %v3176, %v3520
        %v3522 = vpop.f32.mrf.mxu0
        %3523 = vmatprep.mubr.f32.mxu0 %v1834
        %3524 = vmatmul.mubr.f32.gmra.mxu0 %v900
        %v3525 = vpop.f32.mrf.mxu0
        %v3526 = vadd.f32 %v3181, %v3525
        %v3527 = vpop.f32.mrf.mxu0
        %3528 = vmatprep.mubr.f32.mxu0 %v1836
        %3529 = vmatmul.mubr.f32.gmra.mxu0 %v901
        %v3530 = vpop.f32.mrf.mxu0
        %v3531 = vadd.f32 %v3186, %v3530
        %v3532 = vpop.f32.mrf.mxu0
        %3533 = vmatprep.mubr.f32.mxu0 %v1838
        %3534 = vmatmul.mubr.f32.gmra.mxu0 %v902
        %v3535 = vpop.f32.mrf.mxu0
        %v3536 = vadd.f32 %v3191, %v3535
        %v3537 = vpop.f32.mrf.mxu0
        %3538 = vmatprep.mubr.f32.mxu0 %v1840
        %3539 = vmatmul.mubr.f32.gmra.mxu0 %v903
        %v3540 = vpop.f32.mrf.mxu0
        %v3541 = vadd.f32 %v3196, %v3540
        %v3542 = vpop.f32.mrf.mxu0
        %3543 = vmatprep.mubr.f32.mxu0 %v1842
        %3544 = vmatmul.mubr.f32.gmra.mxu0 %v904
        %v3545 = vpop.f32.mrf.mxu0
        %v3546 = vadd.f32 %v3201, %v3545
        %v3547 = vpop.f32.mrf.mxu0
        %3548 = vmatprep.mubr.f32.mxu0 %v1844
        %3549 = vmatmul.mubr.f32.gmra.mxu0 %v905
        %v3550 = vpop.f32.mrf.mxu0
        %v3551 = vadd.f32 %v3206, %v3550
        %v3552 = vpop.f32.mrf.mxu0
        %3553 = vmatprep.mubr.f32.mxu0 %v1846
        %3554 = vmatmul.mubr.f32.gmra.mxu0 %v906
        %v3555 = vpop.f32.mrf.mxu0
        %v3556 = vadd.f32 %v3211, %v3555
        %v3557 = vpop.f32.mrf.mxu0
        %3558 = vmatprep.mubr.f32.mxu0 %v1848
        %3559 = vmatmul.mubr.f32.gmra.mxu0 %v907
        %v3560 = vpop.f32.mrf.mxu0
        %v3561 = vadd.f32 %v3216, %v3560
        %v3562 = vpop.f32.mrf.mxu0
        %3563 = vmatprep.mubr.f32.mxu0 %v1850
        %3564 = vmatmul.mubr.f32.gmra.mxu0 %v908
        %v3565 = vpop.f32.mrf.mxu0
        %v3566 = vadd.f32 %v3221, %v3565
        %v3567 = vpop.f32.mrf.mxu0
        %3568 = vmatprep.mubr.f32.mxu0 %v1852
        %3569 = vmatmul.mubr.f32.gmra.mxu0 %v909
        %v3570 = vpop.f32.mrf.mxu0
        %v3571 = vadd.f32 %v3226, %v3570
        %v3572 = vpop.f32.mrf.mxu0
        %3573 = vmatprep.mubr.f32.mxu0 %v1854
        %3574 = vmatmul.mubr.f32.gmra.mxu0 %v910
        %v3575 = vpop.f32.mrf.mxu0
        %v3576 = vadd.f32 %v3231, %v3575
        %v3577 = vpop.f32.mrf.mxu0
        %3578 = vmatprep.mubr.f32.mxu0 %v1856
        %3579 = vmatmul.mubr.f32.gmra.mxu0 %v911
        %v3580 = vpop.f32.mrf.mxu0
        %v3581 = vadd.f32 %v3236, %v3580
        %v3582 = vpop.f32.mrf.mxu0
        %3583 = vmatprep.mubr.f32.mxu0 %v1858
        %3584 = vmatmul.mubr.f32.gmra.mxu0 %v912
        %v3585 = vpop.f32.mrf.mxu0
        %v3586 = vadd.f32 %v3241, %v3585
        %v3587 = vpop.f32.mrf.mxu0
        %3588 = vmatprep.mubr.f32.mxu0 %v1860
        %3589 = vmatmul.mubr.f32.gmra.mxu0 %v913
        %v3590 = vpop.f32.mrf.mxu0
        %v3591 = vadd.f32 %v3246, %v3590
        %v3592 = vpop.f32.mrf.mxu0
        %3593 = vmatprep.mubr.f32.mxu0 %v1862
        %3594 = vmatmul.mubr.f32.gmra.mxu0 %v914
        %v3595 = vpop.f32.mrf.mxu0
        %v3596 = vadd.f32 %v3251, %v3595
        %v3597 = vpop.f32.mrf.mxu0
        %3598 = vmatprep.mubr.f32.mxu0 %v1864
        %3599 = vmatmul.mubr.f32.gmra.mxu0 %v915
        %v3600 = vpop.f32.mrf.mxu0
        %v3601 = vadd.f32 %v3256, %v3600
        %v3602 = vpop.f32.mrf.mxu0
        %3603 = vmatprep.mubr.f32.mxu0 %v1866
        %3604 = vmatmul.mubr.f32.gmra.mxu0 %v916
        %v3605 = vpop.f32.mrf.mxu0
        %v3606 = vadd.f32 %v3261, %v3605
        %v3607 = vpop.f32.mrf.mxu0
        %3608 = vmatprep.mubr.f32.mxu0 %v1865
        %3609 = vmatmul.mubr.f32.gmra.mxu0 %v917
        %v3610 = vpop.f32.mrf.mxu0
        %v3611 = vadd.f32 %v3266, %v3610
        %v3612 = vpop.f32.mrf.mxu0
        %3613 = vdwg.mxu0
        %3614 = vmatprep.subr.mxu0 0.0
        %3615 = vmatpush1.msra.mxu0 %v2233
        %3616 = vmatprep.subr.mxu0 0.0
        %3617 = vmatpush1.msra.mxu0 %v2232
        %3618 = vmatprep.subr.mxu0 0.0
        %3619 = vmatpush1.msra.mxu0 %v2231
        %3620 = vmatprep.subr.mxu0 0.0
        %3621 = vmatpush1.msra.mxu0 %v2230
        %3622 = vmatprep.subr.mxu0 0.0
        %3623 = vmatpush1.msra.mxu0 %v2229
        %3624 = vmatprep.subr.mxu0 0.0
        %3625 = vmatpush1.msra.mxu0 %v2228
        %3626 = vmatprep.subr.mxu0 0.0
        %3627 = vmatpush1.msra.mxu0 %v2227
        %3628 = vmatprep.subr.mxu0 0.0
        %3629 = vmatpush1.msra.mxu0 %v2226
        %3630 = vmatprep.subr.mxu0 0.0
        %3631 = vmatpush1.msra.mxu0 %v2225
        %3632 = vmatprep.subr.mxu0 0.0
        %3633 = vmatpush1.msra.mxu0 %v2224
        %3634 = vmatprep.subr.mxu0 0.0
        %3635 = vmatpush1.msra.mxu0 %v2223
        %3636 = vmatprep.subr.mxu0 0.0
        %3637 = vmatpush1.msra.mxu0 %v2222
        %3638 = vmatprep.subr.mxu0 0.0
        %3639 = vmatpush1.msra.mxu0 %v2221
        %3640 = vmatprep.subr.mxu0 0.0
        %3641 = vmatpush1.msra.mxu0 %v2220
        %3642 = vmatprep.subr.mxu0 0.0
        %3643 = vmatpush1.msra.mxu0 %v2219
        %3644 = vmatprep.subr.mxu0 0.0
        %3645 = vmatpush1.msra.mxu0 %v2218
        %3646 = vmatprep.subr.mxu0 0.0
        %3647 = vmatpush2.msra.mxu0 0.0
        %3648 = vmatprep.subr.mxu0 0.0
        %3649 = vmatpush2.msra.mxu0 0.0
        %3650 = vmatprep.subr.mxu0 0.0
        %3651 = vmatpush2.msra.mxu0 0.0
        %3652 = vmatprep.subr.mxu0 0.0
        %3653 = vmatpush2.msra.mxu0 0.0
        %3654 = vmatprep.subr.mxu0 0.0
        %3655 = vmatpush2.msra.mxu0 0.0
        %3656 = vmatprep.subr.mxu0 0.0
        %3657 = vmatpush2.msra.mxu0 0.0
        %3658 = vmatprep.subr.mxu0 0.0
        %3659 = vmatpush2.msra.mxu0 0.0
        %3660 = vmatprep.subr.mxu0 0.0
        %3661 = vmatpush2.msra.mxu0 0.0
        %3662 = vmatprep.subr.mxu0 0.0
        %3663 = vmatpush2.msra.mxu0 0.0
        %3664 = vmatprep.subr.mxu0 0.0
        %3665 = vmatpush2.msra.mxu0 0.0
        %3666 = vmatprep.subr.mxu0 0.0
        %3667 = vmatpush2.msra.mxu0 0.0
        %3668 = vmatprep.subr.mxu0 0.0
        %3669 = vmatpush2.msra.mxu0 0.0
        %3670 = vmatprep.subr.mxu0 0.0
        %3671 = vmatpush2.msra.mxu0 0.0
        %3672 = vmatprep.subr.mxu0 0.0
        %3673 = vmatpush2.msra.mxu0 0.0
        %3674 = vmatprep.subr.mxu0 0.0
        %3675 = vmatpush2.msra.mxu0 0.0
        %3676 = vmatprep.subr.mxu0 0.0
        %3677 = vmatpush2.msra.mxu0 0.0
        %3678 = vmatprep.mubr.f32.mxu0 0.0
        %3679 = vmatmul.mubr.f32.gmra.mxu0 %v1925
        %v3680 = vpop.f32.mrf.mxu0
        %v3681 = vadd.f32 %v3336, %v3680
        %v3682 = vpop.f32.mrf.mxu0
        %3683 = vmatprep.mubr.f32.mxu0 0.0
        %3684 = vmatmul.mubr.f32.gmra.mxu0 %v1927
        %v3685 = vpop.f32.mrf.mxu0
        %v3686 = vadd.f32 %v3341, %v3685
        %v3687 = vpop.f32.mrf.mxu0
        %3688 = vmatprep.mubr.f32.mxu0 0.0
        %3689 = vmatmul.mubr.f32.gmra.mxu0 %v1929
        %v3690 = vpop.f32.mrf.mxu0
        %v3691 = vadd.f32 %v3346, %v3690
        %v3692 = vpop.f32.mrf.mxu0
        %3693 = vmatprep.mubr.f32.mxu0 0.0
        %3694 = vmatmul.mubr.f32.gmra.mxu0 %v1931
        %v3695 = vpop.f32.mrf.mxu0
        %v3696 = vadd.f32 %v3351, %v3695
        %v3697 = vpop.f32.mrf.mxu0
        %3698 = vmatprep.mubr.f32.mxu0 0.0
        %3699 = vmatmul.mubr.f32.gmra.mxu0 %v1933
        %v3700 = vpop.f32.mrf.mxu0
        %v3701 = vadd.f32 %v3356, %v3700
        %v3702 = vpop.f32.mrf.mxu0
        %3703 = vmatprep.mubr.f32.mxu0 0.0
        %3704 = vmatmul.mubr.f32.gmra.mxu0 %v1935
        %v3705 = vpop.f32.mrf.mxu0
        %v3706 = vadd.f32 %v3361, %v3705
        %v3707 = vpop.f32.mrf.mxu0
        %3708 = vmatprep.mubr.f32.mxu0 0.0
        %3709 = vmatmul.mubr.f32.gmra.mxu0 %v1937
        %v3710 = vpop.f32.mrf.mxu0
        %v3711 = vadd.f32 %v3366, %v3710
        %v3712 = vpop.f32.mrf.mxu0
        %3713 = vmatprep.mubr.f32.mxu0 0.0
        %3714 = vmatmul.mubr.f32.gmra.mxu0 %v1939
        %v3715 = vpop.f32.mrf.mxu0
        %v3716 = vadd.f32 %v3371, %v3715
        %v3717 = vpop.f32.mrf.mxu0
        %3718 = vmatprep.mubr.f32.mxu0 0.0
        %3719 = vmatmul.mubr.f32.gmra.mxu0 %v1941
        %v3720 = vpop.f32.mrf.mxu0
        %v3721 = vadd.f32 %v3376, %v3720
        %v3722 = vpop.f32.mrf.mxu0
        %3723 = vmatprep.mubr.f32.mxu0 0.0
        %3724 = vmatmul.mubr.f32.gmra.mxu0 %v1943
        %v3725 = vpop.f32.mrf.mxu0
        %v3726 = vadd.f32 %v3381, %v3725
        %v3727 = vpop.f32.mrf.mxu0
        %3728 = vmatprep.mubr.f32.mxu0 0.0
        %3729 = vmatmul.mubr.f32.gmra.mxu0 %v1945
        %v3730 = vpop.f32.mrf.mxu0
        %v3731 = vadd.f32 %v3386, %v3730
        %v3732 = vpop.f32.mrf.mxu0
        %3733 = vmatprep.mubr.f32.mxu0 0.0
        %3734 = vmatmul.mubr.f32.gmra.mxu0 %v1947
        %v3735 = vpop.f32.mrf.mxu0
        %v3736 = vadd.f32 %v3391, %v3735
        %v3737 = vpop.f32.mrf.mxu0
        %3738 = vmatprep.mubr.f32.mxu0 0.0
        %3739 = vmatmul.mubr.f32.gmra.mxu0 %v1949
        %v3740 = vpop.f32.mrf.mxu0
        %v3741 = vadd.f32 %v3396, %v3740
        %v3742 = vpop.f32.mrf.mxu0
        %3743 = vmatprep.mubr.f32.mxu0 0.0
        %3744 = vmatmul.mubr.f32.gmra.mxu0 %v1951
        %v3745 = vpop.f32.mrf.mxu0
        %v3746 = vadd.f32 %v3401, %v3745
        %v3747 = vpop.f32.mrf.mxu0
        %3748 = vmatprep.mubr.f32.mxu0 0.0
        %3749 = vmatmul.mubr.f32.gmra.mxu0 %v1953
        %v3750 = vpop.f32.mrf.mxu0
        %v3751 = vadd.f32 %v3406, %v3750
        %v3752 = vpop.f32.mrf.mxu0
        %3753 = vmatprep.mubr.f32.mxu0 0.0
        %3754 = vmatmul.mubr.f32.gmra.mxu0 %v1955
        %v3755 = vpop.f32.mrf.mxu0
        %v3756 = vadd.f32 %v3411, %v3755
        %v3757 = vpop.f32.mrf.mxu0
        %3758 = vmatprep.mubr.f32.mxu0 0.0
        %3759 = vmatmul.mubr.f32.gmra.mxu0 %v1957
        %v3760 = vpop.f32.mrf.mxu0
        %v3761 = vadd.f32 %v3416, %v3760
        %v3762 = vpop.f32.mrf.mxu0
        %3763 = vmatprep.mubr.f32.mxu0 0.0
        %3764 = vmatmul.mubr.f32.gmra.mxu0 %v1959
        %v3765 = vpop.f32.mrf.mxu0
        %v3766 = vadd.f32 %v3421, %v3765
        %v3767 = vpop.f32.mrf.mxu0
        %3768 = vmatprep.mubr.f32.mxu0 0.0
        %3769 = vmatmul.mubr.f32.gmra.mxu0 %v1961
        %v3770 = vpop.f32.mrf.mxu0
        %v3771 = vadd.f32 %v3426, %v3770
        %v3772 = vpop.f32.mrf.mxu0
        %3773 = vmatprep.mubr.f32.mxu0 0.0
        %3774 = vmatmul.mubr.f32.gmra.mxu0 %v1963
        %v3775 = vpop.f32.mrf.mxu0
        %v3776 = vadd.f32 %v3431, %v3775
        %v3777 = vpop.f32.mrf.mxu0
        %3778 = vmatprep.mubr.f32.mxu0 0.0
        %3779 = vmatmul.mubr.f32.gmra.mxu0 %v1965
        %v3780 = vpop.f32.mrf.mxu0
        %v3781 = vadd.f32 %v3436, %v3780
        %v3782 = vpop.f32.mrf.mxu0
        %3783 = vmatprep.mubr.f32.mxu0 0.0
        %3784 = vmatmul.mubr.f32.gmra.mxu0 %v1967
        %v3785 = vpop.f32.mrf.mxu0
        %v3786 = vadd.f32 %v3441, %v3785
        %v3787 = vpop.f32.mrf.mxu0
        %3788 = vmatprep.mubr.f32.mxu0 0.0
        %3789 = vmatmul.mubr.f32.gmra.mxu0 %v1969
        %v3790 = vpop.f32.mrf.mxu0
        %v3791 = vadd.f32 %v3446, %v3790
        %v3792 = vpop.f32.mrf.mxu0
        %3793 = vmatprep.mubr.f32.mxu0 0.0
        %3794 = vmatmul.mubr.f32.gmra.mxu0 %v1971
        %v3795 = vpop.f32.mrf.mxu0
        %v3796 = vadd.f32 %v3451, %v3795
        %v3797 = vpop.f32.mrf.mxu0
        %3798 = vmatprep.mubr.f32.mxu0 0.0
        %3799 = vmatmul.mubr.f32.gmra.mxu0 %v1973
        %v3800 = vpop.f32.mrf.mxu0
        %v3801 = vadd.f32 %v3456, %v3800
        %v3802 = vpop.f32.mrf.mxu0
        %3803 = vmatprep.mubr.f32.mxu0 0.0
        %3804 = vmatmul.mubr.f32.gmra.mxu0 %v1975
        %v3805 = vpop.f32.mrf.mxu0
        %v3806 = vadd.f32 %v3461, %v3805
        %v3807 = vpop.f32.mrf.mxu0
        %3808 = vmatprep.mubr.f32.mxu0 0.0
        %3809 = vmatmul.mubr.f32.gmra.mxu0 %v1977
        %v3810 = vpop.f32.mrf.mxu0
        %v3811 = vadd.f32 %v3466, %v3810
        %v3812 = vpop.f32.mrf.mxu0
        %3813 = vmatprep.mubr.f32.mxu0 0.0
        %3814 = vmatmul.mubr.f32.gmra.mxu0 %v1979
        %v3815 = vpop.f32.mrf.mxu0
        %v3816 = vadd.f32 %v3471, %v3815
        %v3817 = vpop.f32.mrf.mxu0
        %3818 = vmatprep.mubr.f32.mxu0 0.0
        %3819 = vmatmul.mubr.f32.gmra.mxu0 %v1981
        %v3820 = vpop.f32.mrf.mxu0
        %v3821 = vadd.f32 %v3476, %v3820
        %v3822 = vpop.f32.mrf.mxu0
        %3823 = vmatprep.mubr.f32.mxu0 0.0
        %3824 = vmatmul.mubr.f32.gmra.mxu0 %v1983
        %v3825 = vpop.f32.mrf.mxu0
        %v3826 = vadd.f32 %v3481, %v3825
        %v3827 = vpop.f32.mrf.mxu0
        %3828 = vmatprep.mubr.f32.mxu0 0.0
        %3829 = vmatmul.mubr.f32.gmra.mxu0 %v1985
        %v3830 = vpop.f32.mrf.mxu0
        %v3831 = vadd.f32 %v3486, %v3830
        %v3832 = vpop.f32.mrf.mxu0
        %3833 = vmatprep.mubr.f32.mxu0 0.0
        %3834 = vmatmul.mubr.f32.gmra.mxu0 %v1987
        %v3835 = vpop.f32.mrf.mxu0
        %v3836 = vadd.f32 %v3491, %v3835
        %v3837 = vpop.f32.mrf.mxu0
        %3838 = vmatprep.mubr.f32.mxu0 0.0
        %3839 = vmatmul.mubr.f32.gmra.mxu0 %v1989
        %v3840 = vpop.f32.mrf.mxu0
        %v3841 = vadd.f32 %v3496, %v3840
        %v3842 = vpop.f32.mrf.mxu0
        %3843 = vmatprep.mubr.f32.mxu0 0.0
        %3844 = vmatmul.mubr.f32.gmra.mxu0 %v1991
        %v3845 = vpop.f32.mrf.mxu0
        %v3846 = vadd.f32 %v3501, %v3845
        %v3847 = vpop.f32.mrf.mxu0
        %3848 = vmatprep.mubr.f32.mxu0 0.0
        %3849 = vmatmul.mubr.f32.gmra.mxu0 %v1993
        %v3850 = vpop.f32.mrf.mxu0
        %v3851 = vadd.f32 %v3506, %v3850
        %v3852 = vpop.f32.mrf.mxu0
        %3853 = vmatprep.mubr.f32.mxu0 0.0
        %3854 = vmatmul.mubr.f32.gmra.mxu0 %v1995
        %v3855 = vpop.f32.mrf.mxu0
        %v3856 = vadd.f32 %v3511, %v3855
        %v3857 = vpop.f32.mrf.mxu0
        %3858 = vmatprep.mubr.f32.mxu0 0.0
        %3859 = vmatmul.mubr.f32.gmra.mxu0 %v1997
        %v3860 = vpop.f32.mrf.mxu0
        %v3861 = vadd.f32 %v3516, %v3860
        %v3862 = vpop.f32.mrf.mxu0
        %3863 = vmatprep.mubr.f32.mxu0 0.0
        %3864 = vmatmul.mubr.f32.gmra.mxu0 %v1999
        %v3865 = vpop.f32.mrf.mxu0
        %v3866 = vadd.f32 %v3521, %v3865
        %v3867 = vpop.f32.mrf.mxu0
        %3868 = vmatprep.mubr.f32.mxu0 0.0
        %3869 = vmatmul.mubr.f32.gmra.mxu0 %v2001
        %v3870 = vpop.f32.mrf.mxu0
        %v3871 = vadd.f32 %v3526, %v3870
        %v3872 = vpop.f32.mrf.mxu0
        %3873 = vmatprep.mubr.f32.mxu0 0.0
        %3874 = vmatmul.mubr.f32.gmra.mxu0 %v2003
        %v3875 = vpop.f32.mrf.mxu0
        %v3876 = vadd.f32 %v3531, %v3875
        %v3877 = vpop.f32.mrf.mxu0
        %3878 = vmatprep.mubr.f32.mxu0 0.0
        %3879 = vmatmul.mubr.f32.gmra.mxu0 %v2005
        %v3880 = vpop.f32.mrf.mxu0
        %v3881 = vadd.f32 %v3536, %v3880
        %v3882 = vpop.f32.mrf.mxu0
        %3883 = vmatprep.mubr.f32.mxu0 0.0
        %3884 = vmatmul.mubr.f32.gmra.mxu0 %v2007
        %v3885 = vpop.f32.mrf.mxu0
        %v3886 = vadd.f32 %v3541, %v3885
        %v3887 = vpop.f32.mrf.mxu0
        %3888 = vmatprep.mubr.f32.mxu0 0.0
        %3889 = vmatmul.mubr.f32.gmra.mxu0 %v2009
        %v3890 = vpop.f32.mrf.mxu0
        %v3891 = vadd.f32 %v3546, %v3890
        %v3892 = vpop.f32.mrf.mxu0
        %3893 = vmatprep.mubr.f32.mxu0 0.0
        %3894 = vmatmul.mubr.f32.gmra.mxu0 %v2011
        %v3895 = vpop.f32.mrf.mxu0
        %v3896 = vadd.f32 %v3551, %v3895
        %v3897 = vpop.f32.mrf.mxu0
        %3898 = vmatprep.mubr.f32.mxu0 0.0
        %3899 = vmatmul.mubr.f32.gmra.mxu0 %v2013
        %v3900 = vpop.f32.mrf.mxu0
        %v3901 = vadd.f32 %v3556, %v3900
        %v3902 = vpop.f32.mrf.mxu0
        %3903 = vmatprep.mubr.f32.mxu0 0.0
        %3904 = vmatmul.mubr.f32.gmra.mxu0 %v2015
        %v3905 = vpop.f32.mrf.mxu0
        %v3906 = vadd.f32 %v3561, %v3905
        %v3907 = vpop.f32.mrf.mxu0
        %3908 = vmatprep.mubr.f32.mxu0 0.0
        %3909 = vmatmul.mubr.f32.gmra.mxu0 %v2017
        %v3910 = vpop.f32.mrf.mxu0
        %v3911 = vadd.f32 %v3566, %v3910
        %v3912 = vpop.f32.mrf.mxu0
        %3913 = vmatprep.mubr.f32.mxu0 0.0
        %3914 = vmatmul.mubr.f32.gmra.mxu0 %v2019
        %v3915 = vpop.f32.mrf.mxu0
        %v3916 = vadd.f32 %v3571, %v3915
        %v3917 = vpop.f32.mrf.mxu0
        %3918 = vmatprep.mubr.f32.mxu0 0.0
        %3919 = vmatmul.mubr.f32.gmra.mxu0 %v2021
        %v3920 = vpop.f32.mrf.mxu0
        %v3921 = vadd.f32 %v3576, %v3920
        %v3922 = vpop.f32.mrf.mxu0
        %3923 = vmatprep.mubr.f32.mxu0 0.0
        %3924 = vmatmul.mubr.f32.gmra.mxu0 %v2023
        %v3925 = vpop.f32.mrf.mxu0
        %v3926 = vadd.f32 %v3581, %v3925
        %v3927 = vpop.f32.mrf.mxu0
        %3928 = vmatprep.mubr.f32.mxu0 0.0
        %3929 = vmatmul.mubr.f32.gmra.mxu0 %v2025
        %v3930 = vpop.f32.mrf.mxu0
        %v3931 = vadd.f32 %v3586, %v3930
        %v3932 = vpop.f32.mrf.mxu0
        %3933 = vmatprep.mubr.f32.mxu0 0.0
        %3934 = vmatmul.mubr.f32.gmra.mxu0 %v2027
        %v3935 = vpop.f32.mrf.mxu0
        %v3936 = vadd.f32 %v3591, %v3935
        %v3937 = vpop.f32.mrf.mxu0
        %3938 = vmatprep.mubr.f32.mxu0 0.0
        %3939 = vmatmul.mubr.f32.gmra.mxu0 %v2029
        %v3940 = vpop.f32.mrf.mxu0
        %v3941 = vadd.f32 %v3596, %v3940
        %v3942 = vpop.f32.mrf.mxu0
        %3943 = vmatprep.mubr.f32.mxu0 0.0
        %3944 = vmatmul.mubr.f32.gmra.mxu0 %v2031
        %v3945 = vpop.f32.mrf.mxu0
        %v3946 = vadd.f32 %v3601, %v3945
        %v3947 = vpop.f32.mrf.mxu0
        %3948 = vmatprep.mubr.f32.mxu0 0.0
        %3949 = vmatmul.mubr.f32.gmra.mxu0 %v2033
        %v3950 = vpop.f32.mrf.mxu0
        %v3951 = vadd.f32 %v3606, %v3950
        %v3952 = vpop.f32.mrf.mxu0
        %3953 = vmatprep.mubr.f32.mxu0 0.0
        %3954 = vmatmul.mubr.f32.gmra.mxu0 %v2032
        %v3955 = vpop.f32.mrf.mxu0
        %v3956 = vadd.f32 %v3611, %v3955
        %v3957 = vpop.f32.mrf.mxu0
        %3958 = vdwg.mxu0
        %v3959 = vlaneseq
        %v3960 = vshrl.u32 %v3959, 7
        %v3961 = vadd.s32 %v3960, 8
        %v3962 = vadd.s32 %v3960, 16
        %v3963 = vadd.s32 %v3960, 24
        %v3964 = vadd.s32 %v3960, 32
        %v3965 = vadd.s32 %v3960, 40
        %v3966 = vadd.s32 %v3960, 48
        %v3967 = vadd.s32 %v3960, 56
        %v3968 = vadd.s32 %v3960, 64
        %v3969 = vadd.s32 %v3960, 72
        %v3970 = vadd.s32 %v3960, 80
        %v3971 = vadd.s32 %v3960, 88
        %v3972 = vadd.s32 %v3960, 96
        %v3973 = vadd.s32 %v3960, 104
        %v3974 = vadd.s32 %v3960, 112
        %v3975 = vadd.s32 %v3960, 120
        %v3976 = vadd.s32 %v3960, 128
        %v3977 = vadd.s32 %v3960, 136
        %v3978 = vadd.s32 %v3960, 144
        %v3979 = vadd.s32 %v3960, 152
        %v3980 = vadd.s32 %v3960, 160
        %v3981 = vadd.s32 %v3960, 168
        %v3982 = vadd.s32 %v3960, 176
        %v3983 = vadd.s32 %v3960, 184
        %v3984 = vadd.s32 %v3960, 192
        %v3985 = vadd.s32 %v3960, 200
        %v3986 = vadd.s32 %v3960, 208
        %v3987 = vadd.s32 %v3960, 216
        %v3988 = vadd.s32 %v3960, 224
        %v3989 = vadd.s32 %v3960, 232
        %v3990 = vadd.s32 %v3960, 240
        %v3991 = vadd.s32 %v3960, 248
        %v3992 = vadd.s32 %v3960, 256
        %v3993 = vadd.s32 %v3960, 264
        %v3994 = vadd.s32 %v3960, 272
        %v3995 = vadd.s32 %v3960, 280
        %v3996 = vadd.s32 %v3960, 288
        %v3997 = vadd.s32 %v3960, 296
        %v3998 = vadd.s32 %v3960, 304
        %v3999 = vadd.s32 %v3960, 312
        %v4000 = vadd.s32 %v3960, 320
        %v4001 = vadd.s32 %v3960, 328
        %v4002 = vadd.s32 %v3960, 336
        %v4003 = vadd.s32 %v3960, 344
        %v4004 = vadd.s32 %v3960, 352
        %v4005 = vadd.s32 %v3960, 360
        %v4006 = vadd.s32 %v3960, 368
        %v4007 = vadd.s32 %v3960, 376
        %v4008 = vadd.s32 %v3960, 384
        %v4009 = vadd.s32 %v3960, 392
        %v4010 = vadd.s32 %v3960, 400
        %v4011 = vadd.s32 %v3960, 408
        %v4012 = vadd.s32 %v3960, 416
        %v4013 = vadd.s32 %v3960, 424
        %v4014 = vadd.s32 %v3960, 432
        %v4015 = vadd.s32 %v3960, 440
        %vm4016 = vcmp.lt.s32.totalorder %v3960, 0
        %v4017 = vsub.s32 0, %v3960
        %v4018 = vsel %vm4016, %v4017, %v3960
        %v4019 = vshrl.u32 %v4018, 4
        %v4020 = vand.u32 %v4018, 15
        %v4021 = vsub.s32 0, %v4020
        %v4022 = vsel %vm4016, %v4021, %v4020
        %vm4023 = vcmp.lt.s32.totalorder %v3961, 0
        %v4024 = vsub.s32 0, %v3961
        %v4025 = vsel %vm4023, %v4024, %v3961
        %v4026 = vshrl.u32 %v4025, 4
        %v4027 = vand.u32 %v4025, 15
        %v4028 = vsub.s32 0, %v4027
        %v4029 = vsel %vm4023, %v4028, %v4027
        %vm4030 = vcmp.lt.s32.totalorder %v3962, 0
        %v4031 = vsub.s32 0, %v3962
        %v4032 = vsel %vm4030, %v4031, %v3962
        %v4033 = vshrl.u32 %v4032, 4
        %v4034 = vand.u32 %v4032, 15
        %v4035 = vsub.s32 0, %v4034
        %v4036 = vsel %vm4030, %v4035, %v4034
        %vm4037 = vcmp.lt.s32.totalorder %v3963, 0
        %v4038 = vsub.s32 0, %v3963
        %v4039 = vsel %vm4037, %v4038, %v3963
        %v4040 = vshrl.u32 %v4039, 4
        %v4041 = vand.u32 %v4039, 15
        %v4042 = vsub.s32 0, %v4041
        %v4043 = vsel %vm4037, %v4042, %v4041
        %vm4044 = vcmp.lt.s32.totalorder %v3964, 0
        %v4045 = vsub.s32 0, %v3964
        %v4046 = vsel %vm4044, %v4045, %v3964
        %v4047 = vshrl.u32 %v4046, 4
        %v4048 = vand.u32 %v4046, 15
        %v4049 = vsub.s32 0, %v4048
        %v4050 = vsel %vm4044, %v4049, %v4048
        %vm4051 = vcmp.lt.s32.totalorder %v3965, 0
        %v4052 = vsub.s32 0, %v3965
        %v4053 = vsel %vm4051, %v4052, %v3965
        %v4054 = vshrl.u32 %v4053, 4
        %v4055 = vand.u32 %v4053, 15
        %v4056 = vsub.s32 0, %v4055
        %v4057 = vsel %vm4051, %v4056, %v4055
        %vm4058 = vcmp.lt.s32.totalorder %v3966, 0
        %v4059 = vsub.s32 0, %v3966
        %v4060 = vsel %vm4058, %v4059, %v3966
        %v4061 = vshrl.u32 %v4060, 4
        %v4062 = vand.u32 %v4060, 15
        %v4063 = vsub.s32 0, %v4062
        %v4064 = vsel %vm4058, %v4063, %v4062
        %vm4065 = vcmp.lt.s32.totalorder %v3967, 0
        %v4066 = vsub.s32 0, %v3967
        %v4067 = vsel %vm4065, %v4066, %v3967
        %v4068 = vshrl.u32 %v4067, 4
        %v4069 = vand.u32 %v4067, 15
        %v4070 = vsub.s32 0, %v4069
        %v4071 = vsel %vm4065, %v4070, %v4069
        %vm4072 = vcmp.lt.s32.totalorder %v3968, 0
        %v4073 = vsub.s32 0, %v3968
        %v4074 = vsel %vm4072, %v4073, %v3968
        %v4075 = vshrl.u32 %v4074, 4
        %v4076 = vand.u32 %v4074, 15
        %v4077 = vsub.s32 0, %v4076
        %v4078 = vsel %vm4072, %v4077, %v4076
        %vm4079 = vcmp.lt.s32.totalorder %v3969, 0
        %v4080 = vsub.s32 0, %v3969
        %v4081 = vsel %vm4079, %v4080, %v3969
        %v4082 = vshrl.u32 %v4081, 4
        %v4083 = vand.u32 %v4081, 15
        %v4084 = vsub.s32 0, %v4083
        %v4085 = vsel %vm4079, %v4084, %v4083
        %vm4086 = vcmp.lt.s32.totalorder %v3970, 0
        %v4087 = vsub.s32 0, %v3970
        %v4088 = vsel %vm4086, %v4087, %v3970
        %v4089 = vshrl.u32 %v4088, 4
        %v4090 = vand.u32 %v4088, 15
        %v4091 = vsub.s32 0, %v4090
        %v4092 = vsel %vm4086, %v4091, %v4090
        %vm4093 = vcmp.lt.s32.totalorder %v3971, 0
        %v4094 = vsub.s32 0, %v3971
        %v4095 = vsel %vm4093, %v4094, %v3971
        %v4096 = vshrl.u32 %v4095, 4
        %v4097 = vand.u32 %v4095, 15
        %v4098 = vsub.s32 0, %v4097
        %v4099 = vsel %vm4093, %v4098, %v4097
        %vm4100 = vcmp.lt.s32.totalorder %v3972, 0
        %v4101 = vsub.s32 0, %v3972
        %v4102 = vsel %vm4100, %v4101, %v3972
        %v4103 = vshrl.u32 %v4102, 4
        %v4104 = vand.u32 %v4102, 15
        %v4105 = vsub.s32 0, %v4104
        %v4106 = vsel %vm4100, %v4105, %v4104
        %vm4107 = vcmp.lt.s32.totalorder %v3973, 0
        %v4108 = vsub.s32 0, %v3973
        %v4109 = vsel %vm4107, %v4108, %v3973
        %v4110 = vshrl.u32 %v4109, 4
        %v4111 = vand.u32 %v4109, 15
        %v4112 = vsub.s32 0, %v4111
        %v4113 = vsel %vm4107, %v4112, %v4111
        %vm4114 = vcmp.lt.s32.totalorder %v3974, 0
        %v4115 = vsub.s32 0, %v3974
        %v4116 = vsel %vm4114, %v4115, %v3974
        %v4117 = vshrl.u32 %v4116, 4
        %v4118 = vand.u32 %v4116, 15
        %v4119 = vsub.s32 0, %v4118
        %v4120 = vsel %vm4114, %v4119, %v4118
        %vm4121 = vcmp.lt.s32.totalorder %v3975, 0
        %v4122 = vsub.s32 0, %v3975
        %v4123 = vsel %vm4121, %v4122, %v3975
        %v4124 = vshrl.u32 %v4123, 4
        %v4125 = vand.u32 %v4123, 15
        %v4126 = vsub.s32 0, %v4125
        %v4127 = vsel %vm4121, %v4126, %v4125
        %vm4128 = vcmp.lt.s32.totalorder %v3976, 0
        %v4129 = vsub.s32 0, %v3976
        %v4130 = vsel %vm4128, %v4129, %v3976
        %v4131 = vshrl.u32 %v4130, 4
        %v4132 = vand.u32 %v4130, 15
        %v4133 = vsub.s32 0, %v4132
        %v4134 = vsel %vm4128, %v4133, %v4132
        %vm4135 = vcmp.lt.s32.totalorder %v3977, 0
        %v4136 = vsub.s32 0, %v3977
        %v4137 = vsel %vm4135, %v4136, %v3977
        %v4138 = vshrl.u32 %v4137, 4
        %v4139 = vand.u32 %v4137, 15
        %v4140 = vsub.s32 0, %v4139
        %v4141 = vsel %vm4135, %v4140, %v4139
        %vm4142 = vcmp.lt.s32.totalorder %v3978, 0
        %v4143 = vsub.s32 0, %v3978
        %v4144 = vsel %vm4142, %v4143, %v3978
        %v4145 = vshrl.u32 %v4144, 4
        %v4146 = vand.u32 %v4144, 15
        %v4147 = vsub.s32 0, %v4146
        %v4148 = vsel %vm4142, %v4147, %v4146
        %vm4149 = vcmp.lt.s32.totalorder %v3979, 0
        %v4150 = vsub.s32 0, %v3979
        %v4151 = vsel %vm4149, %v4150, %v3979
        %v4152 = vshrl.u32 %v4151, 4
        %v4153 = vand.u32 %v4151, 15
        %v4154 = vsub.s32 0, %v4153
        %v4155 = vsel %vm4149, %v4154, %v4153
        %vm4156 = vcmp.lt.s32.totalorder %v3980, 0
        %v4157 = vsub.s32 0, %v3980
        %v4158 = vsel %vm4156, %v4157, %v3980
        %v4159 = vshrl.u32 %v4158, 4
        %v4160 = vand.u32 %v4158, 15
        %v4161 = vsub.s32 0, %v4160
        %v4162 = vsel %vm4156, %v4161, %v4160
        %vm4163 = vcmp.lt.s32.totalorder %v3981, 0
        %v4164 = vsub.s32 0, %v3981
        %v4165 = vsel %vm4163, %v4164, %v3981
        %v4166 = vshrl.u32 %v4165, 4
        %v4167 = vand.u32 %v4165, 15
        %v4168 = vsub.s32 0, %v4167
        %v4169 = vsel %vm4163, %v4168, %v4167
        %vm4170 = vcmp.lt.s32.totalorder %v3982, 0
        %v4171 = vsub.s32 0, %v3982
        %v4172 = vsel %vm4170, %v4171, %v3982
        %v4173 = vshrl.u32 %v4172, 4
        %v4174 = vand.u32 %v4172, 15
        %v4175 = vsub.s32 0, %v4174
        %v4176 = vsel %vm4170, %v4175, %v4174
        %vm4177 = vcmp.lt.s32.totalorder %v3983, 0
        %v4178 = vsub.s32 0, %v3983
        %v4179 = vsel %vm4177, %v4178, %v3983
        %v4180 = vshrl.u32 %v4179, 4
        %v4181 = vand.u32 %v4179, 15
        %v4182 = vsub.s32 0, %v4181
        %v4183 = vsel %vm4177, %v4182, %v4181
        %vm4184 = vcmp.lt.s32.totalorder %v3984, 0
        %v4185 = vsub.s32 0, %v3984
        %v4186 = vsel %vm4184, %v4185, %v3984
        %v4187 = vshrl.u32 %v4186, 4
        %v4188 = vand.u32 %v4186, 15
        %v4189 = vsub.s32 0, %v4188
        %v4190 = vsel %vm4184, %v4189, %v4188
        %vm4191 = vcmp.lt.s32.totalorder %v3985, 0
        %v4192 = vsub.s32 0, %v3985
        %v4193 = vsel %vm4191, %v4192, %v3985
        %v4194 = vshrl.u32 %v4193, 4
        %v4195 = vand.u32 %v4193, 15
        %v4196 = vsub.s32 0, %v4195
        %v4197 = vsel %vm4191, %v4196, %v4195
        %vm4198 = vcmp.lt.s32.totalorder %v3986, 0
        %v4199 = vsub.s32 0, %v3986
        %v4200 = vsel %vm4198, %v4199, %v3986
        %v4201 = vshrl.u32 %v4200, 4
        %v4202 = vand.u32 %v4200, 15
        %v4203 = vsub.s32 0, %v4202
        %v4204 = vsel %vm4198, %v4203, %v4202
        %vm4205 = vcmp.lt.s32.totalorder %v3987, 0
        %v4206 = vsub.s32 0, %v3987
        %v4207 = vsel %vm4205, %v4206, %v3987
        %v4208 = vshrl.u32 %v4207, 4
        %v4209 = vand.u32 %v4207, 15
        %v4210 = vsub.s32 0, %v4209
        %v4211 = vsel %vm4205, %v4210, %v4209
        %vm4212 = vcmp.lt.s32.totalorder %v3988, 0
        %v4213 = vsub.s32 0, %v3988
        %v4214 = vsel %vm4212, %v4213, %v3988
        %v4215 = vshrl.u32 %v4214, 4
        %v4216 = vand.u32 %v4214, 15
        %v4217 = vsub.s32 0, %v4216
        %v4218 = vsel %vm4212, %v4217, %v4216
        %vm4219 = vcmp.lt.s32.totalorder %v3989, 0
        %v4220 = vsub.s32 0, %v3989
        %v4221 = vsel %vm4219, %v4220, %v3989
        %v4222 = vshrl.u32 %v4221, 4
        %v4223 = vand.u32 %v4221, 15
        %v4224 = vsub.s32 0, %v4223
        %v4225 = vsel %vm4219, %v4224, %v4223
        %vm4226 = vcmp.lt.s32.totalorder %v3990, 0
        %v4227 = vsub.s32 0, %v3990
        %v4228 = vsel %vm4226, %v4227, %v3990
        %v4229 = vshrl.u32 %v4228, 4
        %v4230 = vand.u32 %v4228, 15
        %v4231 = vsub.s32 0, %v4230
        %v4232 = vsel %vm4226, %v4231, %v4230
        %vm4233 = vcmp.lt.s32.totalorder %v3991, 0
        %v4234 = vsub.s32 0, %v3991
        %v4235 = vsel %vm4233, %v4234, %v3991
        %v4236 = vshrl.u32 %v4235, 4
        %v4237 = vand.u32 %v4235, 15
        %v4238 = vsub.s32 0, %v4237
        %v4239 = vsel %vm4233, %v4238, %v4237
        %vm4240 = vcmp.lt.s32.totalorder %v3992, 0
        %v4241 = vsub.s32 0, %v3992
        %v4242 = vsel %vm4240, %v4241, %v3992
        %v4243 = vshrl.u32 %v4242, 4
        %v4244 = vand.u32 %v4242, 15
        %v4245 = vsub.s32 0, %v4244
        %v4246 = vsel %vm4240, %v4245, %v4244
        %vm4247 = vcmp.lt.s32.totalorder %v3993, 0
        %v4248 = vsub.s32 0, %v3993
        %v4249 = vsel %vm4247, %v4248, %v3993
        %v4250 = vshrl.u32 %v4249, 4
        %v4251 = vand.u32 %v4249, 15
        %v4252 = vsub.s32 0, %v4251
        %v4253 = vsel %vm4247, %v4252, %v4251
        %vm4254 = vcmp.lt.s32.totalorder %v3994, 0
        %v4255 = vsub.s32 0, %v3994
        %v4256 = vsel %vm4254, %v4255, %v3994
        %v4257 = vshrl.u32 %v4256, 4
        %v4258 = vand.u32 %v4256, 15
        %v4259 = vsub.s32 0, %v4258
        %v4260 = vsel %vm4254, %v4259, %v4258
        %vm4261 = vcmp.lt.s32.totalorder %v3995, 0
        %v4262 = vsub.s32 0, %v3995
        %v4263 = vsel %vm4261, %v4262, %v3995
        %v4264 = vshrl.u32 %v4263, 4
        %v4265 = vand.u32 %v4263, 15
        %v4266 = vsub.s32 0, %v4265
        %v4267 = vsel %vm4261, %v4266, %v4265
        %vm4268 = vcmp.lt.s32.totalorder %v3996, 0
        %v4269 = vsub.s32 0, %v3996
        %v4270 = vsel %vm4268, %v4269, %v3996
        %v4271 = vshrl.u32 %v4270, 4
        %v4272 = vand.u32 %v4270, 15
        %v4273 = vsub.s32 0, %v4272
        %v4274 = vsel %vm4268, %v4273, %v4272
        %vm4275 = vcmp.lt.s32.totalorder %v3997, 0
        %v4276 = vsub.s32 0, %v3997
        %v4277 = vsel %vm4275, %v4276, %v3997
        %v4278 = vshrl.u32 %v4277, 4
        %v4279 = vand.u32 %v4277, 15
        %v4280 = vsub.s32 0, %v4279
        %v4281 = vsel %vm4275, %v4280, %v4279
        %vm4282 = vcmp.lt.s32.totalorder %v3998, 0
        %v4283 = vsub.s32 0, %v3998
        %v4284 = vsel %vm4282, %v4283, %v3998
        %v4285 = vshrl.u32 %v4284, 4
        %v4286 = vand.u32 %v4284, 15
        %v4287 = vsub.s32 0, %v4286
        %v4288 = vsel %vm4282, %v4287, %v4286
        %vm4289 = vcmp.lt.s32.totalorder %v3999, 0
        %v4290 = vsub.s32 0, %v3999
        %v4291 = vsel %vm4289, %v4290, %v3999
        %v4292 = vshrl.u32 %v4291, 4
        %v4293 = vand.u32 %v4291, 15
        %v4294 = vsub.s32 0, %v4293
        %v4295 = vsel %vm4289, %v4294, %v4293
        %vm4296 = vcmp.lt.s32.totalorder %v4000, 0
        %v4297 = vsub.s32 0, %v4000
        %v4298 = vsel %vm4296, %v4297, %v4000
        %v4299 = vshrl.u32 %v4298, 4
        %v4300 = vand.u32 %v4298, 15
        %v4301 = vsub.s32 0, %v4300
        %v4302 = vsel %vm4296, %v4301, %v4300
        %vm4303 = vcmp.lt.s32.totalorder %v4001, 0
        %v4304 = vsub.s32 0, %v4001
        %v4305 = vsel %vm4303, %v4304, %v4001
        %v4306 = vshrl.u32 %v4305, 4
        %v4307 = vand.u32 %v4305, 15
        %v4308 = vsub.s32 0, %v4307
        %v4309 = vsel %vm4303, %v4308, %v4307
        %vm4310 = vcmp.lt.s32.totalorder %v4002, 0
        %v4311 = vsub.s32 0, %v4002
        %v4312 = vsel %vm4310, %v4311, %v4002
        %v4313 = vshrl.u32 %v4312, 4
        %v4314 = vand.u32 %v4312, 15
        %v4315 = vsub.s32 0, %v4314
        %v4316 = vsel %vm4310, %v4315, %v4314
        %vm4317 = vcmp.lt.s32.totalorder %v4003, 0
        %v4318 = vsub.s32 0, %v4003
        %v4319 = vsel %vm4317, %v4318, %v4003
        %v4320 = vshrl.u32 %v4319, 4
        %v4321 = vand.u32 %v4319, 15
        %v4322 = vsub.s32 0, %v4321
        %v4323 = vsel %vm4317, %v4322, %v4321
        %vm4324 = vcmp.lt.s32.totalorder %v4004, 0
        %v4325 = vsub.s32 0, %v4004
        %v4326 = vsel %vm4324, %v4325, %v4004
        %v4327 = vshrl.u32 %v4326, 4
        %v4328 = vand.u32 %v4326, 15
        %v4329 = vsub.s32 0, %v4328
        %v4330 = vsel %vm4324, %v4329, %v4328
        %vm4331 = vcmp.lt.s32.totalorder %v4005, 0
        %v4332 = vsub.s32 0, %v4005
        %v4333 = vsel %vm4331, %v4332, %v4005
        %v4334 = vshrl.u32 %v4333, 4
        %v4335 = vand.u32 %v4333, 15
        %v4336 = vsub.s32 0, %v4335
        %v4337 = vsel %vm4331, %v4336, %v4335
        %vm4338 = vcmp.lt.s32.totalorder %v4006, 0
        %v4339 = vsub.s32 0, %v4006
        %v4340 = vsel %vm4338, %v4339, %v4006
        %v4341 = vshrl.u32 %v4340, 4
        %v4342 = vand.u32 %v4340, 15
        %v4343 = vsub.s32 0, %v4342
        %v4344 = vsel %vm4338, %v4343, %v4342
        %vm4345 = vcmp.lt.s32.totalorder %v4007, 0
        %v4346 = vsub.s32 0, %v4007
        %v4347 = vsel %vm4345, %v4346, %v4007
        %v4348 = vshrl.u32 %v4347, 4
        %v4349 = vand.u32 %v4347, 15
        %v4350 = vsub.s32 0, %v4349
        %v4351 = vsel %vm4345, %v4350, %v4349
        %vm4352 = vcmp.lt.s32.totalorder %v4008, 0
        %v4353 = vsub.s32 0, %v4008
        %v4354 = vsel %vm4352, %v4353, %v4008
        %v4355 = vshrl.u32 %v4354, 4
        %v4356 = vand.u32 %v4354, 15
        %v4357 = vsub.s32 0, %v4356
        %v4358 = vsel %vm4352, %v4357, %v4356
        %vm4359 = vcmp.lt.s32.totalorder %v4009, 0
        %v4360 = vsub.s32 0, %v4009
        %v4361 = vsel %vm4359, %v4360, %v4009
        %v4362 = vshrl.u32 %v4361, 4
        %v4363 = vand.u32 %v4361, 15
        %v4364 = vsub.s32 0, %v4363
        %v4365 = vsel %vm4359, %v4364, %v4363
        %vm4366 = vcmp.lt.s32.totalorder %v4010, 0
        %v4367 = vsub.s32 0, %v4010
        %v4368 = vsel %vm4366, %v4367, %v4010
        %v4369 = vshrl.u32 %v4368, 4
        %v4370 = vand.u32 %v4368, 15
        %v4371 = vsub.s32 0, %v4370
        %v4372 = vsel %vm4366, %v4371, %v4370
        %vm4373 = vcmp.lt.s32.totalorder %v4011, 0
        %v4374 = vsub.s32 0, %v4011
        %v4375 = vsel %vm4373, %v4374, %v4011
        %v4376 = vshrl.u32 %v4375, 4
        %v4377 = vand.u32 %v4375, 15
        %v4378 = vsub.s32 0, %v4377
        %v4379 = vsel %vm4373, %v4378, %v4377
        %vm4380 = vcmp.lt.s32.totalorder %v4012, 0
        %v4381 = vsub.s32 0, %v4012
        %v4382 = vsel %vm4380, %v4381, %v4012
        %v4383 = vshrl.u32 %v4382, 4
        %v4384 = vand.u32 %v4382, 15
        %v4385 = vsub.s32 0, %v4384
        %v4386 = vsel %vm4380, %v4385, %v4384
        %vm4387 = vcmp.lt.s32.totalorder %v4013, 0
        %v4388 = vsub.s32 0, %v4013
        %v4389 = vsel %vm4387, %v4388, %v4013
        %v4390 = vshrl.u32 %v4389, 4
        %v4391 = vand.u32 %v4389, 15
        %v4392 = vsub.s32 0, %v4391
        %v4393 = vsel %vm4387, %v4392, %v4391
        %vm4394 = vcmp.lt.s32.totalorder %v4014, 0
        %v4395 = vsub.s32 0, %v4014
        %v4396 = vsel %vm4394, %v4395, %v4014
        %v4397 = vshrl.u32 %v4396, 4
        %v4398 = vand.u32 %v4396, 15
        %v4399 = vsub.s32 0, %v4398
        %v4400 = vsel %vm4394, %v4399, %v4398
        %vm4401 = vcmp.lt.s32.totalorder %v4015, 0
        %v4402 = vsub.s32 0, %v4015
        %v4403 = vsel %vm4401, %v4402, %v4015
        %v4404 = vshrl.u32 %v4403, 4
        %v4405 = vand.u32 %v4403, 15
        %v4406 = vsub.s32 0, %v4405
        %v4407 = vsel %vm4401, %v4406, %v4405
        %vm4408 = vcmp.ne.s32.totalorder %v4022, 0
        %vm4409 = vcmp.ne.s32.totalorder %v4029, 0
        %vm4410 = vcmp.ne.s32.totalorder %v4036, 0
        %vm4411 = vcmp.ne.s32.totalorder %v4043, 0
        %vm4412 = vcmp.ne.s32.totalorder %v4050, 0
        %vm4413 = vcmp.ne.s32.totalorder %v4057, 0
        %vm4414 = vcmp.ne.s32.totalorder %v4064, 0
        %vm4415 = vcmp.ne.s32.totalorder %v4071, 0
        %vm4416 = vcmp.ne.s32.totalorder %v4078, 0
        %vm4417 = vcmp.ne.s32.totalorder %v4085, 0
        %vm4418 = vcmp.ne.s32.totalorder %v4092, 0
        %vm4419 = vcmp.ne.s32.totalorder %v4099, 0
        %vm4420 = vcmp.ne.s32.totalorder %v4106, 0
        %vm4421 = vcmp.ne.s32.totalorder %v4113, 0
        %vm4422 = vcmp.ne.s32.totalorder %v4120, 0
        %vm4423 = vcmp.ne.s32.totalorder %v4127, 0
        %vm4424 = vcmp.ne.s32.totalorder %v4134, 0
        %vm4425 = vcmp.ne.s32.totalorder %v4141, 0
        %vm4426 = vcmp.ne.s32.totalorder %v4148, 0
        %vm4427 = vcmp.ne.s32.totalorder %v4155, 0
        %vm4428 = vcmp.ne.s32.totalorder %v4162, 0
        %vm4429 = vcmp.ne.s32.totalorder %v4169, 0
        %vm4430 = vcmp.ne.s32.totalorder %v4176, 0
        %vm4431 = vcmp.ne.s32.totalorder %v4183, 0
        %vm4432 = vcmp.ne.s32.totalorder %v4190, 0
        %vm4433 = vcmp.ne.s32.totalorder %v4197, 0
        %vm4434 = vcmp.ne.s32.totalorder %v4204, 0
        %vm4435 = vcmp.ne.s32.totalorder %v4211, 0
        %vm4436 = vcmp.ne.s32.totalorder %v4218, 0
        %vm4437 = vcmp.ne.s32.totalorder %v4225, 0
        %vm4438 = vcmp.ne.s32.totalorder %v4232, 0
        %vm4439 = vcmp.ne.s32.totalorder %v4239, 0
        %vm4440 = vcmp.ne.s32.totalorder %v4246, 0
        %vm4441 = vcmp.ne.s32.totalorder %v4253, 0
        %vm4442 = vcmp.ne.s32.totalorder %v4260, 0
        %vm4443 = vcmp.ne.s32.totalorder %v4267, 0
        %vm4444 = vcmp.ne.s32.totalorder %v4274, 0
        %vm4445 = vcmp.ne.s32.totalorder %v4281, 0
        %vm4446 = vcmp.ne.s32.totalorder %v4288, 0
        %vm4447 = vcmp.ne.s32.totalorder %v4295, 0
        %vm4448 = vcmp.ne.s32.totalorder %v4302, 0
        %vm4449 = vcmp.ne.s32.totalorder %v4309, 0
        %vm4450 = vcmp.ne.s32.totalorder %v4316, 0
        %vm4451 = vcmp.ne.s32.totalorder %v4323, 0
        %vm4452 = vcmp.ne.s32.totalorder %v4330, 0
        %vm4453 = vcmp.ne.s32.totalorder %v4337, 0
        %vm4454 = vcmp.ne.s32.totalorder %v4344, 0
        %vm4455 = vcmp.ne.s32.totalorder %v4351, 0
        %vm4456 = vcmp.ne.s32.totalorder %v4358, 0
        %vm4457 = vcmp.ne.s32.totalorder %v4365, 0
        %vm4458 = vcmp.ne.s32.totalorder %v4372, 0
        %vm4459 = vcmp.ne.s32.totalorder %v4379, 0
        %vm4460 = vcmp.ne.s32.totalorder %v4386, 0
        %vm4461 = vcmp.ne.s32.totalorder %v4393, 0
        %vm4462 = vcmp.ne.s32.totalorder %v4400, 0
        %vm4463 = vcmp.ne.s32.totalorder %v4407, 0
        %vm4464 = vcmp.lt.s32.totalorder %v4022, 0
        %vm4465 = vcmp.lt.s32.totalorder %v4029, 0
        %vm4466 = vcmp.lt.s32.totalorder %v4036, 0
        %vm4467 = vcmp.lt.s32.totalorder %v4043, 0
        %vm4468 = vcmp.lt.s32.totalorder %v4050, 0
        %vm4469 = vcmp.lt.s32.totalorder %v4057, 0
        %vm4470 = vcmp.lt.s32.totalorder %v4064, 0
        %vm4471 = vcmp.lt.s32.totalorder %v4071, 0
        %vm4472 = vcmp.lt.s32.totalorder %v4078, 0
        %vm4473 = vcmp.lt.s32.totalorder %v4085, 0
        %vm4474 = vcmp.lt.s32.totalorder %v4092, 0
        %vm4475 = vcmp.lt.s32.totalorder %v4099, 0
        %vm4476 = vcmp.lt.s32.totalorder %v4106, 0
        %vm4477 = vcmp.lt.s32.totalorder %v4113, 0
        %vm4478 = vcmp.lt.s32.totalorder %v4120, 0
        %vm4479 = vcmp.lt.s32.totalorder %v4127, 0
        %vm4480 = vcmp.lt.s32.totalorder %v4134, 0
        %vm4481 = vcmp.lt.s32.totalorder %v4141, 0
        %vm4482 = vcmp.lt.s32.totalorder %v4148, 0
        %vm4483 = vcmp.lt.s32.totalorder %v4155, 0
        %vm4484 = vcmp.lt.s32.totalorder %v4162, 0
        %vm4485 = vcmp.lt.s32.totalorder %v4169, 0
        %vm4486 = vcmp.lt.s32.totalorder %v4176, 0
        %vm4487 = vcmp.lt.s32.totalorder %v4183, 0
        %vm4488 = vcmp.lt.s32.totalorder %v4190, 0
        %vm4489 = vcmp.lt.s32.totalorder %v4197, 0
        %vm4490 = vcmp.lt.s32.totalorder %v4204, 0
        %vm4491 = vcmp.lt.s32.totalorder %v4211, 0
        %vm4492 = vcmp.lt.s32.totalorder %v4218, 0
        %vm4493 = vcmp.lt.s32.totalorder %v4225, 0
        %vm4494 = vcmp.lt.s32.totalorder %v4232, 0
        %vm4495 = vcmp.lt.s32.totalorder %v4239, 0
        %vm4496 = vcmp.lt.s32.totalorder %v4246, 0
        %vm4497 = vcmp.lt.s32.totalorder %v4253, 0
        %vm4498 = vcmp.lt.s32.totalorder %v4260, 0
        %vm4499 = vcmp.lt.s32.totalorder %v4267, 0
        %vm4500 = vcmp.lt.s32.totalorder %v4274, 0
        %vm4501 = vcmp.lt.s32.totalorder %v4281, 0
        %vm4502 = vcmp.lt.s32.totalorder %v4288, 0
        %vm4503 = vcmp.lt.s32.totalorder %v4295, 0
        %vm4504 = vcmp.lt.s32.totalorder %v4302, 0
        %vm4505 = vcmp.lt.s32.totalorder %v4309, 0
        %vm4506 = vcmp.lt.s32.totalorder %v4316, 0
        %vm4507 = vcmp.lt.s32.totalorder %v4323, 0
        %vm4508 = vcmp.lt.s32.totalorder %v4330, 0
        %vm4509 = vcmp.lt.s32.totalorder %v4337, 0
        %vm4510 = vcmp.lt.s32.totalorder %v4344, 0
        %vm4511 = vcmp.lt.s32.totalorder %v4351, 0
        %vm4512 = vcmp.lt.s32.totalorder %v4358, 0
        %vm4513 = vcmp.lt.s32.totalorder %v4365, 0
        %vm4514 = vcmp.lt.s32.totalorder %v4372, 0
        %vm4515 = vcmp.lt.s32.totalorder %v4379, 0
        %vm4516 = vcmp.lt.s32.totalorder %v4386, 0
        %vm4517 = vcmp.lt.s32.totalorder %v4393, 0
        %vm4518 = vcmp.lt.s32.totalorder %v4400, 0
        %vm4519 = vcmp.lt.s32.totalorder %v4407, 0
        %vm4520 = vmand %vm4464, %vm4408
        %vm4521 = vmand %vm4465, %vm4409
        %vm4522 = vmand %vm4466, %vm4410
        %vm4523 = vmand %vm4467, %vm4411
        %vm4524 = vmand %vm4468, %vm4412
        %vm4525 = vmand %vm4469, %vm4413
        %vm4526 = vmand %vm4470, %vm4414
        %vm4527 = vmand %vm4471, %vm4415
        %vm4528 = vmand %vm4472, %vm4416
        %vm4529 = vmand %vm4473, %vm4417
        %vm4530 = vmand %vm4474, %vm4418
        %vm4531 = vmand %vm4475, %vm4419
        %vm4532 = vmand %vm4476, %vm4420
        %vm4533 = vmand %vm4477, %vm4421
        %vm4534 = vmand %vm4478, %vm4422
        %vm4535 = vmand %vm4479, %vm4423
        %vm4536 = vmand %vm4480, %vm4424
        %vm4537 = vmand %vm4481, %vm4425
        %vm4538 = vmand %vm4482, %vm4426
        %vm4539 = vmand %vm4483, %vm4427
        %vm4540 = vmand %vm4484, %vm4428
        %vm4541 = vmand %vm4485, %vm4429
        %vm4542 = vmand %vm4486, %vm4430
        %vm4543 = vmand %vm4487, %vm4431
        %vm4544 = vmand %vm4488, %vm4432
        %vm4545 = vmand %vm4489, %vm4433
        %vm4546 = vmand %vm4490, %vm4434
        %vm4547 = vmand %vm4491, %vm4435
        %vm4548 = vmand %vm4492, %vm4436
        %vm4549 = vmand %vm4493, %vm4437
        %vm4550 = vmand %vm4494, %vm4438
        %vm4551 = vmand %vm4495, %vm4439
        %vm4552 = vmand %vm4496, %vm4440
        %vm4553 = vmand %vm4497, %vm4441
        %vm4554 = vmand %vm4498, %vm4442
        %vm4555 = vmand %vm4499, %vm4443
        %vm4556 = vmand %vm4500, %vm4444
        %vm4557 = vmand %vm4501, %vm4445
        %vm4558 = vmand %vm4502, %vm4446
        %vm4559 = vmand %vm4503, %vm4447
        %vm4560 = vmand %vm4504, %vm4448
        %vm4561 = vmand %vm4505, %vm4449
        %vm4562 = vmand %vm4506, %vm4450
        %vm4563 = vmand %vm4507, %vm4451
        %vm4564 = vmand %vm4508, %vm4452
        %vm4565 = vmand %vm4509, %vm4453
        %vm4566 = vmand %vm4510, %vm4454
        %vm4567 = vmand %vm4511, %vm4455
        %vm4568 = vmand %vm4512, %vm4456
        %vm4569 = vmand %vm4513, %vm4457
        %vm4570 = vmand %vm4514, %vm4458
        %vm4571 = vmand %vm4515, %vm4459
        %vm4572 = vmand %vm4516, %vm4460
        %vm4573 = vmand %vm4517, %vm4461
        %vm4574 = vmand %vm4518, %vm4462
        %vm4575 = vmand %vm4519, %vm4463
        %v4576 = vadd.s32 %v4022, 16
        %v4577 = vadd.s32 %v4029, 16
        %v4578 = vadd.s32 %v4036, 16
        %v4579 = vadd.s32 %v4043, 16
        %v4580 = vadd.s32 %v4050, 16
        %v4581 = vadd.s32 %v4057, 16
        %v4582 = vadd.s32 %v4064, 16
        %v4583 = vadd.s32 %v4071, 16
        %v4584 = vadd.s32 %v4078, 16
        %v4585 = vadd.s32 %v4085, 16
        %v4586 = vadd.s32 %v4092, 16
        %v4587 = vadd.s32 %v4099, 16
        %v4588 = vadd.s32 %v4106, 16
        %v4589 = vadd.s32 %v4113, 16
        %v4590 = vadd.s32 %v4120, 16
        %v4591 = vadd.s32 %v4127, 16
        %v4592 = vadd.s32 %v4134, 16
        %v4593 = vadd.s32 %v4141, 16
        %v4594 = vadd.s32 %v4148, 16
        %v4595 = vadd.s32 %v4155, 16
        %v4596 = vadd.s32 %v4162, 16
        %v4597 = vadd.s32 %v4169, 16
        %v4598 = vadd.s32 %v4176, 16
        %v4599 = vadd.s32 %v4183, 16
        %v4600 = vadd.s32 %v4190, 16
        %v4601 = vadd.s32 %v4197, 16
        %v4602 = vadd.s32 %v4204, 16
        %v4603 = vadd.s32 %v4211, 16
        %v4604 = vadd.s32 %v4218, 16
        %v4605 = vadd.s32 %v4225, 16
        %v4606 = vadd.s32 %v4232, 16
        %v4607 = vadd.s32 %v4239, 16
        %v4608 = vadd.s32 %v4246, 16
        %v4609 = vadd.s32 %v4253, 16
        %v4610 = vadd.s32 %v4260, 16
        %v4611 = vadd.s32 %v4267, 16
        %v4612 = vadd.s32 %v4274, 16
        %v4613 = vadd.s32 %v4281, 16
        %v4614 = vadd.s32 %v4288, 16
        %v4615 = vadd.s32 %v4295, 16
        %v4616 = vadd.s32 %v4302, 16
        %v4617 = vadd.s32 %v4309, 16
        %v4618 = vadd.s32 %v4316, 16
        %v4619 = vadd.s32 %v4323, 16
        %v4620 = vadd.s32 %v4330, 16
        %v4621 = vadd.s32 %v4337, 16
        %v4622 = vadd.s32 %v4344, 16
        %v4623 = vadd.s32 %v4351, 16
        %v4624 = vadd.s32 %v4358, 16
        %v4625 = vadd.s32 %v4365, 16
        %v4626 = vadd.s32 %v4372, 16
        %v4627 = vadd.s32 %v4379, 16
        %v4628 = vadd.s32 %v4386, 16
        %v4629 = vadd.s32 %v4393, 16
        %v4630 = vadd.s32 %v4400, 16
        %v4631 = vadd.s32 %v4407, 16
        %v4632 = vsel %vm4520, %v4576, %v4022
        %v4633 = vsel %vm4521, %v4577, %v4029
        %v4634 = vsel %vm4522, %v4578, %v4036
        %v4635 = vsel %vm4523, %v4579, %v4043
        %v4636 = vsel %vm4524, %v4580, %v4050
        %v4637 = vsel %vm4525, %v4581, %v4057
        %v4638 = vsel %vm4526, %v4582, %v4064
        %v4639 = vsel %vm4527, %v4583, %v4071
        %v4640 = vsel %vm4528, %v4584, %v4078
        %v4641 = vsel %vm4529, %v4585, %v4085
        %v4642 = vsel %vm4530, %v4586, %v4092
        %v4643 = vsel %vm4531, %v4587, %v4099
        %v4644 = vsel %vm4532, %v4588, %v4106
        %v4645 = vsel %vm4533, %v4589, %v4113
        %v4646 = vsel %vm4534, %v4590, %v4120
        %v4647 = vsel %vm4535, %v4591, %v4127
        %v4648 = vsel %vm4536, %v4592, %v4134
        %v4649 = vsel %vm4537, %v4593, %v4141
        %v4650 = vsel %vm4538, %v4594, %v4148
        %v4651 = vsel %vm4539, %v4595, %v4155
        %v4652 = vsel %vm4540, %v4596, %v4162
        %v4653 = vsel %vm4541, %v4597, %v4169
        %v4654 = vsel %vm4542, %v4598, %v4176
        %v4655 = vsel %vm4543, %v4599, %v4183
        %v4656 = vsel %vm4544, %v4600, %v4190
        %v4657 = vsel %vm4545, %v4601, %v4197
        %v4658 = vsel %vm4546, %v4602, %v4204
        %v4659 = vsel %vm4547, %v4603, %v4211
        %v4660 = vsel %vm4548, %v4604, %v4218
        %v4661 = vsel %vm4549, %v4605, %v4225
        %v4662 = vsel %vm4550, %v4606, %v4232
        %v4663 = vsel %vm4551, %v4607, %v4239
        %v4664 = vsel %vm4552, %v4608, %v4246
        %v4665 = vsel %vm4553, %v4609, %v4253
        %v4666 = vsel %vm4554, %v4610, %v4260
        %v4667 = vsel %vm4555, %v4611, %v4267
        %v4668 = vsel %vm4556, %v4612, %v4274
        %v4669 = vsel %vm4557, %v4613, %v4281
        %v4670 = vsel %vm4558, %v4614, %v4288
        %v4671 = vsel %vm4559, %v4615, %v4295
        %v4672 = vsel %vm4560, %v4616, %v4302
        %v4673 = vsel %vm4561, %v4617, %v4309
        %v4674 = vsel %vm4562, %v4618, %v4316
        %v4675 = vsel %vm4563, %v4619, %v4323
        %v4676 = vsel %vm4564, %v4620, %v4330
        %v4677 = vsel %vm4565, %v4621, %v4337
        %v4678 = vsel %vm4566, %v4622, %v4344
        %v4679 = vsel %vm4567, %v4623, %v4351
        %v4680 = vsel %vm4568, %v4624, %v4358
        %v4681 = vsel %vm4569, %v4625, %v4365
        %v4682 = vsel %vm4570, %v4626, %v4372
        %v4683 = vsel %vm4571, %v4627, %v4379
        %v4684 = vsel %vm4572, %v4628, %v4386
        %v4685 = vsel %vm4573, %v4629, %v4393
        %v4686 = vsel %vm4574, %v4630, %v4400
        %v4687 = vsel %vm4575, %v4631, %v4407
        %vm4688 = vcmp.lt.s32.totalorder %v4632, 14
        %vm4689 = vcmp.lt.s32.totalorder %v4633, 14
        %vm4690 = vcmp.lt.s32.totalorder %v4634, 14
        %vm4691 = vcmp.lt.s32.totalorder %v4635, 14
        %vm4692 = vcmp.lt.s32.totalorder %v4636, 14
        %vm4693 = vcmp.lt.s32.totalorder %v4637, 14
        %vm4694 = vcmp.lt.s32.totalorder %v4638, 14
        %vm4695 = vcmp.lt.s32.totalorder %v4639, 14
        %vm4696 = vcmp.lt.s32.totalorder %v4640, 14
        %vm4697 = vcmp.lt.s32.totalorder %v4641, 14
        %vm4698 = vcmp.lt.s32.totalorder %v4642, 14
        %vm4699 = vcmp.lt.s32.totalorder %v4643, 14
        %vm4700 = vcmp.lt.s32.totalorder %v4644, 14
        %vm4701 = vcmp.lt.s32.totalorder %v4645, 14
        %vm4702 = vcmp.lt.s32.totalorder %v4646, 14
        %vm4703 = vcmp.lt.s32.totalorder %v4647, 14
        %vm4704 = vcmp.lt.s32.totalorder %v4648, 14
        %vm4705 = vcmp.lt.s32.totalorder %v4649, 14
        %vm4706 = vcmp.lt.s32.totalorder %v4650, 14
        %vm4707 = vcmp.lt.s32.totalorder %v4651, 14
        %vm4708 = vcmp.lt.s32.totalorder %v4652, 14
        %vm4709 = vcmp.lt.s32.totalorder %v4653, 14
        %vm4710 = vcmp.lt.s32.totalorder %v4654, 14
        %vm4711 = vcmp.lt.s32.totalorder %v4655, 14
        %vm4712 = vcmp.lt.s32.totalorder %v4656, 14
        %vm4713 = vcmp.lt.s32.totalorder %v4657, 14
        %vm4714 = vcmp.lt.s32.totalorder %v4658, 14
        %vm4715 = vcmp.lt.s32.totalorder %v4659, 14
        %vm4716 = vcmp.lt.s32.totalorder %v4660, 14
        %vm4717 = vcmp.lt.s32.totalorder %v4661, 14
        %vm4718 = vcmp.lt.s32.totalorder %v4662, 14
        %vm4719 = vcmp.lt.s32.totalorder %v4663, 14
        %vm4720 = vcmp.lt.s32.totalorder %v4664, 14
        %vm4721 = vcmp.lt.s32.totalorder %v4665, 14
        %vm4722 = vcmp.lt.s32.totalorder %v4666, 14
        %vm4723 = vcmp.lt.s32.totalorder %v4667, 14
        %vm4724 = vcmp.lt.s32.totalorder %v4668, 14
        %vm4725 = vcmp.lt.s32.totalorder %v4669, 14
        %vm4726 = vcmp.lt.s32.totalorder %v4670, 14
        %vm4727 = vcmp.lt.s32.totalorder %v4671, 14
        %vm4728 = vcmp.lt.s32.totalorder %v4672, 14
        %vm4729 = vcmp.lt.s32.totalorder %v4673, 14
        %vm4730 = vcmp.lt.s32.totalorder %v4674, 14
        %vm4731 = vcmp.lt.s32.totalorder %v4675, 14
        %vm4732 = vcmp.lt.s32.totalorder %v4676, 14
        %vm4733 = vcmp.lt.s32.totalorder %v4677, 14
        %vm4734 = vcmp.lt.s32.totalorder %v4678, 14
        %vm4735 = vcmp.lt.s32.totalorder %v4679, 14
        %vm4736 = vcmp.lt.s32.totalorder %v4680, 14
        %vm4737 = vcmp.lt.s32.totalorder %v4681, 14
        %vm4738 = vcmp.lt.s32.totalorder %v4682, 14
        %vm4739 = vcmp.lt.s32.totalorder %v4683, 14
        %vm4740 = vcmp.lt.s32.totalorder %v4684, 14
        %vm4741 = vcmp.lt.s32.totalorder %v4685, 14
        %vm4742 = vcmp.lt.s32.totalorder %v4686, 14
        %vm4743 = vcmp.lt.s32.totalorder %v4687, 14
        %v4744 = vsel %vm4688, 1, 0
        %v4745 = vsel %vm4689, 1, 0
        %v4746 = vsel %vm4690, 1, 0
        %v4747 = vsel %vm4691, 1, 0
        %v4748 = vsel %vm4692, 1, 0
        %v4749 = vsel %vm4693, 1, 0
        %v4750 = vsel %vm4694, 1, 0
        %v4751 = vsel %vm4695, 1, 0
        %v4752 = vsel %vm4696, 1, 0
        %v4753 = vsel %vm4697, 1, 0
        %v4754 = vsel %vm4698, 1, 0
        %v4755 = vsel %vm4699, 1, 0
        %v4756 = vsel %vm4700, 1, 0
        %v4757 = vsel %vm4701, 1, 0
        %v4758 = vsel %vm4702, 1, 0
        %v4759 = vsel %vm4703, 1, 0
        %v4760 = vsel %vm4704, 1, 0
        %v4761 = vsel %vm4705, 1, 0
        %v4762 = vsel %vm4706, 1, 0
        %v4763 = vsel %vm4707, 1, 0
        %v4764 = vsel %vm4708, 1, 0
        %v4765 = vsel %vm4709, 1, 0
        %v4766 = vsel %vm4710, 1, 0
        %v4767 = vsel %vm4711, 1, 0
        %v4768 = vsel %vm4712, 1, 0
        %v4769 = vsel %vm4713, 1, 0
        %v4770 = vsel %vm4714, 1, 0
        %v4771 = vsel %vm4715, 1, 0
        %v4772 = vsel %vm4716, 1, 0
        %v4773 = vsel %vm4717, 1, 0
        %v4774 = vsel %vm4718, 1, 0
        %v4775 = vsel %vm4719, 1, 0
        %v4776 = vsel %vm4720, 1, 0
        %v4777 = vsel %vm4721, 1, 0
        %v4778 = vsel %vm4722, 1, 0
        %v4779 = vsel %vm4723, 1, 0
        %v4780 = vsel %vm4724, 1, 0
        %v4781 = vsel %vm4725, 1, 0
        %v4782 = vsel %vm4726, 1, 0
        %v4783 = vsel %vm4727, 1, 0
        %v4784 = vsel %vm4728, 1, 0
        %v4785 = vsel %vm4729, 1, 0
        %v4786 = vsel %vm4730, 1, 0
        %v4787 = vsel %vm4731, 1, 0
        %v4788 = vsel %vm4732, 1, 0
        %v4789 = vsel %vm4733, 1, 0
        %v4790 = vsel %vm4734, 1, 0
        %v4791 = vsel %vm4735, 1, 0
        %v4792 = vsel %vm4736, 1, 0
        %v4793 = vsel %vm4737, 1, 0
        %v4794 = vsel %vm4738, 1, 0
        %v4795 = vsel %vm4739, 1, 0
        %v4796 = vsel %vm4740, 1, 0
        %v4797 = vsel %vm4741, 1, 0
        %v4798 = vsel %vm4742, 1, 0
        %v4799 = vsel %vm4743, 1, 0
        %vm4800 = vcmp.eq.s32.totalorder %v4744, 1
        %vm4801 = vcmp.eq.s32.totalorder %v4745, 1
        %vm4802 = vcmp.eq.s32.totalorder %v4746, 1
        %vm4803 = vcmp.eq.s32.totalorder %v4747, 1
        %vm4804 = vcmp.eq.s32.totalorder %v4748, 1
        %vm4805 = vcmp.eq.s32.totalorder %v4749, 1
        %vm4806 = vcmp.eq.s32.totalorder %v4750, 1
        %vm4807 = vcmp.eq.s32.totalorder %v4751, 1
        %vm4808 = vcmp.eq.s32.totalorder %v4752, 1
        %vm4809 = vcmp.eq.s32.totalorder %v4753, 1
        %vm4810 = vcmp.eq.s32.totalorder %v4754, 1
        %vm4811 = vcmp.eq.s32.totalorder %v4755, 1
        %vm4812 = vcmp.eq.s32.totalorder %v4756, 1
        %vm4813 = vcmp.eq.s32.totalorder %v4757, 1
        %vm4814 = vcmp.eq.s32.totalorder %v4758, 1
        %vm4815 = vcmp.eq.s32.totalorder %v4759, 1
        %vm4816 = vcmp.eq.s32.totalorder %v4760, 1
        %vm4817 = vcmp.eq.s32.totalorder %v4761, 1
        %vm4818 = vcmp.eq.s32.totalorder %v4762, 1
        %vm4819 = vcmp.eq.s32.totalorder %v4763, 1
        %vm4820 = vcmp.eq.s32.totalorder %v4764, 1
        %vm4821 = vcmp.eq.s32.totalorder %v4765, 1
        %vm4822 = vcmp.eq.s32.totalorder %v4766, 1
        %vm4823 = vcmp.eq.s32.totalorder %v4767, 1
        %vm4824 = vcmp.eq.s32.totalorder %v4768, 1
        %vm4825 = vcmp.eq.s32.totalorder %v4769, 1
        %vm4826 = vcmp.eq.s32.totalorder %v4770, 1
        %vm4827 = vcmp.eq.s32.totalorder %v4771, 1
        %vm4828 = vcmp.eq.s32.totalorder %v4772, 1
        %vm4829 = vcmp.eq.s32.totalorder %v4773, 1
        %vm4830 = vcmp.eq.s32.totalorder %v4774, 1
        %vm4831 = vcmp.eq.s32.totalorder %v4775, 1
        %vm4832 = vcmp.eq.s32.totalorder %v4776, 1
        %vm4833 = vcmp.eq.s32.totalorder %v4777, 1
        %vm4834 = vcmp.eq.s32.totalorder %v4778, 1
        %vm4835 = vcmp.eq.s32.totalorder %v4779, 1
        %vm4836 = vcmp.eq.s32.totalorder %v4780, 1
        %vm4837 = vcmp.eq.s32.totalorder %v4781, 1
        %vm4838 = vcmp.eq.s32.totalorder %v4782, 1
        %vm4839 = vcmp.eq.s32.totalorder %v4783, 1
        %vm4840 = vcmp.eq.s32.totalorder %v4784, 1
        %vm4841 = vcmp.eq.s32.totalorder %v4785, 1
        %vm4842 = vcmp.eq.s32.totalorder %v4786, 1
        %vm4843 = vcmp.eq.s32.totalorder %v4787, 1
        %vm4844 = vcmp.eq.s32.totalorder %v4788, 1
        %vm4845 = vcmp.eq.s32.totalorder %v4789, 1
        %vm4846 = vcmp.eq.s32.totalorder %v4790, 1
        %vm4847 = vcmp.eq.s32.totalorder %v4791, 1
        %vm4848 = vcmp.eq.s32.totalorder %v4792, 1
        %vm4849 = vcmp.eq.s32.totalorder %v4793, 1
        %vm4850 = vcmp.eq.s32.totalorder %v4794, 1
        %vm4851 = vcmp.eq.s32.totalorder %v4795, 1
        %vm4852 = vcmp.eq.s32.totalorder %v4796, 1
        %vm4853 = vcmp.eq.s32.totalorder %v4797, 1
        %vm4854 = vcmp.eq.s32.totalorder %v4798, 1
        %vm4855 = vcmp.eq.s32.totalorder %v4799, 1
        %v4856 = vsel %vm4800, %v3681, 0.0
        %v4857 = vsel %vm4801, %v3686, 0.0
        %v4858 = vsel %vm4802, %v3691, 0.0
        %v4859 = vsel %vm4803, %v3696, 0.0
        %v4860 = vsel %vm4804, %v3701, 0.0
        %v4861 = vsel %vm4805, %v3706, 0.0
        %v4862 = vsel %vm4806, %v3711, 0.0
        %v4863 = vsel %vm4807, %v3716, 0.0
        %v4864 = vsel %vm4808, %v3721, 0.0
        %v4865 = vsel %vm4809, %v3726, 0.0
        %v4866 = vsel %vm4810, %v3731, 0.0
        %v4867 = vsel %vm4811, %v3736, 0.0
        %v4868 = vsel %vm4812, %v3741, 0.0
        %v4869 = vsel %vm4813, %v3746, 0.0
        %v4870 = vsel %vm4814, %v3751, 0.0
        %v4871 = vsel %vm4815, %v3756, 0.0
        %v4872 = vsel %vm4816, %v3761, 0.0
        %v4873 = vsel %vm4817, %v3766, 0.0
        %v4874 = vsel %vm4818, %v3771, 0.0
        %v4875 = vsel %vm4819, %v3776, 0.0
        %v4876 = vsel %vm4820, %v3781, 0.0
        %v4877 = vsel %vm4821, %v3786, 0.0
        %v4878 = vsel %vm4822, %v3791, 0.0
        %v4879 = vsel %vm4823, %v3796, 0.0
        %v4880 = vsel %vm4824, %v3801, 0.0
        %v4881 = vsel %vm4825, %v3806, 0.0
        %v4882 = vsel %vm4826, %v3811, 0.0
        %v4883 = vsel %vm4827, %v3816, 0.0
        %v4884 = vsel %vm4828, %v3821, 0.0
        %v4885 = vsel %vm4829, %v3826, 0.0
        %v4886 = vsel %vm4830, %v3831, 0.0
        %v4887 = vsel %vm4831, %v3836, 0.0
        %v4888 = vsel %vm4832, %v3841, 0.0
        %v4889 = vsel %vm4833, %v3846, 0.0
        %v4890 = vsel %vm4834, %v3851, 0.0
        %v4891 = vsel %vm4835, %v3856, 0.0
        %v4892 = vsel %vm4836, %v3861, 0.0
        %v4893 = vsel %vm4837, %v3866, 0.0
        %v4894 = vsel %vm4838, %v3871, 0.0
        %v4895 = vsel %vm4839, %v3876, 0.0
        %v4896 = vsel %vm4840, %v3881, 0.0
        %v4897 = vsel %vm4841, %v3886, 0.0
        %v4898 = vsel %vm4842, %v3891, 0.0
        %v4899 = vsel %vm4843, %v3896, 0.0
        %v4900 = vsel %vm4844, %v3901, 0.0
        %v4901 = vsel %vm4845, %v3906, 0.0
        %v4902 = vsel %vm4846, %v3911, 0.0
        %v4903 = vsel %vm4847, %v3916, 0.0
        %v4904 = vsel %vm4848, %v3921, 0.0
        %v4905 = vsel %vm4849, %v3926, 0.0
        %v4906 = vsel %vm4850, %v3931, 0.0
        %v4907 = vsel %vm4851, %v3936, 0.0
        %v4908 = vsel %vm4852, %v3941, 0.0
        %v4909 = vsel %vm4853, %v3946, 0.0
        %v4910 = vsel %vm4854, %v3951, 0.0
        %v4911 = vsel %vm4855, %v3956, 0.0
        %v4912 = vadd.f32 %v4856, %v4857
        %v4913 = vadd.f32 %v4912, %v4858
        %v4914 = vadd.f32 %v4913, %v4859
        %v4915 = vadd.f32 %v4914, %v4860
        %v4916 = vadd.f32 %v4915, %v4861
        %v4917 = vadd.f32 %v4916, %v4862
        %v4918 = vadd.f32 %v4917, %v4863
        %v4919 = vadd.f32 %v4918, %v4864
        %v4920 = vadd.f32 %v4919, %v4865
        %v4921 = vadd.f32 %v4920, %v4866
        %v4922 = vadd.f32 %v4921, %v4867
        %v4923 = vadd.f32 %v4922, %v4868
        %v4924 = vadd.f32 %v4923, %v4869
        %v4925 = vadd.f32 %v4924, %v4870
        %v4926 = vadd.f32 %v4925, %v4871
        %v4927 = vadd.f32 %v4926, %v4872
        %v4928 = vadd.f32 %v4927, %v4873
        %v4929 = vadd.f32 %v4928, %v4874
        %v4930 = vadd.f32 %v4929, %v4875
        %v4931 = vadd.f32 %v4930, %v4876
        %v4932 = vadd.f32 %v4931, %v4877
        %v4933 = vadd.f32 %v4932, %v4878
        %v4934 = vadd.f32 %v4933, %v4879
        %v4935 = vadd.f32 %v4934, %v4880
        %v4936 = vadd.f32 %v4935, %v4881
        %v4937 = vadd.f32 %v4936, %v4882
        %v4938 = vadd.f32 %v4937, %v4883
        %v4939 = vadd.f32 %v4938, %v4884
        %v4940 = vadd.f32 %v4939, %v4885
        %v4941 = vadd.f32 %v4940, %v4886
        %v4942 = vadd.f32 %v4941, %v4887
        %v4943 = vadd.f32 %v4942, %v4888
        %v4944 = vadd.f32 %v4943, %v4889
        %v4945 = vadd.f32 %v4944, %v4890
        %v4946 = vadd.f32 %v4945, %v4891
        %v4947 = vadd.f32 %v4946, %v4892
        %v4948 = vadd.f32 %v4947, %v4893
        %v4949 = vadd.f32 %v4948, %v4894
        %v4950 = vadd.f32 %v4949, %v4895
        %v4951 = vadd.f32 %v4950, %v4896
        %v4952 = vadd.f32 %v4951, %v4897
        %v4953 = vadd.f32 %v4952, %v4898
        %v4954 = vadd.f32 %v4953, %v4899
        %v4955 = vadd.f32 %v4954, %v4900
        %v4956 = vadd.f32 %v4955, %v4901
        %v4957 = vadd.f32 %v4956, %v4902
        %v4958 = vadd.f32 %v4957, %v4903
        %v4959 = vadd.f32 %v4958, %v4904
        %v4960 = vadd.f32 %v4959, %v4905
        %v4961 = vadd.f32 %v4960, %v4906
        %v4962 = vadd.f32 %v4961, %v4907
        %v4963 = vadd.f32 %v4962, %v4908
        %v4964 = vadd.f32 %v4963, %v4909
        %v4965 = vadd.f32 %v4964, %v4910
        %v4966 = vsel %vm1142, %v4911, 0.0
        %v4967 = vadd.f32 %v4965, %v4966
        %v4968 = vrot.slane %v4967, 4
        %v4969 = vadd.f32 %v4967, %v4968
        %v4970 = vrot.slane %v4969, 2
        %v4971 = vadd.f32 %v4969, %v4970
        %v4972 = vrot.slane %v4971, 1
        %v4973 = vadd.f32 %v4971, %v4972
        %v4974 = vrcp.pop 392.0
        %v4975 = vmul.f32 %v4973, %v4974
        %v4976 = vsub.f32 %v3681, %v4975
        %v4977 = vsub.f32 %v3686, %v4975
        %v4978 = vsub.f32 %v3691, %v4975
        %v4979 = vsub.f32 %v3696, %v4975
        %v4980 = vsub.f32 %v3701, %v4975
        %v4981 = vsub.f32 %v3706, %v4975
        %v4982 = vsub.f32 %v3711, %v4975
        %v4983 = vsub.f32 %v3716, %v4975
        %v4984 = vsub.f32 %v3721, %v4975
        %v4985 = vsub.f32 %v3726, %v4975
        %v4986 = vsub.f32 %v3731, %v4975
        %v4987 = vsub.f32 %v3736, %v4975
        %v4988 = vsub.f32 %v3741, %v4975
        %v4989 = vsub.f32 %v3746, %v4975
        %v4990 = vsub.f32 %v3751, %v4975
        %v4991 = vsub.f32 %v3756, %v4975
        %v4992 = vsub.f32 %v3761, %v4975
        %v4993 = vsub.f32 %v3766, %v4975
        %v4994 = vsub.f32 %v3771, %v4975
        %v4995 = vsub.f32 %v3776, %v4975
        %v4996 = vsub.f32 %v3781, %v4975
        %v4997 = vsub.f32 %v3786, %v4975
        %v4998 = vsub.f32 %v3791, %v4975
        %v4999 = vsub.f32 %v3796, %v4975
        %v5000 = vsub.f32 %v3801, %v4975
        %v5001 = vsub.f32 %v3806, %v4975
        %v5002 = vsub.f32 %v3811, %v4975
        %v5003 = vsub.f32 %v3816, %v4975
        %v5004 = vsub.f32 %v3821, %v4975
        %v5005 = vsub.f32 %v3826, %v4975
        %v5006 = vsub.f32 %v3831, %v4975
        %v5007 = vsub.f32 %v3836, %v4975
        %v5008 = vsub.f32 %v3841, %v4975
        %v5009 = vsub.f32 %v3846, %v4975
        %v5010 = vsub.f32 %v3851, %v4975
        %v5011 = vsub.f32 %v3856, %v4975
        %v5012 = vsub.f32 %v3861, %v4975
        %v5013 = vsub.f32 %v3866, %v4975
        %v5014 = vsub.f32 %v3871, %v4975
        %v5015 = vsub.f32 %v3876, %v4975
        %v5016 = vsub.f32 %v3881, %v4975
        %v5017 = vsub.f32 %v3886, %v4975
        %v5018 = vsub.f32 %v3891, %v4975
        %v5019 = vsub.f32 %v3896, %v4975
        %v5020 = vsub.f32 %v3901, %v4975
        %v5021 = vsub.f32 %v3906, %v4975
        %v5022 = vsub.f32 %v3911, %v4975
        %v5023 = vsub.f32 %v3916, %v4975
        %v5024 = vsub.f32 %v3921, %v4975
        %v5025 = vsub.f32 %v3926, %v4975
        %v5026 = vsub.f32 %v3931, %v4975
        %v5027 = vsub.f32 %v3936, %v4975
        %v5028 = vsub.f32 %v3941, %v4975
        %v5029 = vsub.f32 %v3946, %v4975
        %v5030 = vsub.f32 %v3951, %v4975
        %v5031 = vsub.f32 %v3956, %v4975
        %v5032 = vmul.f32 %v4976, %v4976
        %v5033 = vmul.f32 %v4977, %v4977
        %v5034 = vmul.f32 %v4978, %v4978
        %v5035 = vmul.f32 %v4979, %v4979
        %v5036 = vmul.f32 %v4980, %v4980
        %v5037 = vmul.f32 %v4981, %v4981
        %v5038 = vmul.f32 %v4982, %v4982
        %v5039 = vmul.f32 %v4983, %v4983
        %v5040 = vmul.f32 %v4984, %v4984
        %v5041 = vmul.f32 %v4985, %v4985
        %v5042 = vmul.f32 %v4986, %v4986
        %v5043 = vmul.f32 %v4987, %v4987
        %v5044 = vmul.f32 %v4988, %v4988
        %v5045 = vmul.f32 %v4989, %v4989
        %v5046 = vmul.f32 %v4990, %v4990
        %v5047 = vmul.f32 %v4991, %v4991
        %v5048 = vmul.f32 %v4992, %v4992
        %v5049 = vmul.f32 %v4993, %v4993
        %v5050 = vmul.f32 %v4994, %v4994
        %v5051 = vmul.f32 %v4995, %v4995
        %v5052 = vmul.f32 %v4996, %v4996
        %v5053 = vmul.f32 %v4997, %v4997
        %v5054 = vmul.f32 %v4998, %v4998
        %v5055 = vmul.f32 %v4999, %v4999
        %v5056 = vmul.f32 %v5000, %v5000
        %v5057 = vmul.f32 %v5001, %v5001
        %v5058 = vmul.f32 %v5002, %v5002
        %v5059 = vmul.f32 %v5003, %v5003
        %v5060 = vmul.f32 %v5004, %v5004
        %v5061 = vmul.f32 %v5005, %v5005
        %v5062 = vmul.f32 %v5006, %v5006
        %v5063 = vmul.f32 %v5007, %v5007
        %v5064 = vmul.f32 %v5008, %v5008
        %v5065 = vmul.f32 %v5009, %v5009
        %v5066 = vmul.f32 %v5010, %v5010
        %v5067 = vmul.f32 %v5011, %v5011
        %v5068 = vmul.f32 %v5012, %v5012
        %v5069 = vmul.f32 %v5013, %v5013
        %v5070 = vmul.f32 %v5014, %v5014
        %v5071 = vmul.f32 %v5015, %v5015
        %v5072 = vmul.f32 %v5016, %v5016
        %v5073 = vmul.f32 %v5017, %v5017
        %v5074 = vmul.f32 %v5018, %v5018
        %v5075 = vmul.f32 %v5019, %v5019
        %v5076 = vmul.f32 %v5020, %v5020
        %v5077 = vmul.f32 %v5021, %v5021
        %v5078 = vmul.f32 %v5022, %v5022
        %v5079 = vmul.f32 %v5023, %v5023
        %v5080 = vmul.f32 %v5024, %v5024
        %v5081 = vmul.f32 %v5025, %v5025
        %v5082 = vmul.f32 %v5026, %v5026
        %v5083 = vmul.f32 %v5027, %v5027
        %v5084 = vmul.f32 %v5028, %v5028
        %v5085 = vmul.f32 %v5029, %v5029
        %v5086 = vmul.f32 %v5030, %v5030
        %v5087 = vmul.f32 %v5031, %v5031
        %v5088 = vsel %vm4800, %v5032, 0.0
        %v5089 = vsel %vm4801, %v5033, 0.0
        %v5090 = vsel %vm4802, %v5034, 0.0
        %v5091 = vsel %vm4803, %v5035, 0.0
        %v5092 = vsel %vm4804, %v5036, 0.0
        %v5093 = vsel %vm4805, %v5037, 0.0
        %v5094 = vsel %vm4806, %v5038, 0.0
        %v5095 = vsel %vm4807, %v5039, 0.0
        %v5096 = vsel %vm4808, %v5040, 0.0
        %v5097 = vsel %vm4809, %v5041, 0.0
        %v5098 = vsel %vm4810, %v5042, 0.0
        %v5099 = vsel %vm4811, %v5043, 0.0
        %v5100 = vsel %vm4812, %v5044, 0.0
        %v5101 = vsel %vm4813, %v5045, 0.0
        %v5102 = vsel %vm4814, %v5046, 0.0
        %v5103 = vsel %vm4815, %v5047, 0.0
        %v5104 = vsel %vm4816, %v5048, 0.0
        %v5105 = vsel %vm4817, %v5049, 0.0
        %v5106 = vsel %vm4818, %v5050, 0.0
        %v5107 = vsel %vm4819, %v5051, 0.0
        %v5108 = vsel %vm4820, %v5052, 0.0
        %v5109 = vsel %vm4821, %v5053, 0.0
        %v5110 = vsel %vm4822, %v5054, 0.0
        %v5111 = vsel %vm4823, %v5055, 0.0
        %v5112 = vsel %vm4824, %v5056, 0.0
        %v5113 = vsel %vm4825, %v5057, 0.0
        %v5114 = vsel %vm4826, %v5058, 0.0
        %v5115 = vsel %vm4827, %v5059, 0.0
        %v5116 = vsel %vm4828, %v5060, 0.0
        %v5117 = vsel %vm4829, %v5061, 0.0
        %v5118 = vsel %vm4830, %v5062, 0.0
        %v5119 = vsel %vm4831, %v5063, 0.0
        %v5120 = vsel %vm4832, %v5064, 0.0
        %v5121 = vsel %vm4833, %v5065, 0.0
        %v5122 = vsel %vm4834, %v5066, 0.0
        %v5123 = vsel %vm4835, %v5067, 0.0
        %v5124 = vsel %vm4836, %v5068, 0.0
        %v5125 = vsel %vm4837, %v5069, 0.0
        %v5126 = vsel %vm4838, %v5070, 0.0
        %v5127 = vsel %vm4839, %v5071, 0.0
        %v5128 = vsel %vm4840, %v5072, 0.0
        %v5129 = vsel %vm4841, %v5073, 0.0
        %v5130 = vsel %vm4842, %v5074, 0.0
        %v5131 = vsel %vm4843, %v5075, 0.0
        %v5132 = vsel %vm4844, %v5076, 0.0
        %v5133 = vsel %vm4845, %v5077, 0.0
        %v5134 = vsel %vm4846, %v5078, 0.0
        %v5135 = vsel %vm4847, %v5079, 0.0
        %v5136 = vsel %vm4848, %v5080, 0.0
        %v5137 = vsel %vm4849, %v5081, 0.0
        %v5138 = vsel %vm4850, %v5082, 0.0
        %v5139 = vsel %vm4851, %v5083, 0.0
        %v5140 = vsel %vm4852, %v5084, 0.0
        %v5141 = vsel %vm4853, %v5085, 0.0
        %v5142 = vsel %vm4854, %v5086, 0.0
        %v5143 = vsel %vm4855, %v5087, 0.0
        %v5144 = vadd.f32 %v5088, %v5089
        %v5145 = vadd.f32 %v5144, %v5090
        %v5146 = vadd.f32 %v5145, %v5091
        %v5147 = vadd.f32 %v5146, %v5092
        %v5148 = vadd.f32 %v5147, %v5093
        %v5149 = vadd.f32 %v5148, %v5094
        %v5150 = vadd.f32 %v5149, %v5095
        %v5151 = vadd.f32 %v5150, %v5096
        %v5152 = vadd.f32 %v5151, %v5097
        %v5153 = vadd.f32 %v5152, %v5098
        %v5154 = vadd.f32 %v5153, %v5099
        %v5155 = vadd.f32 %v5154, %v5100
        %v5156 = vadd.f32 %v5155, %v5101
        %v5157 = vadd.f32 %v5156, %v5102
        %v5158 = vadd.f32 %v5157, %v5103
        %v5159 = vadd.f32 %v5158, %v5104
        %v5160 = vadd.f32 %v5159, %v5105
        %v5161 = vadd.f32 %v5160, %v5106
        %v5162 = vadd.f32 %v5161, %v5107
        %v5163 = vadd.f32 %v5162, %v5108
        %v5164 = vadd.f32 %v5163, %v5109
        %v5165 = vadd.f32 %v5164, %v5110
        %v5166 = vadd.f32 %v5165, %v5111
        %v5167 = vadd.f32 %v5166, %v5112
        %v5168 = vadd.f32 %v5167, %v5113
        %v5169 = vadd.f32 %v5168, %v5114
        %v5170 = vadd.f32 %v5169, %v5115
        %v5171 = vadd.f32 %v5170, %v5116
        %v5172 = vadd.f32 %v5171, %v5117
        %v5173 = vadd.f32 %v5172, %v5118
        %v5174 = vadd.f32 %v5173, %v5119
        %v5175 = vadd.f32 %v5174, %v5120
        %v5176 = vadd.f32 %v5175, %v5121
        %v5177 = vadd.f32 %v5176, %v5122
        %v5178 = vadd.f32 %v5177, %v5123
        %v5179 = vadd.f32 %v5178, %v5124
        %v5180 = vadd.f32 %v5179, %v5125
        %v5181 = vadd.f32 %v5180, %v5126
        %v5182 = vadd.f32 %v5181, %v5127
        %v5183 = vadd.f32 %v5182, %v5128
        %v5184 = vadd.f32 %v5183, %v5129
        %v5185 = vadd.f32 %v5184, %v5130
        %v5186 = vadd.f32 %v5185, %v5131
        %v5187 = vadd.f32 %v5186, %v5132
        %v5188 = vadd.f32 %v5187, %v5133
        %v5189 = vadd.f32 %v5188, %v5134
        %v5190 = vadd.f32 %v5189, %v5135
        %v5191 = vadd.f32 %v5190, %v5136
        %v5192 = vadd.f32 %v5191, %v5137
        %v5193 = vadd.f32 %v5192, %v5138
        %v5194 = vadd.f32 %v5193, %v5139
        %v5195 = vadd.f32 %v5194, %v5140
        %v5196 = vadd.f32 %v5195, %v5141
        %v5197 = vadd.f32 %v5196, %v5142
        %v5198 = vsel %vm1142, %v5143, 0.0
        %v5199 = vadd.f32 %v5197, %v5198
        %v5200 = vrot.slane %v5199, 4
        %v5201 = vadd.f32 %v5199, %v5200
        %v5202 = vrot.slane %v5201, 2
        %v5203 = vadd.f32 %v5201, %v5202
        %v5204 = vrot.slane %v5203, 1
        %v5205 = vadd.f32 %v5203, %v5204
        %v5206 = vmul.f32 %v5205, %v4974
        %v5207 = vadd.f32 %v5206, 1e-05
        %v5208 = vrsqrt.pop %v5207
        %s5209 = scalar_lea.vmem [#allocation7], %s22
        %v5210 = vld [vmem:[%s5209] sm:$0x1]
        %v5211 = vmul.f32 %v5208, %v5210
        %s5212 = scalar_lea.vmem [#allocation9], %s22
        %v5213 = vld [vmem:[%s5212] sm:$0x1]
        %v5214 = vmul.f32 %v4975, %v5211
        %v5215 = vsub.f32 %v5213, %v5214
        %v5216 = vlaneseq
        %v5217 = vshrl.u32 %v5216, 7
        %v5218 = vsub.s32 0, %v5217
        %v5219 = vrot.slane %v5211, %v5218
        %v5220 = vmul.f32 %v3681, %v5219
        %v5221 = vmul.f32 %v3686, %v5219
        %v5222 = vmul.f32 %v3691, %v5219
        %v5223 = vmul.f32 %v3696, %v5219
        %v5224 = vmul.f32 %v3701, %v5219
        %v5225 = vmul.f32 %v3706, %v5219
        %v5226 = vmul.f32 %v3711, %v5219
        %v5227 = vmul.f32 %v3716, %v5219
        %v5228 = vmul.f32 %v3721, %v5219
        %v5229 = vmul.f32 %v3726, %v5219
        %v5230 = vmul.f32 %v3731, %v5219
        %v5231 = vmul.f32 %v3736, %v5219
        %v5232 = vmul.f32 %v3741, %v5219
        %v5233 = vmul.f32 %v3746, %v5219
        %v5234 = vmul.f32 %v3751, %v5219
        %v5235 = vmul.f32 %v3756, %v5219
        %v5236 = vmul.f32 %v3761, %v5219
        %v5237 = vmul.f32 %v3766, %v5219
        %v5238 = vmul.f32 %v3771, %v5219
        %v5239 = vmul.f32 %v3776, %v5219
        %v5240 = vmul.f32 %v3781, %v5219
        %v5241 = vmul.f32 %v3786, %v5219
        %v5242 = vmul.f32 %v3791, %v5219
        %v5243 = vmul.f32 %v3796, %v5219
        %v5244 = vmul.f32 %v3801, %v5219
        %v5245 = vmul.f32 %v3806, %v5219
        %v5246 = vmul.f32 %v3811, %v5219
        %v5247 = vmul.f32 %v3816, %v5219
        %v5248 = vmul.f32 %v3821, %v5219
        %v5249 = vmul.f32 %v3826, %v5219
        %v5250 = vmul.f32 %v3831, %v5219
        %v5251 = vmul.f32 %v3836, %v5219
        %v5252 = vmul.f32 %v3841, %v5219
        %v5253 = vmul.f32 %v3846, %v5219
        %v5254 = vmul.f32 %v3851, %v5219
        %v5255 = vmul.f32 %v3856, %v5219
        %v5256 = vmul.f32 %v3861, %v5219
        %v5257 = vmul.f32 %v3866, %v5219
        %v5258 = vmul.f32 %v3871, %v5219
        %v5259 = vmul.f32 %v3876, %v5219
        %v5260 = vmul.f32 %v3881, %v5219
        %v5261 = vmul.f32 %v3886, %v5219
        %v5262 = vmul.f32 %v3891, %v5219
        %v5263 = vmul.f32 %v3896, %v5219
        %v5264 = vmul.f32 %v3901, %v5219
        %v5265 = vmul.f32 %v3906, %v5219
        %v5266 = vmul.f32 %v3911, %v5219
        %v5267 = vmul.f32 %v3916, %v5219
        %v5268 = vmul.f32 %v3921, %v5219
        %v5269 = vmul.f32 %v3926, %v5219
        %v5270 = vmul.f32 %v3931, %v5219
        %v5271 = vmul.f32 %v3936, %v5219
        %v5272 = vmul.f32 %v3941, %v5219
        %v5273 = vmul.f32 %v3946, %v5219
        %v5274 = vmul.f32 %v3951, %v5219
        %v5275 = vmul.f32 %v3956, %v5219
        %v5276 = vlaneseq
        %v5277 = vshrl.u32 %v5276, 7
        %v5278 = vsub.s32 0, %v5277
        %v5279 = vrot.slane %v5215, %v5278
        %v5280 = vadd.f32 %v5220, %v5279
        %v5281 = vadd.f32 %v5221, %v5279
        %v5282 = vadd.f32 %v5222, %v5279
        %v5283 = vadd.f32 %v5223, %v5279
        %v5284 = vadd.f32 %v5224, %v5279
        %v5285 = vadd.f32 %v5225, %v5279
        %v5286 = vadd.f32 %v5226, %v5279
        %v5287 = vadd.f32 %v5227, %v5279
        %v5288 = vadd.f32 %v5228, %v5279
        %v5289 = vadd.f32 %v5229, %v5279
        %v5290 = vadd.f32 %v5230, %v5279
        %v5291 = vadd.f32 %v5231, %v5279
        %v5292 = vadd.f32 %v5232, %v5279
        %v5293 = vadd.f32 %v5233, %v5279
        %v5294 = vadd.f32 %v5234, %v5279
        %v5295 = vadd.f32 %v5235, %v5279
        %v5296 = vadd.f32 %v5236, %v5279
        %v5297 = vadd.f32 %v5237, %v5279
        %v5298 = vadd.f32 %v5238, %v5279
        %v5299 = vadd.f32 %v5239, %v5279
        %v5300 = vadd.f32 %v5240, %v5279
        %v5301 = vadd.f32 %v5241, %v5279
        %v5302 = vadd.f32 %v5242, %v5279
        %v5303 = vadd.f32 %v5243, %v5279
        %v5304 = vadd.f32 %v5244, %v5279
        %v5305 = vadd.f32 %v5245, %v5279
        %v5306 = vadd.f32 %v5246, %v5279
        %v5307 = vadd.f32 %v5247, %v5279
        %v5308 = vadd.f32 %v5248, %v5279
        %v5309 = vadd.f32 %v5249, %v5279
        %v5310 = vadd.f32 %v5250, %v5279
        %v5311 = vadd.f32 %v5251, %v5279
        %v5312 = vadd.f32 %v5252, %v5279
        %v5313 = vadd.f32 %v5253, %v5279
        %v5314 = vadd.f32 %v5254, %v5279
        %v5315 = vadd.f32 %v5255, %v5279
        %v5316 = vadd.f32 %v5256, %v5279
        %v5317 = vadd.f32 %v5257, %v5279
        %v5318 = vadd.f32 %v5258, %v5279
        %v5319 = vadd.f32 %v5259, %v5279
        %v5320 = vadd.f32 %v5260, %v5279
        %v5321 = vadd.f32 %v5261, %v5279
        %v5322 = vadd.f32 %v5262, %v5279
        %v5323 = vadd.f32 %v5263, %v5279
        %v5324 = vadd.f32 %v5264, %v5279
        %v5325 = vadd.f32 %v5265, %v5279
        %v5326 = vadd.f32 %v5266, %v5279
        %v5327 = vadd.f32 %v5267, %v5279
        %v5328 = vadd.f32 %v5268, %v5279
        %v5329 = vadd.f32 %v5269, %v5279
        %v5330 = vadd.f32 %v5270, %v5279
        %v5331 = vadd.f32 %v5271, %v5279
        %v5332 = vadd.f32 %v5272, %v5279
        %v5333 = vadd.f32 %v5273, %v5279
        %v5334 = vadd.f32 %v5274, %v5279
        %v5335 = vadd.f32 %v5275, %v5279
        %v5336 = vsel %vm1142, %v5335, 0.0
        %5337 = vst [vmem:[%s515] sm:$0xff] %v5280
        %5338 = vst [vmem:[%s515 + $0x8] sm:$0xff] %v5281
        %5339 = vst [vmem:[%s515 + $0x10] sm:$0xff] %v5282
        %5340 = vst [vmem:[%s515 + $0x18] sm:$0xff] %v5283
        %5341 = vst [vmem:[%s515 + $0x20] sm:$0xff] %v5284
        %5342 = vst [vmem:[%s515 + $0x28] sm:$0xff] %v5285
        %5343 = vst [vmem:[%s515 + $0x30] sm:$0xff] %v5286
        %5344 = vst [vmem:[%s515 + $0x38] sm:$0xff] %v5287
        %5345 = vst [vmem:[%s515 + $0x40] sm:$0xff] %v5288
        %5346 = vst [vmem:[%s515 + $0x48] sm:$0xff] %v5289
        %5347 = vst [vmem:[%s515 + $0x50] sm:$0xff] %v5290
        %5348 = vst [vmem:[%s515 + $0x58] sm:$0xff] %v5291
        %5349 = vst [vmem:[%s515 + $0x60] sm:$0xff] %v5292
        %5350 = vst [vmem:[%s515 + $0x68] sm:$0xff] %v5293
        %5351 = vst [vmem:[%s515 + $0x70] sm:$0xff] %v5294
        %5352 = vst [vmem:[%s515 + $0x78] sm:$0xff] %v5295
        %5353 = vst [vmem:[%s515 + $0x80] sm:$0xff] %v5296
        %5354 = vst [vmem:[%s515 + $0x88] sm:$0xff] %v5297
        %5355 = vst [vmem:[%s515 + $0x90] sm:$0xff] %v5298
        %5356 = vst [vmem:[%s515 + $0x98] sm:$0xff] %v5299
        %5357 = vst [vmem:[%s515 + $0xa0] sm:$0xff] %v5300
        %5358 = vst [vmem:[%s515 + $0xa8] sm:$0xff] %v5301
        %5359 = vst [vmem:[%s515 + $0xb0] sm:$0xff] %v5302
        %5360 = vst [vmem:[%s515 + $0xb8] sm:$0xff] %v5303
        %5361 = vst [vmem:[%s515 + $0xc0] sm:$0xff] %v5304
        %5362 = vst [vmem:[%s515 + $0xc8] sm:$0xff] %v5305
        %5363 = vst [vmem:[%s515 + $0xd0] sm:$0xff] %v5306
        %5364 = vst [vmem:[%s515 + $0xd8] sm:$0xff] %v5307
        %5365 = vst [vmem:[%s515 + $0xe0] sm:$0xff] %v5308
        %5366 = vst [vmem:[%s515 + $0xe8] sm:$0xff] %v5309
        %5367 = vst [vmem:[%s515 + $0xf0] sm:$0xff] %v5310
        %5368 = vst [vmem:[%s515 + $0xf8] sm:$0xff] %v5311
        %5369 = vst [vmem:[%s515 + $0x100] sm:$0xff] %v5312
        %5370 = vst [vmem:[%s515 + $0x108] sm:$0xff] %v5313
        %5371 = vst [vmem:[%s515 + $0x110] sm:$0xff] %v5314
        %5372 = vst [vmem:[%s515 + $0x118] sm:$0xff] %v5315
        %5373 = vst [vmem:[%s515 + $0x120] sm:$0xff] %v5316
        %5374 = vst [vmem:[%s515 + $0x128] sm:$0xff] %v5317
        %5375 = vst [vmem:[%s515 + $0x130] sm:$0xff] %v5318
        %5376 = vst [vmem:[%s515 + $0x138] sm:$0xff] %v5319
        %5377 = vst [vmem:[%s515 + $0x140] sm:$0xff] %v5320
        %5378 = vst [vmem:[%s515 + $0x148] sm:$0xff] %v5321
        %5379 = vst [vmem:[%s515 + $0x150] sm:$0xff] %v5322
        %5380 = vst [vmem:[%s515 + $0x158] sm:$0xff] %v5323
        %5381 = vst [vmem:[%s515 + $0x160] sm:$0xff] %v5324
        %5382 = vst [vmem:[%s515 + $0x168] sm:$0xff] %v5325
        %5383 = vst [vmem:[%s515 + $0x170] sm:$0xff] %v5326
        %5384 = vst [vmem:[%s515 + $0x178] sm:$0xff] %v5327
        %5385 = vst [vmem:[%s515 + $0x180] sm:$0xff] %v5328
        %5386 = vst [vmem:[%s515 + $0x188] sm:$0xff] %v5329
        %5387 = vst [vmem:[%s515 + $0x190] sm:$0xff] %v5330
        %5388 = vst [vmem:[%s515 + $0x198] sm:$0xff] %v5331
        %5389 = vst [vmem:[%s515 + $0x1a0] sm:$0xff] %v5332
        %5390 = vst [vmem:[%s515 + $0x1a8] sm:$0xff] %v5333
        %5391 = vst [vmem:[%s515 + $0x1b0] sm:$0xff] %v5334
        %5392 = vst [vmem:[%s515 + $0x1b8] sm:$0xff] %v5336
        %s5393 = sand.u32 %s124, 1
        %s5394 = scalar_lea.sflag [#allocation6], %s5393
        %s5395 = sand.u32 %s124, 1
        %s5396 = smul.addr %s5395, 448
        %s5397 = scalar_lea.vmem [#allocation10], %s5396
        // Predicated region
        $region87: #{tpu_custom_call.1} parent=69 // pred_check
          %p5398 = pneg %p134
        $region88: #{tpu_custom_call.1} parent=69 // pred_check_branch
          %5400 = sbr.rel (%p5398) target = $region90
        $region89: #{tpu_custom_call.1} parent=69 // pred_region
          %s5402 = ssub.s32 7168, 7168
          %5403 = vsyncadd %s5394, %s5402
          %s5404 = smul.addr %s22, 128
          %s5405 = scalar_lea.hbm %s4, %s5404
          %s5406 = sshll.u32 %s5397, 4
          %s5407 = int_to_ptr.vmem [resolvable:$true] %s5406
          %5412 = dma.vmem_to_hbm [thread:$0]  %s5407, 7168, %s5405, %s5394, 128, 256, 8
        $region90: #{tpu_custom_call.1} parent=69 // pred_fallthru
          _
      $region70: #{tpu_custom_call.1} parent=5 // pred_fallthru
        _
      %p5413 = scmp.le.s32.totalorder 2, %s17
      // Predicated region
      $region91: #{tpu_custom_call.1} parent=5 // pred_check
        %p5414 = pneg %p5413
      $region92: #{tpu_custom_call.1} parent=5 // pred_check_branch
        %5416 = sbr.rel (%p5414) target = $region94
      $region93: #{tpu_custom_call.1} parent=5 // pred_region
        %s5417 = ssub.s32 %s17, 2
        // Predicated region
        $region95: #{tpu_custom_call.1} parent=93 // pred_check
          %p5418 = pneg %p140
        $region96: #{tpu_custom_call.1} parent=93 // pred_check_branch
          %5420 = sbr.rel (%p5418) target = $region98
        $region97: #{tpu_custom_call.1} parent=93 // pred_region
          %s5421 = sand.u32 %s125, 1
          %s5422 = scalar_lea.sflag [#allocation6], %s5421
          %s5423 = sand.u32 %s125, 1
          %s5424 = smul.addr %s5423, 448
          %s5425 = scalar_lea.vmem [#allocation10], %s5424
          %5426 = dma.done %s5422, 7168
        $region98: #{tpu_custom_call.1} parent=93 // pred_fallthru
          _
      $region94: #{tpu_custom_call.1} parent=5 // pred_fallthru
        _
    $region6: #{tpu_custom_call.1} parent=1 // loop_footer
      %s21 = sadd.s32 1, %s17
    $region7: #{tpu_custom_call.1} parent=1 // loop_footer_branch
      %16 = sbr.rel target = $region3
    $region8: #{tpu_custom_call.1} parent=1 // loop_exit
      _
    %5427 = vsyncpa [#allocation5], 1
    %s5428 = scalar_lea.sflag [#allocation5], 1
    %5429 = vsyncpa %s5428, 1
    %5430 = vsyncpa [#allocation8], 1
    %5431 = vsyncpa [#allocation6], 1
    %s5432 = scalar_lea.sflag [#allocation6], 1
    %5433 = vsyncpa %s5432, 1

</llo_original>
